<compile_context>
chip_gen: v7x
topology: tpu7x:2x2x1
jax: 0.10.0
libtpu: 0.0.40
codegen_flags: <defaults>
</compile_context>

<pallas_src>
import jax
import jax.numpy as jnp
from jax import lax
from jax.experimental import pallas as pl
from jax.experimental.pallas import tpu as pltpu
import numpy as np


def _round_up(v, m):
    return (v + m - 1) // m * m


def _pick_row_tile(H, max_tile=32):
    """Largest even row tile <= max_tile; pads H when no even divisor exists."""
    max_tile = max(2, max_tile - (max_tile % 2))
    best = 0
    for t in range(2, min(H, max_tile) + 1, 2):
        if H % t == 0:
            best = t
    if best:
        return best, H
    th = min(max_tile, _round_up(H, 2))
    return th, _round_up(H, th)


def _make_kernel(TH, Wp, Cp, H_true, W_true):
    """Kernel for one (batch, row-tile) grid step; static shape params closed over."""
    M1 = (TH + 2) * Wp          # conv1 output rows (1-row halo each side for conv2)
    M2 = TH * Wp                # conv2 / block output rows
    need_col_mask = (W_true != Wp)

    def kernel(xt_ref, xm_ref, xb_ref, w1_ref, w2_ref,
               s1_ref, b1_ref, s2_ref, b2_ref, o_ref):
        # xt_ref : (1, 2,  Wp, Cp) top 2-row halo (clamped; zeroed when r == 0)
        # xm_ref : (1, TH, Wp, Cp) main rows (also the residual, re-read in f32)
        # xb_ref : (1, 2,  Wp, Cp) bottom 2-row halo (clamped; zeroed when last)
        # w*_ref : (3, 3*Cp, Cp)   per-ky kx-folded 3x3 taps, bf16
        # s*/b*  : (1, Cp)         folded BN scale / bias, f32
        # o_ref  : (1, TH, Wp, Cp)
        r = pl.program_id(1)
        NR = pl.num_programs(1)
        cdt = w1_ref.dtype                              # MXU compute dtype (bf16)

        # ---- haloed input tile; only the tiny halo slabs need boundary masking
        top = jnp.where(r > 0, xt_ref[0].astype(cdt), jnp.zeros((), cdt))
        bot = jnp.where(r < NR - 1, xb_ref[0].astype(cdt), jnp.zeros((), cdt))
        xin = jnp.concatenate([top, xm_ref[0].astype(cdt), bot], axis=0)  # (TH+4,Wp,Cp)

        # kx-folded LHS slab: channels are [col x-1 | col x | col x+1]
        zc = jnp.zeros((TH + 4, 1, Cp), cdt)
        x3 = jnp.concatenate(
            [jnp.concatenate([zc, xin[:, :Wp - 1, :]], axis=1),   # kx = 0
             xin,                                                 # kx = 1
             jnp.concatenate([xin[:, 1:, :], zc], axis=1)],       # kx = 2
            axis=-1).reshape((TH + 4) * Wp, 3 * Cp)

        # ---- conv1: 3 matmuls with K = 3*Cp -------------------------------
        acc1 = jnp.zeros((M1, Cp), jnp.float32)
        for ky in range(3):
            acc1 = acc1 + jnp.dot(x3[ky * Wp: ky * Wp + M1], w1_ref[ky],
                                  preferred_element_type=jnp.float32)

        # ---- bn1 (folded) + relu, then zero rows/cols outside the true image
        # (conv2's SAME padding; also kills wrapper H/W padding rows/cols).
        y = jnp.maximum(acc1 * s1_ref[...] + b1_ref[...], 0.0).reshape(TH + 2, Wp, Cp)
        grow = lax.broadcasted_iota(jnp.int32, (TH + 2, 1, 1), 0) + (r * TH - 1)
        valid = (grow >= 0) & (grow < H_true)
        if need_col_mask:
            col = lax.broadcasted_iota(jnp.int32, (1, Wp, 1), 1)
            valid = valid & (col < W_true)
        y = jnp.where(valid, y, 0.0).astype(cdt)

        zc2 = jnp.zeros((TH + 2, 1, Cp), cdt)
        y3 = jnp.concatenate(
            [jnp.concatenate([zc2, y[:, :Wp - 1, :]], axis=1),
             y,
             jnp.concatenate([y[:, 1:, :], zc2], axis=1)],
            axis=-1).reshape(M1, 3 * Cp)

        # ---- conv2: 3 matmuls with K = 3*Cp -------------------------------
        acc2 = jnp.zeros((M2, Cp), jnp.float32)
        for ky in range(3):
            acc2 = acc2 + jnp.dot(y3[ky * Wp: ky * Wp + M2], w2_ref[ky],
                                  preferred_element_type=jnp.float32)

        # ---- bn2 + residual add (f32) + relu, single lane-dense store -----
        z = acc2 * s2_ref[...] + b2_ref[...]
        res = xm_ref[0].astype(jnp.float32).reshape(M2, Cp)
        o_ref[0] = jnp.maximum(z + res, 0.0).reshape(TH, Wp, Cp).astype(o_ref.dtype)

    return kernel


def residual_block(x_nhwc, w1_hwio, w2_hwio, scale1, bias1, scale2, bias2,
                   *, row_tile=32, compute_dtype=jnp.bfloat16):
    N, H, W, C = x_nhwc.shape
    Cp = _round_up(max(C, 128), 128)                 # lane-dense channel count
    Wp = _round_up(W, 8)                             # sublane-aligned width
    TH, Hp = _pick_row_tile(H, row_tile)
    NR = Hp // TH
    assert Hp % TH == 0 and TH % 2 == 0
    pc, pw, ph = Cp - C, Wp - W, Hp - H

    # zero padding: padded channels/rows/cols carry zeros (or are masked/sliced),
    # so slicing them off at the end restores exact semantics.
    if pc or pw or ph:
        xp = jnp.pad(x_nhwc, ((0, 0), (0, ph), (0, pw), (0, pc)))
    else:
        xp = x_nhwc

    def pad_w(w):                                    # HWIO -> (3, 3*Cp, Cp), kx folded
        if pc:
            w = jnp.pad(w, ((0, 0), (0, 0), (0, pc), (0, pc)))
        return w.reshape(3, 3 * Cp, Cp).astype(compute_dtype)

    def pad_v(v):
        v = v.astype(jnp.float32)
        if pc:
            v = jnp.pad(v, ((0, pc),))
        return v.reshape(1, Cp)

    w1f, w2f = pad_w(w1_hwio), pad_w(w2_hwio)
    s1, b1, s2, b2 = map(pad_v, (scale1, bias1, scale2, bias2))

    th2 = TH // 2
    mid_map = lambda n, r: (n, r, 0, 0)
    top_map = lambda n, r: (n, jnp.maximum(r * th2 - 1, 0), 0, 0)
    bot_map = lambda n, r: (n, jnp.minimum((r + 1) * th2, Hp // 2 - 1), 0, 0)
    rep_w = lambda n, r: (0, 0, 0)
    rep_v = lambda n, r: (0, 0)

    # Rough VMEM need: only raise the scoped limit when actually required
    # (large Cp / TH); small shapes keep compiler defaults.
    xbytes = jnp.dtype(x_nhwc.dtype).itemsize
    cbytes = jnp.dtype(compute_dtype).itemsize
    w_bytes = 2 * 3 * (3 * Cp) * Cp * cbytes
    io_bytes = ((TH + 4) * Wp * Cp + TH * Wp * Cp) * xbytes
    tmp_bytes = ((TH + 4) * Wp * 3 * Cp * cbytes + (TH + 2) * Wp * 3 * Cp * cbytes
                 + 2 * (TH + 2) * Wp * Cp * 4)
    est = 2 * (w_bytes + io_bytes) + tmp_bytes        # x2 for double-buffered pipeline
    vmem_limit = None if est <= 28 * 2**20 else int(min(est * 1.25, 100 * 2**20))

    out_p = pl.pallas_call(
        _make_kernel(TH, Wp, Cp, H, W),
        out_shape=jax.ShapeDtypeStruct((N, Hp, Wp, Cp), x_nhwc.dtype),
        grid_spec=pltpu.PrefetchScalarGridSpec(
            num_scalar_prefetch=0,
            grid=(N, NR),                              # one row tile per step
            in_specs=[
                pl.BlockSpec((1, 2, Wp, Cp), top_map),   # 2-row top halo
                pl.BlockSpec((1, TH, Wp, Cp), mid_map),  # main rows (+ residual)
                pl.BlockSpec((1, 2, Wp, Cp), bot_map),   # 2-row bottom halo
                pl.BlockSpec((3, 3 * Cp, Cp), rep_w),    # conv1 weights (kx-folded)
                pl.BlockSpec((3, 3 * Cp, Cp), rep_w),    # conv2 weights (kx-folded)
                pl.BlockSpec((1, Cp), rep_v),            # bn1 scale
                pl.BlockSpec((1, Cp), rep_v),            # bn1 bias
                pl.BlockSpec((1, Cp), rep_v),            # bn2 scale
                pl.BlockSpec((1, Cp), rep_v),            # bn2 bias
            ],
            out_specs=pl.BlockSpec((1, TH, Wp, Cp), mid_map),
        ),
        compiler_params=pltpu.CompilerParams(
            dimension_semantics=("parallel", "parallel"),
            vmem_limit_bytes=vmem_limit),
    )(xp, xp, xp, w1f, w2f, s1, b1, s2, b2)

    if (Hp, Wp, Cp) != (H, W, C):
        out_p = out_p[:, :H, :W, :C]
    return out_p


def reference_block(x, w1, w2, s1, b1, s2, b2):
    dn = ("NHWC", "HWIO", "NHWC")
    y = lax.conv_general_dilated(x, w1, (1, 1), "SAME", dimension_numbers=dn)
    y = jnp.maximum(y * s1 + b1, 0.0)
    z = lax.conv_general_dilated(y, w2, (1, 1), "SAME", dimension_numbers=dn)
    z = z * s2 + b2
    return jnp.maximum(z + x, 0.0)


if __name__ == "__main__":
    configs = [
        dict(N=2, C=4, H=16, W=16),   # PyTorch example: NCHW (2, 4, 16, 16)
        dict(N=1, C=4, H=14, W=14),   # W not a multiple of 8 -> in-kernel column mask
        dict(N=1, C=4, H=7, W=7),     # odd H -> wrapper row padding path
    ]
    key = jax.random.PRNGKey(0)
    eps = 1e-5
    for cfg in configs:
        N, C, H, W = cfg["N"], cfg["C"], cfg["H"], cfg["W"]
        key, *ks = jax.random.split(key, 12)
        kx_, kw1, kw2, kg1, kb1, km1, kv1, kg2, kb2, km2, kv2 = ks

        # activations built directly in NHWC layout
        x = jax.random.normal(kx_, (N, H, W, C), jnp.float32)
        w1 = 0.2 * jax.random.normal(kw1, (3, 3, C, C), jnp.float32)   # HWIO
        w2 = 0.2 * jax.random.normal(kw2, (3, 3, C, C), jnp.float32)

        # BatchNorm params (eval-mode), folded to per-channel scale/bias
        gamma1 = 1.0 + 0.1 * jax.random.normal(kg1, (C,), jnp.float32)
        beta1 = 0.1 * jax.random.normal(kb1, (C,), jnp.float32)
        mean1 = 0.05 * jax.random.normal(km1, (C,), jnp.float32)
        var1 = 1.0 + 0.1 * jax.random.uniform(kv1, (C,), jnp.float32)
        gamma2 = 1.0 + 0.1 * jax.random.normal(kg2, (C,), jnp.float32)
        beta2 = 0.1 * jax.random.normal(kb2, (C,), jnp.float32)
        mean2 = 0.05 * jax.random.normal(km2, (C,), jnp.float32)
        var2 = 1.0 + 0.1 * jax.random.uniform(kv2, (C,), jnp.float32)

        scale1 = gamma1 / jnp.sqrt(var1 + eps)
        bias1 = beta1 - mean1 * scale1
        scale2 = gamma2 / jnp.sqrt(var2 + eps)
        bias2 = beta2 - mean2 * scale2

        out = jax.block_until_ready(
            residual_block(x, w1, w2, scale1, bias1, scale2, bias2))
        ref = jax.block_until_ready(
            reference_block(x, w1, w2,
                            scale1.reshape(1, 1, 1, C), bias1.reshape(1, 1, 1, C),
                            scale2.reshape(1, 1, 1, C), bias2.reshape(1, 1, 1, C)))

        # kernel uses bf16 MXU operands (f32 accumulation) vs. an f32 reference,
        # so compare at bf16-level tolerance.
        np.testing.assert_allclose(np.asarray(out), np.asarray(ref),
                                   rtol=5e-2, atol=5e-2)

    print("KERNEL_OK")
</pallas_src>

<mosaic_0001>
module attributes {stable_mosaic.version = 11 : i64} {
  func.func @kernel(%arg0: i32, %arg1: i32, %arg2: memref<1x2x16x128xf32, #tpu.memory_space<vmem>>, %arg3: memref<1x16x16x128xf32, #tpu.memory_space<vmem>>, %arg4: memref<1x2x16x128xf32, #tpu.memory_space<vmem>>, %arg5: memref<3x384x128xbf16, #tpu.memory_space<vmem>>, %arg6: memref<3x384x128xbf16, #tpu.memory_space<vmem>>, %arg7: memref<1x128xf32, #tpu.memory_space<vmem>>, %arg8: memref<1x128xf32, #tpu.memory_space<vmem>>, %arg9: memref<1x128xf32, #tpu.memory_space<vmem>>, %arg10: memref<1x128xf32, #tpu.memory_space<vmem>>, %arg11: memref<1x16x16x128xf32, #tpu.memory_space<vmem>>) attributes {dimension_semantics = [#tpu.dimension_semantics<parallel>, #tpu.dimension_semantics<parallel>], iteration_bounds = array<i64: 2, 1>, scalar_prefetch = 0 : i64, scratch_operands = 0 : i64, tpu.core_type = #tpu.core_type<tc>, window_params = [{transform_indices = @transform_0, window_bounds = array<i64: 1, 2, 16, 128>}, {transform_indices = @transform_1, window_bounds = array<i64: 1, 16, 16, 128>}, {transform_indices = @transform_2, window_bounds = array<i64: 1, 2, 16, 128>}, {pipeline_mode = #tpu.pipeline_mode<synchronous>, transform_indices = @transform_3, window_bounds = array<i64: 3, 384, 128>}, {pipeline_mode = #tpu.pipeline_mode<synchronous>, transform_indices = @transform_4, window_bounds = array<i64: 3, 384, 128>}, {pipeline_mode = #tpu.pipeline_mode<synchronous>, transform_indices = @transform_5, window_bounds = array<i64: 1, 128>}, {pipeline_mode = #tpu.pipeline_mode<synchronous>, transform_indices = @transform_6, window_bounds = array<i64: 1, 128>}, {pipeline_mode = #tpu.pipeline_mode<synchronous>, transform_indices = @transform_7, window_bounds = array<i64: 1, 128>}, {pipeline_mode = #tpu.pipeline_mode<synchronous>, transform_indices = @transform_8, window_bounds = array<i64: 1, 128>}, {transform_indices = @transform_9, window_bounds = array<i64: 1, 16, 16, 128>}]} {
    %c0_i32 = arith.constant 0 : i32
    %0 = arith.cmpi sgt, %arg1, %c0_i32 : i32
    %c0 = arith.constant 0 : index
    %c0_0 = arith.constant 0 : index
    %c0_1 = arith.constant 0 : index
    %c0_2 = arith.constant 0 : index
    %1 = vector.load %arg2[%c0, %c0_0, %c0_1, %c0_2] : memref<1x2x16x128xf32, #tpu.memory_space<vmem>>, vector<1x2x16x128xf32>
    %2 = vector.shape_cast %1 : vector<1x2x16x128xf32> to vector<2x16x128xf32>
    %3 = arith.truncf %2 : vector<2x16x128xf32> to vector<2x16x128xbf16>
    %cst = arith.constant 0.000000e+00 : bf16
    %4 = vector.broadcast %cst : bf16 to vector<2x16x128xbf16>
    %5 = arith.select %0, %3, %4 : vector<2x16x128xbf16>
    %c0_i32_3 = arith.constant 0 : i32
    %6 = arith.cmpi slt, %arg1, %c0_i32_3 : i32
    %c0_4 = arith.constant 0 : index
    %c0_5 = arith.constant 0 : index
    %c0_6 = arith.constant 0 : index
    %c0_7 = arith.constant 0 : index
    %7 = vector.load %arg4[%c0_4, %c0_5, %c0_6, %c0_7] : memref<1x2x16x128xf32, #tpu.memory_space<vmem>>, vector<1x2x16x128xf32>
    %8 = vector.shape_cast %7 : vector<1x2x16x128xf32> to vector<2x16x128xf32>
    %9 = arith.truncf %8 : vector<2x16x128xf32> to vector<2x16x128xbf16>
    %cst_8 = arith.constant 0.000000e+00 : bf16
    %10 = vector.broadcast %cst_8 : bf16 to vector<2x16x128xbf16>
    %11 = arith.select %6, %9, %10 : vector<2x16x128xbf16>
    %c0_9 = arith.constant 0 : index
    %c0_10 = arith.constant 0 : index
    %c0_11 = arith.constant 0 : index
    %c0_12 = arith.constant 0 : index
    %12 = vector.load %arg3[%c0_9, %c0_10, %c0_11, %c0_12] : memref<1x16x16x128xf32, #tpu.memory_space<vmem>>, vector<1x16x16x128xf32>
    %13 = vector.shape_cast %12 : vector<1x16x16x128xf32> to vector<16x16x128xf32>
    %14 = arith.truncf %13 : vector<16x16x128xf32> to vector<16x16x128xbf16>
    %15 = tpu.concatenate %5, %14, %11 in 0 : vector<2x16x128xbf16>, vector<16x16x128xbf16>, vector<2x16x128xbf16> -> vector<20x16x128xbf16>
    %cst_13 = arith.constant 0.000000e+00 : bf16
    %16 = vector.broadcast %cst_13 : bf16 to vector<20x1x128xbf16>
    %17 = vector.extract_strided_slice %15 {offsets = [0, 0, 0], sizes = [20, 15, 128], strides = [1, 1, 1]} : vector<20x16x128xbf16> to vector<20x15x128xbf16>
    %18 = tpu.concatenate %16, %17 in 1 : vector<20x1x128xbf16>, vector<20x15x128xbf16> -> vector<20x16x128xbf16>
    %19 = vector.extract_strided_slice %15 {offsets = [0, 1, 0], sizes = [20, 15, 128], strides = [1, 1, 1]} : vector<20x16x128xbf16> to vector<20x15x128xbf16>
    %20 = tpu.concatenate %19, %16 in 1 : vector<20x15x128xbf16>, vector<20x1x128xbf16> -> vector<20x16x128xbf16>
    %21 = tpu.concatenate %18, %15, %20 in 2 : vector<20x16x128xbf16>, vector<20x16x128xbf16>, vector<20x16x128xbf16> -> vector<20x16x384xbf16>
    %22 = vector.shape_cast %21 : vector<20x16x384xbf16> to vector<320x384xbf16>
    %cst_14 = arith.constant 0.000000e+00 : f32
    %23 = vector.broadcast %cst_14 : f32 to vector<288x128xf32>
    %24 = vector.extract_strided_slice %22 {offsets = [0, 0], sizes = [288, 384], strides = [1, 1]} : vector<320x384xbf16> to vector<288x384xbf16>
    %c0_15 = arith.constant 0 : index
    %c0_16 = arith.constant 0 : index
    %c0_17 = arith.constant 0 : index
    %25 = vector.load %arg5[%c0_15, %c0_16, %c0_17] : memref<3x384x128xbf16, #tpu.memory_space<vmem>>, vector<1x384x128xbf16>
    %26 = vector.shape_cast %25 : vector<1x384x128xbf16> to vector<384x128xbf16>
    %cst_18 = arith.constant dense<0.000000e+00> : vector<288x128xf32>
    %27 = tpu.matmul %24, %26, %cst_18 {dimension_numbers = #tpu.dot_dimension_numbers<[1], [0], [0], [1], [0, 0, 1, 1], [], []>} : vector<288x384xbf16>, vector<384x128xbf16>, vector<288x128xf32> -> vector<288x128xf32>
    %28 = arith.addf %23, %27 : vector<288x128xf32>
    %29 = vector.extract_strided_slice %22 {offsets = [16, 0], sizes = [288, 384], strides = [1, 1]} : vector<320x384xbf16> to vector<288x384xbf16>
    %c1 = arith.constant 1 : index
    %c0_19 = arith.constant 0 : index
    %c0_20 = arith.constant 0 : index
    %30 = vector.load %arg5[%c1, %c0_19, %c0_20] : memref<3x384x128xbf16, #tpu.memory_space<vmem>>, vector<1x384x128xbf16>
    %31 = vector.shape_cast %30 : vector<1x384x128xbf16> to vector<384x128xbf16>
    %cst_21 = arith.constant dense<0.000000e+00> : vector<288x128xf32>
    %32 = tpu.matmul %29, %31, %cst_21 {dimension_numbers = #tpu.dot_dimension_numbers<[1], [0], [0], [1], [0, 0, 1, 1], [], []>} : vector<288x384xbf16>, vector<384x128xbf16>, vector<288x128xf32> -> vector<288x128xf32>
    %33 = arith.addf %28, %32 : vector<288x128xf32>
    %34 = vector.extract_strided_slice %22 {offsets = [32, 0], sizes = [288, 384], strides = [1, 1]} : vector<320x384xbf16> to vector<288x384xbf16>
    %c2 = arith.constant 2 : index
    %c0_22 = arith.constant 0 : index
    %c0_23 = arith.constant 0 : index
    %35 = vector.load %arg5[%c2, %c0_22, %c0_23] : memref<3x384x128xbf16, #tpu.memory_space<vmem>>, vector<1x384x128xbf16>
    %36 = vector.shape_cast %35 : vector<1x384x128xbf16> to vector<384x128xbf16>
    %cst_24 = arith.constant dense<0.000000e+00> : vector<288x128xf32>
    %37 = tpu.matmul %34, %36, %cst_24 {dimension_numbers = #tpu.dot_dimension_numbers<[1], [0], [0], [1], [0, 0, 1, 1], [], []>} : vector<288x384xbf16>, vector<384x128xbf16>, vector<288x128xf32> -> vector<288x128xf32>
    %38 = arith.addf %33, %37 : vector<288x128xf32>
    %c0_25 = arith.constant 0 : index
    %c0_26 = arith.constant 0 : index
    %39 = vector.load %arg7[%c0_25, %c0_26] : memref<1x128xf32, #tpu.memory_space<vmem>>, vector<1x128xf32>
    %40 = vector.broadcast %39 : vector<1x128xf32> to vector<288x128xf32>
    %41 = arith.mulf %38, %40 : vector<288x128xf32>
    %c0_27 = arith.constant 0 : index
    %c0_28 = arith.constant 0 : index
    %42 = vector.load %arg8[%c0_27, %c0_28] : memref<1x128xf32, #tpu.memory_space<vmem>>, vector<1x128xf32>
    %43 = vector.broadcast %42 : vector<1x128xf32> to vector<288x128xf32>
    %44 = arith.addf %41, %43 : vector<288x128xf32>
    %cst_29 = arith.constant 0.000000e+00 : f32
    %45 = vector.broadcast %cst_29 : f32 to vector<288x128xf32>
    %46 = arith.maximumf %44, %45 : vector<288x128xf32>
    %47 = vector.shape_cast %46 : vector<288x128xf32> to vector<18x16x128xf32>
    %48 = tpu.iota {dimensions = array<i32: 0>} : vector<18x1x1xi32>
    %c16_i32 = arith.constant 16 : i32
    %49 = arith.muli %arg1, %c16_i32 : i32
    %c1_i32 = arith.constant 1 : i32
    %50 = arith.subi %49, %c1_i32 : i32
    %51 = vector.broadcast %50 : i32 to vector<18x1x1xi32>
    %52 = arith.addi %48, %51 : vector<18x1x1xi32>
    %c0_i32_30 = arith.constant 0 : i32
    %53 = vector.broadcast %c0_i32_30 : i32 to vector<18x1x1xi32>
    %54 = arith.cmpi sge, %52, %53 : vector<18x1x1xi32>
    %c16_i32_31 = arith.constant 16 : i32
    %55 = vector.broadcast %c16_i32_31 : i32 to vector<18x1x1xi32>
    %56 = arith.cmpi slt, %52, %55 : vector<18x1x1xi32>
    %57 = arith.andi %54, %56 : vector<18x1x1xi1>
    %cst_32 = arith.constant 0.000000e+00 : f32
    %58 = vector.shape_cast %57 : vector<18x1x1xi1> to vector<18x1x1xi1>
    %59 = vector.broadcast %58 : vector<18x1x1xi1> to vector<18x16x128xi1>
    %60 = vector.broadcast %cst_32 : f32 to vector<18x16x128xf32>
    %61 = arith.select %59, %47, %60 : vector<18x16x128xi1>, vector<18x16x128xf32>
    %62 = arith.truncf %61 : vector<18x16x128xf32> to vector<18x16x128xbf16>
    %cst_33 = arith.constant 0.000000e+00 : bf16
    %63 = vector.broadcast %cst_33 : bf16 to vector<18x1x128xbf16>
    %64 = vector.extract_strided_slice %62 {offsets = [0, 0, 0], sizes = [18, 15, 128], strides = [1, 1, 1]} : vector<18x16x128xbf16> to vector<18x15x128xbf16>
    %65 = tpu.concatenate %63, %64 in 1 : vector<18x1x128xbf16>, vector<18x15x128xbf16> -> vector<18x16x128xbf16>
    %66 = vector.extract_strided_slice %62 {offsets = [0, 1, 0], sizes = [18, 15, 128], strides = [1, 1, 1]} : vector<18x16x128xbf16> to vector<18x15x128xbf16>
    %67 = tpu.concatenate %66, %63 in 1 : vector<18x15x128xbf16>, vector<18x1x128xbf16> -> vector<18x16x128xbf16>
    %68 = tpu.concatenate %65, %62, %67 in 2 : vector<18x16x128xbf16>, vector<18x16x128xbf16>, vector<18x16x128xbf16> -> vector<18x16x384xbf16>
    %69 = vector.shape_cast %68 : vector<18x16x384xbf16> to vector<288x384xbf16>
    %cst_34 = arith.constant 0.000000e+00 : f32
    %70 = vector.broadcast %cst_34 : f32 to vector<256x128xf32>
    %71 = vector.extract_strided_slice %69 {offsets = [0, 0], sizes = [256, 384], strides = [1, 1]} : vector<288x384xbf16> to vector<256x384xbf16>
    %c0_35 = arith.constant 0 : index
    %c0_36 = arith.constant 0 : index
    %c0_37 = arith.constant 0 : index
    %72 = vector.load %arg6[%c0_35, %c0_36, %c0_37] : memref<3x384x128xbf16, #tpu.memory_space<vmem>>, vector<1x384x128xbf16>
    %73 = vector.shape_cast %72 : vector<1x384x128xbf16> to vector<384x128xbf16>
    %cst_38 = arith.constant dense<0.000000e+00> : vector<256x128xf32>
    %74 = tpu.matmul %71, %73, %cst_38 {dimension_numbers = #tpu.dot_dimension_numbers<[1], [0], [0], [1], [0, 0, 1, 1], [], []>} : vector<256x384xbf16>, vector<384x128xbf16>, vector<256x128xf32> -> vector<256x128xf32>
    %75 = arith.addf %70, %74 : vector<256x128xf32>
    %76 = vector.extract_strided_slice %69 {offsets = [16, 0], sizes = [256, 384], strides = [1, 1]} : vector<288x384xbf16> to vector<256x384xbf16>
    %c1_39 = arith.constant 1 : index
    %c0_40 = arith.constant 0 : index
    %c0_41 = arith.constant 0 : index
    %77 = vector.load %arg6[%c1_39, %c0_40, %c0_41] : memref<3x384x128xbf16, #tpu.memory_space<vmem>>, vector<1x384x128xbf16>
    %78 = vector.shape_cast %77 : vector<1x384x128xbf16> to vector<384x128xbf16>
    %cst_42 = arith.constant dense<0.000000e+00> : vector<256x128xf32>
    %79 = tpu.matmul %76, %78, %cst_42 {dimension_numbers = #tpu.dot_dimension_numbers<[1], [0], [0], [1], [0, 0, 1, 1], [], []>} : vector<256x384xbf16>, vector<384x128xbf16>, vector<256x128xf32> -> vector<256x128xf32>
    %80 = arith.addf %75, %79 : vector<256x128xf32>
    %81 = vector.extract_strided_slice %69 {offsets = [32, 0], sizes = [256, 384], strides = [1, 1]} : vector<288x384xbf16> to vector<256x384xbf16>
    %c2_43 = arith.constant 2 : index
    %c0_44 = arith.constant 0 : index
    %c0_45 = arith.constant 0 : index
    %82 = vector.load %arg6[%c2_43, %c0_44, %c0_45] : memref<3x384x128xbf16, #tpu.memory_space<vmem>>, vector<1x384x128xbf16>
    %83 = vector.shape_cast %82 : vector<1x384x128xbf16> to vector<384x128xbf16>
    %cst_46 = arith.constant dense<0.000000e+00> : vector<256x128xf32>
    %84 = tpu.matmul %81, %83, %cst_46 {dimension_numbers = #tpu.dot_dimension_numbers<[1], [0], [0], [1], [0, 0, 1, 1], [], []>} : vector<256x384xbf16>, vector<384x128xbf16>, vector<256x128xf32> -> vector<256x128xf32>
    %85 = arith.addf %80, %84 : vector<256x128xf32>
    %c0_47 = arith.constant 0 : index
    %c0_48 = arith.constant 0 : index
    %86 = vector.load %arg9[%c0_47, %c0_48] : memref<1x128xf32, #tpu.memory_space<vmem>>, vector<1x128xf32>
    %87 = vector.broadcast %86 : vector<1x128xf32> to vector<256x128xf32>
    %88 = arith.mulf %85, %87 : vector<256x128xf32>
    %c0_49 = arith.constant 0 : index
    %c0_50 = arith.constant 0 : index
    %89 = vector.load %arg10[%c0_49, %c0_50] : memref<1x128xf32, #tpu.memory_space<vmem>>, vector<1x128xf32>
    %90 = vector.broadcast %89 : vector<1x128xf32> to vector<256x128xf32>
    %91 = arith.addf %88, %90 : vector<256x128xf32>
    %c0_51 = arith.constant 0 : index
    %c0_52 = arith.constant 0 : index
    %c0_53 = arith.constant 0 : index
    %c0_54 = arith.constant 0 : index
    %92 = vector.load %arg3[%c0_51, %c0_52, %c0_53, %c0_54] : memref<1x16x16x128xf32, #tpu.memory_space<vmem>>, vector<1x16x16x128xf32>
    %93 = vector.shape_cast %92 : vector<1x16x16x128xf32> to vector<16x16x128xf32>
    %94 = vector.shape_cast %93 : vector<16x16x128xf32> to vector<256x128xf32>
    %95 = arith.addf %91, %94 : vector<256x128xf32>
    %cst_55 = arith.constant 0.000000e+00 : f32
    %96 = vector.broadcast %cst_55 : f32 to vector<256x128xf32>
    %97 = arith.maximumf %95, %96 : vector<256x128xf32>
    %98 = vector.shape_cast %97 : vector<256x128xf32> to vector<16x16x128xf32>
    %c0_56 = arith.constant 0 : index
    %c0_57 = arith.constant 0 : index
    %c0_58 = arith.constant 0 : index
    %c0_59 = arith.constant 0 : index
    %99 = vector.load %arg11[%c0_56, %c0_57, %c0_58, %c0_59] : memref<1x16x16x128xf32, #tpu.memory_space<vmem>>, vector<1x16x16x128xf32>
    %100 = vector.shape_cast %99 : vector<1x16x16x128xf32> to vector<16x16x128xf32>
    %101 = vector.shape_cast %98 : vector<16x16x128xf32> to vector<1x16x16x128xf32>
    tpu.vector_store %arg11[%c0_56, %c0_57, %c0_58, %c0_59], %101 {strides = array<i32>} : memref<1x16x16x128xf32, #tpu.memory_space<vmem>>, vector<1x16x16x128xf32>,
    return
  }
  func.func @transform_0(%arg0: i32, %arg1: i32) -> (i32, i32, i32, i32) {
    %c8_i32 = arith.constant 8 : i32
    %0 = arith.muli %arg1, %c8_i32 : i32
    %c1_i32 = arith.constant 1 : i32
    %1 = arith.subi %0, %c1_i32 : i32
    %c0_i32 = arith.constant 0 : i32
    %2 = arith.maxsi %1, %c0_i32 : i32
    %c0_i32_0 = arith.constant 0 : i32
    %c0_i32_1 = arith.constant 0 : i32
    %c0_i32_2 = arith.constant 0 : i32
    return %arg0, %2, %c0_i32_0, %c0_i32_1 : i32, i32, i32, i32
  }
  func.func @transform_1(%arg0: i32, %arg1: i32) -> (i32, i32, i32, i32) {
    %c0_i32 = arith.constant 0 : i32
    %c0_i32_0 = arith.constant 0 : i32
    %c0_i32_1 = arith.constant 0 : i32
    return %arg0, %arg1, %c0_i32, %c0_i32_0 : i32, i32, i32, i32
  }
  func.func @transform_2(%arg0: i32, %arg1: i32) -> (i32, i32, i32, i32) {
    %c1_i32 = arith.constant 1 : i32
    %0 = arith.addi %arg1, %c1_i32 : i32
    %c8_i32 = arith.constant 8 : i32
    %1 = arith.muli %0, %c8_i32 : i32
    %c7_i32 = arith.constant 7 : i32
    %2 = arith.minsi %1, %c7_i32 : i32
    %c0_i32 = arith.constant 0 : i32
    %c0_i32_0 = arith.constant 0 : i32
    %c0_i32_1 = arith.constant 0 : i32
    return %arg0, %2, %c0_i32, %c0_i32_0 : i32, i32, i32, i32
  }
  func.func @transform_3(%arg0: i32, %arg1: i32) -> (i32, i32, i32) {
    %c0_i32 = arith.constant 0 : i32
    %c0_i32_0 = arith.constant 0 : i32
    %c0_i32_1 = arith.constant 0 : i32
    %c0_i32_2 = arith.constant 0 : i32
    return %c0_i32, %c0_i32_0, %c0_i32_1 : i32, i32, i32
  }
  func.func @transform_4(%arg0: i32, %arg1: i32) -> (i32, i32, i32) {
    %c0_i32 = arith.constant 0 : i32
    %c0_i32_0 = arith.constant 0 : i32
    %c0_i32_1 = arith.constant 0 : i32
    %c0_i32_2 = arith.constant 0 : i32
    return %c0_i32, %c0_i32_0, %c0_i32_1 : i32, i32, i32
  }
  func.func @transform_5(%arg0: i32, %arg1: i32) -> (i32, i32) {
    %c0_i32 = arith.constant 0 : i32
    %c0_i32_0 = arith.constant 0 : i32
    %c0_i32_1 = arith.constant 0 : i32
    return %c0_i32, %c0_i32_0 : i32, i32
  }
  func.func @transform_6(%arg0: i32, %arg1: i32) -> (i32, i32) {
    %c0_i32 = arith.constant 0 : i32
    %c0_i32_0 = arith.constant 0 : i32
    %c0_i32_1 = arith.constant 0 : i32
    return %c0_i32, %c0_i32_0 : i32, i32
  }
  func.func @transform_7(%arg0: i32, %arg1: i32) -> (i32, i32) {
    %c0_i32 = arith.constant 0 : i32
    %c0_i32_0 = arith.constant 0 : i32
    %c0_i32_1 = arith.constant 0 : i32
    return %c0_i32, %c0_i32_0 : i32, i32
  }
  func.func @transform_8(%arg0: i32, %arg1: i32) -> (i32, i32) {
    %c0_i32 = arith.constant 0 : i32
    %c0_i32_0 = arith.constant 0 : i32
    %c0_i32_1 = arith.constant 0 : i32
    return %c0_i32, %c0_i32_0 : i32, i32
  }
  func.func @transform_9(%arg0: i32, %arg1: i32) -> (i32, i32, i32, i32) {
    %c0_i32 = arith.constant 0 : i32
    %c0_i32_0 = arith.constant 0 : i32
    %c0_i32_1 = arith.constant 0 : i32
    return %arg0, %arg1, %c0_i32, %c0_i32_0 : i32, i32, i32, i32
  }
}

</mosaic_0001>

<llo_original>
// kernel: tpu_custom_call.1
$region0: #{tpu_custom_call.1}
  #allocation0 [shape = 'u32[]', space=smem, size = 0x4, offset = 0x4, fixed_abs, tag = 'smem constant byte address 0x4 - core index']
  #allocation1 [shape = 'u32[144,128]{1,0:T(1,128)}', space=vmem, size = 0x12000, scoped, tag = 'internal scratch']
  %s0 = inlined_call_operand.hbm [shape: f32[2,16,16,128], index: 0, kind: input, shape index: {}]
  %s1 = inlined_call_operand.hbm [shape: f32[2,16,16,128], index: 1, kind: input, shape index: {}]
  %s2 = inlined_call_operand.hbm [shape: f32[2,16,16,128], index: 2, kind: input, shape index: {}]
  %s3 = inlined_call_operand.hbm [shape: bf16[3,384,128], index: 3, kind: input, shape index: {}]
  %s4 = inlined_call_operand.hbm [shape: bf16[3,384,128], index: 4, kind: input, shape index: {}]
  %s5 = inlined_call_operand.vmem [shape: f32[1,128], index: 5, kind: input, shape index: {}]
  %s6 = inlined_call_operand.vmem [shape: f32[1,128], index: 6, kind: input, shape index: {}]
  %s7 = inlined_call_operand.vmem [shape: f32[1,128], index: 7, kind: input, shape index: {}]
  %s8 = inlined_call_operand.vmem [shape: f32[1,128], index: 8, kind: input, shape index: {}]
  %s9 = inlined_call_operand.hbm [shape: f32[2,16,16,128], index: 9, kind: output, shape index: {}]
  %s10 = sld [smem:[#allocation0]]
  $region89: #{tpu_custom_call.1} parent=0
    _
  %s12 = ssub.s32 1, %s10
  %s13 = scalar_select 0, %s12, %s10
  $region1: #{tpu_custom_call.1} parent=0
    #allocation2 [shape = 'u8[32768]{0}', space=vmem, size = 0x8000, scoped, tag = 'input window, operand 0']
    #allocation3 [shape = 's32[2]{0}', space=sflag, size = 0x8, scoped, tag = 'scoped memory for tpu_custom_call.1']
    #allocation4 [shape = 's32[2]{0}', space=sflag, size = 0x8, scoped, tag = 'scoped memory for tpu_custom_call.1']
    #allocation5 [shape = 'u8[262144]{0}', space=vmem, size = 0x40000, scoped, tag = 'input window, operand 1']
    #allocation6 [shape = 's32[2]{0}', space=sflag, size = 0x8, scoped, tag = 'scoped memory for tpu_custom_call.1']
    #allocation7 [shape = 'u8[32768]{0}', space=vmem, size = 0x8000, scoped, tag = 'input window, operand 2']
    #allocation8 [shape = 'u8[294912]{0}', space=vmem, size = 0x48000, scoped, tag = 'input window, operand 3, single buffered']
    #allocation9 [shape = 's32[1]{0}', space=sflag, size = 0x4, scoped, tag = 'scoped memory for tpu_custom_call.1']
    #allocation10 [shape = 'u8[294912]{0}', space=vmem, size = 0x48000, scoped, tag = 'input window, operand 4, single buffered']
    #allocation11 [shape = 'u8[262144]{0}', space=vmem, size = 0x40000, scoped, tag = 'output window, operand 0']
    %14 = vsyncpa [#allocation3], 0
    %s15 = scalar_lea.sflag [#allocation3], 1
    %16 = vsyncpa %s15, 0
    %17 = vsyncpa [#allocation6], 0
    %s18 = scalar_lea.sflag [#allocation6], 1
    %19 = vsyncpa %s18, 0
    %20 = vsyncpa [#allocation9], 0
    %21 = vsyncpa [#allocation4], 0
    %s22 = scalar_lea.sflag [#allocation4], 1
    %23 = vsyncpa %s22, 0
    loop: start=0, step=1, limit=4
    $region2: #{tpu_custom_call.1} parent=1 // loop_pre_header
      _
    $region3: #{tpu_custom_call.1} parent=1 // loop_header
      %s25 = sphi 0, %s29
      %p26 = scmp.ge.s32.totalorder %s25, 4
      %s32 = sphi 0, %s44
      %s33 = sphi 0, %s40
      %s34 = sphi 0, %s32
      %s35 = sphi 0, %s33
      %s36 = sphi 0, %s34
      %s37 = sphi 0, %s35
      %s57 = sphi 0, %s59
      %s60 = sphi 0, %s57
      %s61 = sphi 0, %s60
      %s77 = sphi 0, %s61
      %s85 = sphi 0, %s87
      %s88 = sphi 0, %s85
      %s89 = sphi 0, %s88
      %s105 = sphi 0, %s89
      %s121 = sphi 0, %s123
      %s124 = sphi 0, %s121
      %s125 = sphi 0, %s124
      %s141 = sphi 0, %s125
      %s145 = sphi 0, %s145
      %s147 = sphi 0, %s145
      %s148 = sphi 0, %s147
      %s162 = sphi 0, %s148
      %s166 = sphi 0, %s166
      %s168 = sphi 0, %s166
      %s169 = sphi 0, %s168
      %s183 = sphi 0, %s169
      %s187 = sphi 0, %s187
      %s189 = sphi 0, %s187
      %s190 = sphi 0, %s189
      %s204 = sphi 0, %s190
      %s208 = sphi 0, %s208
      %s210 = sphi 0, %s208
      %s211 = sphi 0, %s210
      %s225 = sphi 0, %s211
      %s229 = sphi 0, %s229
      %s231 = sphi 0, %s229
      %s232 = sphi 0, %s231
      %s246 = sphi 0, %s232
      %s250 = sphi 0, %s250
      %s252 = sphi 0, %s250
      %s253 = sphi 0, %s252
      %s267 = sphi 0, %s253
      %s275 = sphi 0, %s277
      %s278 = sphi 0, %s275
      %s279 = sphi 0, %s278
      %s295 = sphi 0, %s279
    $region4: #{tpu_custom_call.1} parent=1 // loop_header_branch
      %28 = sbr.rel (%p26) target = $region8
    $region5: #{tpu_custom_call.1} parent=1 // loop_body
      %s30 = ssub.s32 %s25, 1
      %s31 = ssub.s32 %s25, 2
      %s38 = sadd.s32 1, %s33
      %p39 = scmp.ge.s32.totalorder %s38, 1
      %s40 = scalar_select %p39, 0, %s38
      %s41 = sadd.s32 1, %s32
      %s42 = scalar_select %p39, %s41, %s32
      %p43 = scmp.ge.s32.totalorder %s42, 2
      %s44 = scalar_select %p43, 0, %s42
      %s45 = smul.u32 %s33, 8
      %s46 = ssub.s32 %s45, 1
      %p47 = scmp.gt.s32.totalorder %s46, 0
      %s48 = scalar_select %p47, %s46, 0
      %s49 = smul.u32 %s40, 8
      %s50 = ssub.s32 %s49, 1
      %p51 = scmp.gt.s32.totalorder %s50, 0
      %s52 = scalar_select %p51, %s50, 0
      %s53 = ssub.s32 %s32, %s44
      %s54 = ssub.s32 %s48, %s52
      %s55 = sor.u32 %s53, %s54
      %p56 = scmp.eq.s32.totalorder %s55, 0
      %s58 = sadd.s32 %s57, 1
      %s59 = scalar_select %p56, %s57, %s58
      %p62 = pneg %p56
      %p63 = scmp.eq.s32.totalorder %s25, 1
      %p64 = por %p62, %p63
      %p65 = scmp.ne.s32.totalorder %s57, %s60
      %p66 = scmp.eq.s32.totalorder %s25, 0
      %p67 = por %p65, %p66
      %p68 = scmp.ne.s32.totalorder %s57, %s60
      %p69 = scmp.eq.s32.totalorder %s30, 1
      %p70 = por %p68, %p69
      %p71 = scmp.ne.s32.totalorder %s60, %s61
      %p72 = scmp.eq.s32.totalorder %s30, 0
      %p73 = por %p71, %p72
      %p74 = scmp.ne.s32.totalorder %s60, %s61
      %p75 = scmp.eq.s32.totalorder %s31, 1
      %p76 = por %p74, %p75
      %p78 = scmp.ne.s32.totalorder %s61, %s77
      %p79 = scmp.eq.s32.totalorder %s31, 0
      %p80 = por %p78, %p79
      %s81 = ssub.s32 %s32, %s44
      %s82 = ssub.s32 %s33, %s40
      %s83 = sor.u32 %s81, %s82
      %p84 = scmp.eq.s32.totalorder %s83, 0
      %s86 = sadd.s32 %s85, 1
      %s87 = scalar_select %p84, %s85, %s86
      %p90 = pneg %p84
      %p91 = scmp.eq.s32.totalorder %s25, 1
      %p92 = por %p90, %p91
      %p93 = scmp.ne.s32.totalorder %s85, %s88
      %p94 = scmp.eq.s32.totalorder %s25, 0
      %p95 = por %p93, %p94
      %p96 = scmp.ne.s32.totalorder %s85, %s88
      %p97 = scmp.eq.s32.totalorder %s30, 1
      %p98 = por %p96, %p97
      %p99 = scmp.ne.s32.totalorder %s88, %s89
      %p100 = scmp.eq.s32.totalorder %s30, 0
      %p101 = por %p99, %p100
      %p102 = scmp.ne.s32.totalorder %s88, %s89
      %p103 = scmp.eq.s32.totalorder %s31, 1
      %p104 = por %p102, %p103
      %p106 = scmp.ne.s32.totalorder %s89, %s105
      %p107 = scmp.eq.s32.totalorder %s31, 0
      %p108 = por %p106, %p107
      %s109 = sadd.s32 %s33, 1
      %s110 = smul.u32 %s109, 8
      %p111 = scmp.lt.s32.totalorder %s110, 7
      %s112 = scalar_select %p111, %s110, 7
      %s113 = sadd.s32 %s40, 1
      %s114 = smul.u32 %s113, 8
      %p115 = scmp.lt.s32.totalorder %s114, 7
      %s116 = scalar_select %p115, %s114, 7
      %s117 = ssub.s32 %s32, %s44
      %s118 = ssub.s32 %s112, %s116
      %s119 = sor.u32 %s117, %s118
      %p120 = scmp.eq.s32.totalorder %s119, 0
      %s122 = sadd.s32 %s121, 1
      %s123 = scalar_select %p120, %s121, %s122
      %p126 = pneg %p120
      %p127 = scmp.eq.s32.totalorder %s25, 1
      %p128 = por %p126, %p127
      %p129 = scmp.ne.s32.totalorder %s121, %s124
      %p130 = scmp.eq.s32.totalorder %s25, 0
      %p131 = por %p129, %p130
      %p132 = scmp.ne.s32.totalorder %s121, %s124
      %p133 = scmp.eq.s32.totalorder %s30, 1
      %p134 = por %p132, %p133
      %p135 = scmp.ne.s32.totalorder %s124, %s125
      %p136 = scmp.eq.s32.totalorder %s30, 0
      %p137 = por %p135, %p136
      %p138 = scmp.ne.s32.totalorder %s124, %s125
      %p139 = scmp.eq.s32.totalorder %s31, 1
      %p140 = por %p138, %p139
      %p142 = scmp.ne.s32.totalorder %s125, %s141
      %p143 = scmp.eq.s32.totalorder %s31, 0
      %p144 = por %p142, %p143
      %s146 = sadd.s32 %s145, 1
      %p149 = scmp.eq.s32.totalorder %s25, 1
      %p150 = scmp.ne.s32.totalorder %s145, %s147
      %p151 = scmp.eq.s32.totalorder %s25, 0
      %p152 = por %p150, %p151
      %p153 = scmp.ne.s32.totalorder %s145, %s147
      %p154 = scmp.eq.s32.totalorder %s30, 1
      %p155 = por %p153, %p154
      %p156 = scmp.ne.s32.totalorder %s147, %s148
      %p157 = scmp.eq.s32.totalorder %s30, 0
      %p158 = por %p156, %p157
      %p159 = scmp.ne.s32.totalorder %s147, %s148
      %p160 = scmp.eq.s32.totalorder %s31, 1
      %p161 = por %p159, %p160
      %p163 = scmp.ne.s32.totalorder %s148, %s162
      %p164 = scmp.eq.s32.totalorder %s31, 0
      %p165 = por %p163, %p164
      %s167 = sadd.s32 %s166, 1
      %p170 = scmp.eq.s32.totalorder %s25, 1
      %p171 = scmp.ne.s32.totalorder %s166, %s168
      %p172 = scmp.eq.s32.totalorder %s25, 0
      %p173 = por %p171, %p172
      %p174 = scmp.ne.s32.totalorder %s166, %s168
      %p175 = scmp.eq.s32.totalorder %s30, 1
      %p176 = por %p174, %p175
      %p177 = scmp.ne.s32.totalorder %s168, %s169
      %p178 = scmp.eq.s32.totalorder %s30, 0
      %p179 = por %p177, %p178
      %p180 = scmp.ne.s32.totalorder %s168, %s169
      %p181 = scmp.eq.s32.totalorder %s31, 1
      %p182 = por %p180, %p181
      %p184 = scmp.ne.s32.totalorder %s169, %s183
      %p185 = scmp.eq.s32.totalorder %s31, 0
      %p186 = por %p184, %p185
      %s188 = sadd.s32 %s187, 1
      %p191 = scmp.eq.s32.totalorder %s25, 1
      %p192 = scmp.ne.s32.totalorder %s187, %s189
      %p193 = scmp.eq.s32.totalorder %s25, 0
      %p194 = por %p192, %p193
      %p195 = scmp.ne.s32.totalorder %s187, %s189
      %p196 = scmp.eq.s32.totalorder %s30, 1
      %p197 = por %p195, %p196
      %p198 = scmp.ne.s32.totalorder %s189, %s190
      %p199 = scmp.eq.s32.totalorder %s30, 0
      %p200 = por %p198, %p199
      %p201 = scmp.ne.s32.totalorder %s189, %s190
      %p202 = scmp.eq.s32.totalorder %s31, 1
      %p203 = por %p201, %p202
      %p205 = scmp.ne.s32.totalorder %s190, %s204
      %p206 = scmp.eq.s32.totalorder %s31, 0
      %p207 = por %p205, %p206
      %s209 = sadd.s32 %s208, 1
      %p212 = scmp.eq.s32.totalorder %s25, 1
      %p213 = scmp.ne.s32.totalorder %s208, %s210
      %p214 = scmp.eq.s32.totalorder %s25, 0
      %p215 = por %p213, %p214
      %p216 = scmp.ne.s32.totalorder %s208, %s210
      %p217 = scmp.eq.s32.totalorder %s30, 1
      %p218 = por %p216, %p217
      %p219 = scmp.ne.s32.totalorder %s210, %s211
      %p220 = scmp.eq.s32.totalorder %s30, 0
      %p221 = por %p219, %p220
      %p222 = scmp.ne.s32.totalorder %s210, %s211
      %p223 = scmp.eq.s32.totalorder %s31, 1
      %p224 = por %p222, %p223
      %p226 = scmp.ne.s32.totalorder %s211, %s225
      %p227 = scmp.eq.s32.totalorder %s31, 0
      %p228 = por %p226, %p227
      %s230 = sadd.s32 %s229, 1
      %p233 = scmp.eq.s32.totalorder %s25, 1
      %p234 = scmp.ne.s32.totalorder %s229, %s231
      %p235 = scmp.eq.s32.totalorder %s25, 0
      %p236 = por %p234, %p235
      %p237 = scmp.ne.s32.totalorder %s229, %s231
      %p238 = scmp.eq.s32.totalorder %s30, 1
      %p239 = por %p237, %p238
      %p240 = scmp.ne.s32.totalorder %s231, %s232
      %p241 = scmp.eq.s32.totalorder %s30, 0
      %p242 = por %p240, %p241
      %p243 = scmp.ne.s32.totalorder %s231, %s232
      %p244 = scmp.eq.s32.totalorder %s31, 1
      %p245 = por %p243, %p244
      %p247 = scmp.ne.s32.totalorder %s232, %s246
      %p248 = scmp.eq.s32.totalorder %s31, 0
      %p249 = por %p247, %p248
      %s251 = sadd.s32 %s250, 1
      %p254 = scmp.eq.s32.totalorder %s25, 1
      %p255 = scmp.ne.s32.totalorder %s250, %s252
      %p256 = scmp.eq.s32.totalorder %s25, 0
      %p257 = por %p255, %p256
      %p258 = scmp.ne.s32.totalorder %s250, %s252
      %p259 = scmp.eq.s32.totalorder %s30, 1
      %p260 = por %p258, %p259
      %p261 = scmp.ne.s32.totalorder %s252, %s253
      %p262 = scmp.eq.s32.totalorder %s30, 0
      %p263 = por %p261, %p262
      %p264 = scmp.ne.s32.totalorder %s252, %s253
      %p265 = scmp.eq.s32.totalorder %s31, 1
      %p266 = por %p264, %p265
      %p268 = scmp.ne.s32.totalorder %s253, %s267
      %p269 = scmp.eq.s32.totalorder %s31, 0
      %p270 = por %p268, %p269
      %s271 = ssub.s32 %s32, %s44
      %s272 = ssub.s32 %s33, %s40
      %s273 = sor.u32 %s271, %s272
      %p274 = scmp.eq.s32.totalorder %s273, 0
      %s276 = sadd.s32 %s275, 1
      %s277 = scalar_select %p274, %s275, %s276
      %p280 = pneg %p274
      %p281 = scmp.eq.s32.totalorder %s25, 1
      %p282 = por %p280, %p281
      %p283 = scmp.ne.s32.totalorder %s275, %s278
      %p284 = scmp.eq.s32.totalorder %s25, 0
      %p285 = por %p283, %p284
      %p286 = scmp.ne.s32.totalorder %s275, %s278
      %p287 = scmp.eq.s32.totalorder %s30, 1
      %p288 = por %p286, %p287
      %p289 = scmp.ne.s32.totalorder %s278, %s279
      %p290 = scmp.eq.s32.totalorder %s30, 0
      %p291 = por %p289, %p290
      %p292 = scmp.ne.s32.totalorder %s278, %s279
      %p293 = scmp.eq.s32.totalorder %s31, 1
      %p294 = por %p292, %p293
      %p296 = scmp.ne.s32.totalorder %s279, %s295
      %p297 = scmp.eq.s32.totalorder %s31, 0
      %p298 = por %p296, %p297
      %p299 = scmp.le.s32.totalorder 1, %s25
      %p300 = scmp.lt.s32.totalorder %s25, 3
      %p301 = pnand %p299, %p300
      %p302 = pneg %p301
      // Predicated region
      $region9: #{tpu_custom_call.1} parent=5 // pred_check
        _
      $region10: #{tpu_custom_call.1} parent=5 // pred_check_branch
        %304 = sbr.rel (%p301) target = $region12
      $region11: #{tpu_custom_call.1} parent=5 // pred_region
        %s305 = ssub.s32 %s25, 1
        // Predicated region
        $region13: #{tpu_custom_call.1} parent=11 // pred_check
          %p306 = pneg %p158
        $region14: #{tpu_custom_call.1} parent=11 // pred_check_branch
          %308 = sbr.rel (%p306) target = $region16
        $region15: #{tpu_custom_call.1} parent=11 // pred_region
          %s310 = ssub.s32 9216, 9216
          %311 = vsyncadd [#allocation9], %s310
          %s312 = sshll.u32 [#allocation8], 4
          %s313 = int_to_ptr.vmem [resolvable:$true] %s312
          %318 = dma.hbm_to_vmem [thread:$0]  %s3, 9216, %s313, [#allocation9], 64, 64, 4
        $region16: #{tpu_custom_call.1} parent=11 // pred_fallthru
          _
        // Predicated region
        $region17: #{tpu_custom_call.1} parent=11 // pred_check
          %p319 = pneg %p179
        $region18: #{tpu_custom_call.1} parent=11 // pred_check_branch
          %321 = sbr.rel (%p319) target = $region20
        $region19: #{tpu_custom_call.1} parent=11 // pred_region
          %s323 = ssub.s32 9216, 9216
          %324 = vsyncadd [#allocation9], %s323
          %s325 = sshll.u32 [#allocation10], 4
          %s326 = int_to_ptr.vmem [resolvable:$true] %s325
          %331 = dma.hbm_to_vmem [thread:$0]  %s4, 9216, %s326, [#allocation9], 64, 64, 4
        $region20: #{tpu_custom_call.1} parent=11 // pred_fallthru
          _
        // Predicated region
        $region21: #{tpu_custom_call.1} parent=11 // pred_check
          %p332 = pneg %p200
        $region22: #{tpu_custom_call.1} parent=11 // pred_check_branch
          %334 = sbr.rel (%p332) target = $region24
        $region23: #{tpu_custom_call.1} parent=11 // pred_region
          _
        $region24: #{tpu_custom_call.1} parent=11 // pred_fallthru
          _
        // Predicated region
        $region25: #{tpu_custom_call.1} parent=11 // pred_check
          %p335 = pneg %p221
        $region26: #{tpu_custom_call.1} parent=11 // pred_check_branch
          %337 = sbr.rel (%p335) target = $region28
        $region27: #{tpu_custom_call.1} parent=11 // pred_region
          _
        $region28: #{tpu_custom_call.1} parent=11 // pred_fallthru
          _
        // Predicated region
        $region29: #{tpu_custom_call.1} parent=11 // pred_check
          %p338 = pneg %p242
        $region30: #{tpu_custom_call.1} parent=11 // pred_check_branch
          %340 = sbr.rel (%p338) target = $region32
        $region31: #{tpu_custom_call.1} parent=11 // pred_region
          _
        $region32: #{tpu_custom_call.1} parent=11 // pred_fallthru
          _
        // Predicated region
        $region33: #{tpu_custom_call.1} parent=11 // pred_check
          %p341 = pneg %p263
        $region34: #{tpu_custom_call.1} parent=11 // pred_check_branch
          %343 = sbr.rel (%p341) target = $region36
        $region35: #{tpu_custom_call.1} parent=11 // pred_region
          _
        $region36: #{tpu_custom_call.1} parent=11 // pred_fallthru
          _
      $region12: #{tpu_custom_call.1} parent=5 // pred_fallthru
        _
      %p344 = scmp.lt.s32.totalorder %s25, 2
      // Predicated region
      $region37: #{tpu_custom_call.1} parent=5 // pred_check
        %p345 = pneg %p344
      $region38: #{tpu_custom_call.1} parent=5 // pred_check_branch
        %347 = sbr.rel (%p345) target = $region40
      $region39: #{tpu_custom_call.1} parent=5 // pred_region
        // Predicated region
        $region41: #{tpu_custom_call.1} parent=39 // pred_check
          %p348 = pneg %p67
        $region42: #{tpu_custom_call.1} parent=39 // pred_check_branch
          %350 = sbr.rel (%p348) target = $region44
        $region43: #{tpu_custom_call.1} parent=39 // pred_region
          %s351 = sand.u32 %s57, 1
          %s352 = scalar_lea.sflag [#allocation3], %s351
          %s353 = sand.u32 %s57, 1
          %s354 = smul.addr %s353, 32
          %s355 = scalar_lea.vmem [#allocation2], %s354
          %s356 = smul.u32 %s33, 8
          %s357 = ssub.s32 %s356, 1
          %p358 = scmp.gt.s32.totalorder %s357, 0
          %s359 = scalar_select %p358, %s357, 0
          %s360 = smul.u32 2, %s359
          %s362 = ssub.s32 512, 512
          %363 = vsyncadd %s352, %s362
          %s364 = smul.addr %s360, 2
          %s365 = smul.addr %s32, 32
          %s366 = sadd.s32 %s364, %s365
          %s367 = smul.addr %s366, 128
          %s368 = scalar_lea.hbm %s0, %s367
          %s369 = sshll.u32 %s355, 4
          %s370 = int_to_ptr.vmem [resolvable:$true] %s369
          %375 = dma.hbm_to_vmem [thread:$0]  %s368, 512, %s370, %s352, 128, 128, 8
        $region44: #{tpu_custom_call.1} parent=39 // pred_fallthru
          _
        // Predicated region
        $region45: #{tpu_custom_call.1} parent=39 // pred_check
          %p376 = pneg %p95
        $region46: #{tpu_custom_call.1} parent=39 // pred_check_branch
          %378 = sbr.rel (%p376) target = $region48
        $region47: #{tpu_custom_call.1} parent=39 // pred_region
          %s379 = sand.u32 %s25, 1
          %s380 = scalar_lea.sflag [#allocation6], %s379
          %s381 = sand.u32 %s85, 1
          %s382 = smul.addr %s381, 256
          %s383 = scalar_lea.vmem [#allocation5], %s382
          %s384 = smul.u32 16, %s33
          %s386 = ssub.s32 4096, 4096
          %387 = vsyncadd %s380, %s386
          %s388 = smul.addr %s384, 2
          %s389 = smul.addr %s32, 32
          %s390 = sadd.s32 %s388, %s389
          %s391 = smul.addr %s390, 128
          %s392 = scalar_lea.hbm %s1, %s391
          %s393 = sshll.u32 %s383, 4
          %s394 = int_to_ptr.vmem [resolvable:$true] %s393
          %399 = dma.hbm_to_vmem [thread:$0]  %s392, 4096, %s394, %s380, 128, 128, 8
        $region48: #{tpu_custom_call.1} parent=39 // pred_fallthru
          _
        // Predicated region
        $region49: #{tpu_custom_call.1} parent=39 // pred_check
          %p400 = pneg %p131
        $region50: #{tpu_custom_call.1} parent=39 // pred_check_branch
          %402 = sbr.rel (%p400) target = $region52
        $region51: #{tpu_custom_call.1} parent=39 // pred_region
          %s403 = sand.u32 %s25, 1
          %s404 = scalar_lea.sflag [#allocation6], %s403
          %s405 = sand.u32 %s121, 1
          %s406 = smul.addr %s405, 32
          %s407 = scalar_lea.vmem [#allocation7], %s406
          %s408 = sadd.s32 %s33, 1
          %s409 = smul.u32 %s408, 8
          %p410 = scmp.lt.s32.totalorder %s409, 7
          %s411 = scalar_select %p410, %s409, 7
          %s412 = smul.u32 2, %s411
          %s414 = ssub.s32 512, 512
          %415 = vsyncadd %s404, %s414
          %s416 = smul.addr %s412, 2
          %s417 = smul.addr %s32, 32
          %s418 = sadd.s32 %s416, %s417
          %s419 = smul.addr %s418, 128
          %s420 = scalar_lea.hbm %s2, %s419
          %s421 = sshll.u32 %s407, 4
          %s422 = int_to_ptr.vmem [resolvable:$true] %s421
          %427 = dma.hbm_to_vmem [thread:$0]  %s420, 512, %s422, %s404, 128, 128, 8
        $region52: #{tpu_custom_call.1} parent=39 // pred_fallthru
          _
      $region40: #{tpu_custom_call.1} parent=5 // pred_fallthru
        _
      %p428 = scmp.le.s32.totalorder 1, %s25
      %p429 = scmp.lt.s32.totalorder %s25, 3
      %p430 = pnand %p428, %p429
      %p431 = pneg %p430
      // Predicated region
      $region53: #{tpu_custom_call.1} parent=5 // pred_check
        _
      $region54: #{tpu_custom_call.1} parent=5 // pred_check_branch
        %433 = sbr.rel (%p430) target = $region56
      $region55: #{tpu_custom_call.1} parent=5 // pred_region
        %s434 = ssub.s32 %s25, 1
        %s435 = sand.u32 %s60, 1
        %s436 = scalar_lea.sflag [#allocation3], %s435
        %s437 = sand.u32 %s60, 1
        %s438 = smul.addr %s437, 32
        %s439 = scalar_lea.vmem [#allocation2], %s438
        // Predicated region
        $region57: #{tpu_custom_call.1} parent=55 // pred_check
          %p440 = pneg %p73
        $region58: #{tpu_custom_call.1} parent=55 // pred_check_branch
          %442 = sbr.rel (%p440) target = $region60
        $region59: #{tpu_custom_call.1} parent=55 // pred_region
          %443 = dma.done %s436, 512
        $region60: #{tpu_custom_call.1} parent=55 // pred_fallthru
          _
        %s444 = sand.u32 %s30, 1
        %s445 = scalar_lea.sflag [#allocation6], %s444
        %s446 = sand.u32 %s88, 1
        %s447 = smul.addr %s446, 256
        %s448 = scalar_lea.vmem [#allocation5], %s447
        // Predicated region
        $region61: #{tpu_custom_call.1} parent=55 // pred_check
          %p449 = pneg %p101
        $region62: #{tpu_custom_call.1} parent=55 // pred_check_branch
          %451 = sbr.rel (%p449) target = $region64
        $region63: #{tpu_custom_call.1} parent=55 // pred_region
          %452 = dma.done %s445, 4096
        $region64: #{tpu_custom_call.1} parent=55 // pred_fallthru
          _
        %s453 = sand.u32 %s30, 1
        %s454 = scalar_lea.sflag [#allocation6], %s453
        %s455 = sand.u32 %s124, 1
        %s456 = smul.addr %s455, 32
        %s457 = scalar_lea.vmem [#allocation7], %s456
        // Predicated region
        $region65: #{tpu_custom_call.1} parent=55 // pred_check
          %p458 = pneg %p137
        $region66: #{tpu_custom_call.1} parent=55 // pred_check_branch
          %460 = sbr.rel (%p458) target = $region68
        $region67: #{tpu_custom_call.1} parent=55 // pred_region
          %461 = dma.done %s454, 512
        $region68: #{tpu_custom_call.1} parent=55 // pred_fallthru
          _
        // Predicated region
        $region69: #{tpu_custom_call.1} parent=55 // pred_check
          %p462 = pneg %p158
        $region70: #{tpu_custom_call.1} parent=55 // pred_check_branch
          %464 = sbr.rel (%p462) target = $region72
        $region71: #{tpu_custom_call.1} parent=55 // pred_region
          %465 = dma.done [#allocation9], 9216
        $region72: #{tpu_custom_call.1} parent=55 // pred_fallthru
          _
        // Predicated region
        $region73: #{tpu_custom_call.1} parent=55 // pred_check
          %p466 = pneg %p179
        $region74: #{tpu_custom_call.1} parent=55 // pred_check_branch
          %468 = sbr.rel (%p466) target = $region76
        $region75: #{tpu_custom_call.1} parent=55 // pred_region
          %469 = dma.done [#allocation9], 9216
        $region76: #{tpu_custom_call.1} parent=55 // pred_fallthru
          _
        %s470 = sand.u32 %s60, 1
        %s471 = scalar_lea.sflag [#allocation3], %s470
        %s472 = sand.u32 %s60, 1
        %s473 = smul.addr %s472, 32
        %s474 = scalar_lea.vmem [#allocation2], %s473
        %p475 = pneg %p73
        %p476 = pneg %p70
        %s477 = sand.u32 %s30, 1
        %s478 = scalar_lea.sflag [#allocation6], %s477
        %s479 = sand.u32 %s88, 1
        %s480 = smul.addr %s479, 256
        %s481 = scalar_lea.vmem [#allocation5], %s480
        %p482 = pneg %p101
        %p483 = pneg %p98
        %s484 = sand.u32 %s30, 1
        %s485 = scalar_lea.sflag [#allocation6], %s484
        %s486 = sand.u32 %s124, 1
        %s487 = smul.addr %s486, 32
        %s488 = scalar_lea.vmem [#allocation7], %s487
        %p489 = pneg %p137
        %p490 = pneg %p134
        %p491 = pneg %p158
        %p492 = pneg %p155
        %p493 = pneg %p179
        %p494 = pneg %p176
        %p495 = pneg %p200
        %p496 = pneg %p197
        %p497 = pneg %p221
        %p498 = pneg %p218
        %p499 = pneg %p242
        %p500 = pneg %p239
        %p501 = pneg %p263
        %p502 = pneg %p260
        %p503 = pneg %p291
        %p504 = pneg %p288
        %s505 = sand.u32 %s278, 1
        %s506 = scalar_lea.sflag [#allocation4], %s505
        %s507 = sand.u32 %s278, 1
        %s508 = smul.addr %s507, 256
        %s509 = scalar_lea.vmem [#allocation11], %s508
        %s510 = smul.u32 %s35, 8
        %s511 = ssub.s32 %s510, 1
        %p512 = scmp.gt.s32.totalorder %s511, 0
        %s513 = scalar_select %p512, %s511, 0
        %s514 = smul.u32 2, %s513
        %s515 = smul.u32 16, %s35
        %s516 = sadd.s32 %s35, 1
        %s517 = smul.u32 %s516, 8
        %p518 = scmp.lt.s32.totalorder %s517, 7
        %s519 = scalar_select %p518, %s517, 7
        %s520 = smul.u32 2, %s519
        %s521 = smul.u32 16, %s35
        %p523 = scmp.gt.s32.totalorder %s35, 0
        %v524 = vld [vmem:[%s439] sm:$0xff]
        %v525 = vld [vmem:[%s439 + $0x8] sm:$0xff]
        %v526 = vld [vmem:[%s439 + $0x10] sm:$0xff]
        %v527 = vld [vmem:[%s439 + $0x18] sm:$0xff]
        %v528 = vpack.c.bf16 %v525, %v524
        %v529 = vpack.c.bf16 %v527, %v526
        %s530 = scalar_select %p523, 1, 0
        %v531 = vstv %s530
        %vm532 = vcmp.eq.s32.totalorder %v531, 1
        %v533 = vsel %vm532, %v528, 0
        %v534 = vsel %vm532, %v529, 0
        %p535 = scmp.lt.s32.totalorder %s35, 0
        %v536 = vld [vmem:[%s457] sm:$0xff]
        %v537 = vld [vmem:[%s457 + $0x8] sm:$0xff]
        %v538 = vld [vmem:[%s457 + $0x10] sm:$0xff]
        %v539 = vld [vmem:[%s457 + $0x18] sm:$0xff]
        %v540 = vpack.c.bf16 %v537, %v536
        %v541 = vpack.c.bf16 %v539, %v538
        %s542 = scalar_select %p535, 1, 0
        %v543 = vstv %s542
        %vm544 = vcmp.eq.s32.totalorder %v543, 1
        %v545 = vsel %vm544, %v540, 0
        %v546 = vsel %vm544, %v541, 0
        %v547 = vld [vmem:[%s448] sm:$0xff]
        %v548 = vld [vmem:[%s448 + $0x8] sm:$0xff]
        %v549 = vld [vmem:[%s448 + $0x10] sm:$0xff]
        %v550 = vld [vmem:[%s448 + $0x18] sm:$0xff]
        %v551 = vld [vmem:[%s448 + $0x20] sm:$0xff]
        %v552 = vld [vmem:[%s448 + $0x28] sm:$0xff]
        %v553 = vld [vmem:[%s448 + $0x30] sm:$0xff]
        %v554 = vld [vmem:[%s448 + $0x38] sm:$0xff]
        %v555 = vld [vmem:[%s448 + $0x40] sm:$0xff]
        %v556 = vld [vmem:[%s448 + $0x48] sm:$0xff]
        %v557 = vld [vmem:[%s448 + $0x50] sm:$0xff]
        %v558 = vld [vmem:[%s448 + $0x58] sm:$0xff]
        %v559 = vld [vmem:[%s448 + $0x60] sm:$0xff]
        %v560 = vld [vmem:[%s448 + $0x68] sm:$0xff]
        %v561 = vld [vmem:[%s448 + $0x70] sm:$0xff]
        %v562 = vld [vmem:[%s448 + $0x78] sm:$0xff]
        %v563 = vld [vmem:[%s448 + $0x80] sm:$0xff]
        %v564 = vld [vmem:[%s448 + $0x88] sm:$0xff]
        %v565 = vld [vmem:[%s448 + $0x90] sm:$0xff]
        %v566 = vld [vmem:[%s448 + $0x98] sm:$0xff]
        %v567 = vld [vmem:[%s448 + $0xa0] sm:$0xff]
        %v568 = vld [vmem:[%s448 + $0xa8] sm:$0xff]
        %v569 = vld [vmem:[%s448 + $0xb0] sm:$0xff]
        %v570 = vld [vmem:[%s448 + $0xb8] sm:$0xff]
        %v571 = vld [vmem:[%s448 + $0xc0] sm:$0xff]
        %v572 = vld [vmem:[%s448 + $0xc8] sm:$0xff]
        %v573 = vld [vmem:[%s448 + $0xd0] sm:$0xff]
        %v574 = vld [vmem:[%s448 + $0xd8] sm:$0xff]
        %v575 = vld [vmem:[%s448 + $0xe0] sm:$0xff]
        %v576 = vld [vmem:[%s448 + $0xe8] sm:$0xff]
        %v577 = vld [vmem:[%s448 + $0xf0] sm:$0xff]
        %v578 = vld [vmem:[%s448 + $0xf8] sm:$0xff]
        %v579 = vpack.c.bf16 %v548, %v547
        %v580 = vpack.c.bf16 %v550, %v549
        %v581 = vpack.c.bf16 %v552, %v551
        %v582 = vpack.c.bf16 %v554, %v553
        %v583 = vpack.c.bf16 %v556, %v555
        %v584 = vpack.c.bf16 %v558, %v557
        %v585 = vpack.c.bf16 %v560, %v559
        %v586 = vpack.c.bf16 %v562, %v561
        %v587 = vpack.c.bf16 %v564, %v563
        %v588 = vpack.c.bf16 %v566, %v565
        %v589 = vpack.c.bf16 %v568, %v567
        %v590 = vpack.c.bf16 %v570, %v569
        %v591 = vpack.c.bf16 %v572, %v571
        %v592 = vpack.c.bf16 %v574, %v573
        %v593 = vpack.c.bf16 %v576, %v575
        %v594 = vpack.c.bf16 %v578, %v577
        %v596 = vshrl.u32 %v533, 16
        %v598 = vrot.slane %v596, 7
        %v599 = vshll.u32 %v533, 16
        %v601 = vor.u32 %v598, %v599
        %v603 = vshrl.u32 %v534, 16
        %v605 = vrot.slane %v603, 7
        %v606 = vshll.u32 %v534, 16
        %v608 = vor.u32 %v605, %v606
        %v610 = vshrl.u32 %v579, 16
        %v612 = vrot.slane %v610, 7
        %v613 = vshll.u32 %v579, 16
        %v615 = vor.u32 %v612, %v613
        %v617 = vshrl.u32 %v580, 16
        %v619 = vrot.slane %v617, 7
        %v620 = vshll.u32 %v580, 16
        %v622 = vor.u32 %v619, %v620
        %v624 = vshrl.u32 %v581, 16
        %v626 = vrot.slane %v624, 7
        %v627 = vshll.u32 %v581, 16
        %v629 = vor.u32 %v626, %v627
        %v631 = vshrl.u32 %v582, 16
        %v633 = vrot.slane %v631, 7
        %v634 = vshll.u32 %v582, 16
        %v636 = vor.u32 %v633, %v634
        %v638 = vshrl.u32 %v583, 16
        %v640 = vrot.slane %v638, 7
        %v641 = vshll.u32 %v583, 16
        %v643 = vor.u32 %v640, %v641
        %v645 = vshrl.u32 %v584, 16
        %v647 = vrot.slane %v645, 7
        %v648 = vshll.u32 %v584, 16
        %v650 = vor.u32 %v647, %v648
        %v652 = vshrl.u32 %v585, 16
        %v654 = vrot.slane %v652, 7
        %v655 = vshll.u32 %v585, 16
        %v657 = vor.u32 %v654, %v655
        %v659 = vshrl.u32 %v586, 16
        %v661 = vrot.slane %v659, 7
        %v662 = vshll.u32 %v586, 16
        %v664 = vor.u32 %v661, %v662
        %v666 = vshrl.u32 %v587, 16
        %v668 = vrot.slane %v666, 7
        %v669 = vshll.u32 %v587, 16
        %v671 = vor.u32 %v668, %v669
        %v673 = vshrl.u32 %v588, 16
        %v675 = vrot.slane %v673, 7
        %v676 = vshll.u32 %v588, 16
        %v678 = vor.u32 %v675, %v676
        %v680 = vshrl.u32 %v589, 16
        %v682 = vrot.slane %v680, 7
        %v683 = vshll.u32 %v589, 16
        %v685 = vor.u32 %v682, %v683
        %v687 = vshrl.u32 %v590, 16
        %v689 = vrot.slane %v687, 7
        %v690 = vshll.u32 %v590, 16
        %v692 = vor.u32 %v689, %v690
        %v694 = vshrl.u32 %v591, 16
        %v696 = vrot.slane %v694, 7
        %v697 = vshll.u32 %v591, 16
        %v699 = vor.u32 %v696, %v697
        %v701 = vshrl.u32 %v592, 16
        %v703 = vrot.slane %v701, 7
        %v704 = vshll.u32 %v592, 16
        %v706 = vor.u32 %v703, %v704
        %v708 = vshrl.u32 %v593, 16
        %v710 = vrot.slane %v708, 7
        %v711 = vshll.u32 %v593, 16
        %v713 = vor.u32 %v710, %v711
        %v715 = vshrl.u32 %v594, 16
        %v717 = vrot.slane %v715, 7
        %v718 = vshll.u32 %v594, 16
        %v720 = vor.u32 %v717, %v718
        %v722 = vshrl.u32 %v545, 16
        %v724 = vrot.slane %v722, 7
        %v725 = vshll.u32 %v545, 16
        %v727 = vor.u32 %v724, %v725
        %v729 = vshrl.u32 %v546, 16
        %v731 = vrot.slane %v729, 7
        %v732 = vshll.u32 %v546, 16
        %v734 = vor.u32 %v731, %v732
        %vm755 = vcmask 1040384
        %vm756 = vsmask.f32 256
        %vm757 = vmand %vm755, %vm756
        %v758 = vsel %vm757, 0, %v601
        %v759 = vsel %vm757, 0, %v608
        %v760 = vsel %vm757, 0, %v615
        %v761 = vsel %vm757, 0, %v622
        %v762 = vsel %vm757, 0, %v629
        %v763 = vsel %vm757, 0, %v636
        %v764 = vsel %vm757, 0, %v643
        %v765 = vsel %vm757, 0, %v650
        %v766 = vsel %vm757, 0, %v657
        %v767 = vsel %vm757, 0, %v664
        %v768 = vsel %vm757, 0, %v671
        %v769 = vsel %vm757, 0, %v678
        %v770 = vsel %vm757, 0, %v685
        %v771 = vsel %vm757, 0, %v692
        %v772 = vsel %vm757, 0, %v699
        %v773 = vsel %vm757, 0, %v706
        %v774 = vsel %vm757, 0, %v713
        %v775 = vsel %vm757, 0, %v720
        %v776 = vsel %vm757, 0, %v727
        %v777 = vsel %vm757, 0, %v734
        %v778 = vrot.slane %v599, 1
        %v779 = vor.u32 %v596, %v778
        %v780 = vrot.slane %v606, 1
        %v781 = vor.u32 %v603, %v780
        %v782 = vrot.slane %v613, 1
        %v783 = vor.u32 %v610, %v782
        %v784 = vrot.slane %v620, 1
        %v785 = vor.u32 %v617, %v784
        %v786 = vrot.slane %v627, 1
        %v787 = vor.u32 %v624, %v786
        %v788 = vrot.slane %v634, 1
        %v789 = vor.u32 %v631, %v788
        %v790 = vrot.slane %v641, 1
        %v791 = vor.u32 %v638, %v790
        %v792 = vrot.slane %v648, 1
        %v793 = vor.u32 %v645, %v792
        %v794 = vrot.slane %v655, 1
        %v795 = vor.u32 %v652, %v794
        %v796 = vrot.slane %v662, 1
        %v797 = vor.u32 %v659, %v796
        %v798 = vrot.slane %v669, 1
        %v799 = vor.u32 %v666, %v798
        %v800 = vrot.slane %v676, 1
        %v801 = vor.u32 %v673, %v800
        %v802 = vrot.slane %v683, 1
        %v803 = vor.u32 %v680, %v802
        %v804 = vrot.slane %v690, 1
        %v805 = vor.u32 %v687, %v804
        %v806 = vrot.slane %v697, 1
        %v807 = vor.u32 %v694, %v806
        %v808 = vrot.slane %v704, 1
        %v809 = vor.u32 %v701, %v808
        %v810 = vrot.slane %v711, 1
        %v811 = vor.u32 %v708, %v810
        %v812 = vrot.slane %v718, 1
        %v813 = vor.u32 %v715, %v812
        %v814 = vrot.slane %v725, 1
        %v815 = vor.u32 %v722, %v814
        %v816 = vrot.slane %v732, 1
        %v817 = vor.u32 %v729, %v816
        %vm838 = vcmask 1047552
        %vm839 = vsmask.f32 7424
        %vm840 = vmand %vm838, %vm839
        %v841 = vsel %vm840, %v779, 0
        %v842 = vsel %vm840, %v781, 0
        %v843 = vsel %vm840, %v783, 0
        %v844 = vsel %vm840, %v785, 0
        %v845 = vsel %vm840, %v787, 0
        %v846 = vsel %vm840, %v789, 0
        %v847 = vsel %vm840, %v791, 0
        %v848 = vsel %vm840, %v793, 0
        %v849 = vsel %vm840, %v795, 0
        %v850 = vsel %vm840, %v797, 0
        %v851 = vsel %vm840, %v799, 0
        %v852 = vsel %vm840, %v801, 0
        %v853 = vsel %vm840, %v803, 0
        %v854 = vsel %vm840, %v805, 0
        %v855 = vsel %vm840, %v807, 0
        %v856 = vsel %vm840, %v809, 0
        %v857 = vsel %vm840, %v811, 0
        %v858 = vsel %vm840, %v813, 0
        %v859 = vsel %vm840, %v815, 0
        %v860 = vsel %vm840, %v817, 0
        %v861 = vld [vmem:[#allocation8] sm:$0xf]
        %v862 = vld [vmem:[#allocation8 + $0x4] sm:$0xf]
        %v863 = vld [vmem:[#allocation8 + $0x8] sm:$0xf]
        %v864 = vld [vmem:[#allocation8 + $0xc] sm:$0xf]
        %v865 = vld [vmem:[#allocation8 + $0x10] sm:$0xf]
        %v866 = vld [vmem:[#allocation8 + $0x14] sm:$0xf]
        %v867 = vld [vmem:[#allocation8 + $0x18] sm:$0xf]
        %v868 = vld [vmem:[#allocation8 + $0x1c] sm:$0xf]
        %v869 = vld [vmem:[#allocation8 + $0x20] sm:$0xf]
        %v870 = vld [vmem:[#allocation8 + $0x24] sm:$0xf]
        %v871 = vld [vmem:[#allocation8 + $0x28] sm:$0xf]
        %v872 = vld [vmem:[#allocation8 + $0x2c] sm:$0xf]
        %v873 = vld [vmem:[#allocation8 + $0x30] sm:$0xf]
        %v874 = vld [vmem:[#allocation8 + $0x34] sm:$0xf]
        %v875 = vld [vmem:[#allocation8 + $0x38] sm:$0xf]
        %v876 = vld [vmem:[#allocation8 + $0x3c] sm:$0xf]
        %v877 = vld [vmem:[#allocation8 + $0x40] sm:$0xf]
        %v878 = vld [vmem:[#allocation8 + $0x44] sm:$0xf]
        %v879 = vld [vmem:[#allocation8 + $0x48] sm:$0xf]
        %v880 = vld [vmem:[#allocation8 + $0x4c] sm:$0xf]
        %v881 = vld [vmem:[#allocation8 + $0x50] sm:$0xf]
        %v882 = vld [vmem:[#allocation8 + $0x54] sm:$0xf]
        %v883 = vld [vmem:[#allocation8 + $0x58] sm:$0xf]
        %v884 = vld [vmem:[#allocation8 + $0x5c] sm:$0xf]
        %v885 = vld [vmem:[#allocation8 + $0x60] sm:$0xf]
        %v886 = vld [vmem:[#allocation8 + $0x64] sm:$0xf]
        %v887 = vld [vmem:[#allocation8 + $0x68] sm:$0xf]
        %v888 = vld [vmem:[#allocation8 + $0x6c] sm:$0xf]
        %v889 = vld [vmem:[#allocation8 + $0x70] sm:$0xf]
        %v890 = vld [vmem:[#allocation8 + $0x74] sm:$0xf]
        %v891 = vld [vmem:[#allocation8 + $0x78] sm:$0xf]
        %v892 = vld [vmem:[#allocation8 + $0x7c] sm:$0xf]
        %v893 = vld [vmem:[#allocation8 + $0x80] sm:$0xf]
        %v894 = vld [vmem:[#allocation8 + $0x84] sm:$0xf]
        %v895 = vld [vmem:[#allocation8 + $0x88] sm:$0xf]
        %v896 = vld [vmem:[#allocation8 + $0x8c] sm:$0xf]
        %v897 = vld [vmem:[#allocation8 + $0x90] sm:$0xf]
        %v898 = vld [vmem:[#allocation8 + $0x94] sm:$0xf]
        %v899 = vld [vmem:[#allocation8 + $0x98] sm:$0xf]
        %v900 = vld [vmem:[#allocation8 + $0x9c] sm:$0xf]
        %v901 = vld [vmem:[#allocation8 + $0xa0] sm:$0xf]
        %v902 = vld [vmem:[#allocation8 + $0xa4] sm:$0xf]
        %v903 = vld [vmem:[#allocation8 + $0xa8] sm:$0xf]
        %v904 = vld [vmem:[#allocation8 + $0xac] sm:$0xf]
        %v905 = vld [vmem:[#allocation8 + $0xb0] sm:$0xf]
        %v906 = vld [vmem:[#allocation8 + $0xb4] sm:$0xf]
        %v907 = vld [vmem:[#allocation8 + $0xb8] sm:$0xf]
        %v908 = vld [vmem:[#allocation8 + $0xbc] sm:$0xf]
        %s909 = scalar_lea.vmem [#allocation8], 192
        %v910 = vld [vmem:[%s909] sm:$0xf]
        %v911 = vld [vmem:[%s909 + $0x4] sm:$0xf]
        %v912 = vld [vmem:[%s909 + $0x8] sm:$0xf]
        %v913 = vld [vmem:[%s909 + $0xc] sm:$0xf]
        %v914 = vld [vmem:[%s909 + $0x10] sm:$0xf]
        %v915 = vld [vmem:[%s909 + $0x14] sm:$0xf]
        %v916 = vld [vmem:[%s909 + $0x18] sm:$0xf]
        %v917 = vld [vmem:[%s909 + $0x1c] sm:$0xf]
        %v918 = vld [vmem:[%s909 + $0x20] sm:$0xf]
        %v919 = vld [vmem:[%s909 + $0x24] sm:$0xf]
        %v920 = vld [vmem:[%s909 + $0x28] sm:$0xf]
        %v921 = vld [vmem:[%s909 + $0x2c] sm:$0xf]
        %v922 = vld [vmem:[%s909 + $0x30] sm:$0xf]
        %v923 = vld [vmem:[%s909 + $0x34] sm:$0xf]
        %v924 = vld [vmem:[%s909 + $0x38] sm:$0xf]
        %v925 = vld [vmem:[%s909 + $0x3c] sm:$0xf]
        %v926 = vld [vmem:[%s909 + $0x40] sm:$0xf]
        %v927 = vld [vmem:[%s909 + $0x44] sm:$0xf]
        %v928 = vld [vmem:[%s909 + $0x48] sm:$0xf]
        %v929 = vld [vmem:[%s909 + $0x4c] sm:$0xf]
        %v930 = vld [vmem:[%s909 + $0x50] sm:$0xf]
        %v931 = vld [vmem:[%s909 + $0x54] sm:$0xf]
        %v932 = vld [vmem:[%s909 + $0x58] sm:$0xf]
        %v933 = vld [vmem:[%s909 + $0x5c] sm:$0xf]
        %v934 = vld [vmem:[%s909 + $0x60] sm:$0xf]
        %v935 = vld [vmem:[%s909 + $0x64] sm:$0xf]
        %v936 = vld [vmem:[%s909 + $0x68] sm:$0xf]
        %v937 = vld [vmem:[%s909 + $0x6c] sm:$0xf]
        %v938 = vld [vmem:[%s909 + $0x70] sm:$0xf]
        %v939 = vld [vmem:[%s909 + $0x74] sm:$0xf]
        %v940 = vld [vmem:[%s909 + $0x78] sm:$0xf]
        %v941 = vld [vmem:[%s909 + $0x7c] sm:$0xf]
        %v942 = vld [vmem:[%s909 + $0x80] sm:$0xf]
        %v943 = vld [vmem:[%s909 + $0x84] sm:$0xf]
        %v944 = vld [vmem:[%s909 + $0x88] sm:$0xf]
        %v945 = vld [vmem:[%s909 + $0x8c] sm:$0xf]
        %v946 = vld [vmem:[%s909 + $0x90] sm:$0xf]
        %v947 = vld [vmem:[%s909 + $0x94] sm:$0xf]
        %v948 = vld [vmem:[%s909 + $0x98] sm:$0xf]
        %v949 = vld [vmem:[%s909 + $0x9c] sm:$0xf]
        %v950 = vld [vmem:[%s909 + $0xa0] sm:$0xf]
        %v951 = vld [vmem:[%s909 + $0xa4] sm:$0xf]
        %v952 = vld [vmem:[%s909 + $0xa8] sm:$0xf]
        %v953 = vld [vmem:[%s909 + $0xac] sm:$0xf]
        %v954 = vld [vmem:[%s909 + $0xb0] sm:$0xf]
        %v955 = vld [vmem:[%s909 + $0xb4] sm:$0xf]
        %v956 = vld [vmem:[%s909 + $0xb8] sm:$0xf]
        %v957 = vld [vmem:[%s909 + $0xbc] sm:$0xf]
        %v1006 = vunpack.c.l.b16 %v910
        %v1007 = vunpack.c.l.b16 %v911
        %v1008 = vunpack.c.l.b16 %v912
        %v1009 = vunpack.c.l.b16 %v913
        %v1010 = vunpack.c.l.b16 %v914
        %v1011 = vunpack.c.l.b16 %v915
        %v1012 = vunpack.c.l.b16 %v916
        %v1013 = vunpack.c.l.b16 %v917
        %v1014 = vunpack.c.l.b16 %v918
        %v1015 = vunpack.c.l.b16 %v919
        %v1016 = vunpack.c.l.b16 %v920
        %v1017 = vunpack.c.l.b16 %v921
        %v1018 = vunpack.c.l.b16 %v922
        %v1019 = vunpack.c.l.b16 %v923
        %v1020 = vunpack.c.l.b16 %v924
        %v1021 = vunpack.c.l.b16 %v925
        %v1022 = vunpack.c.l.b16 %v926
        %v1023 = vunpack.c.l.b16 %v927
        %v1024 = vunpack.c.l.b16 %v928
        %v1025 = vunpack.c.l.b16 %v929
        %v1026 = vunpack.c.l.b16 %v930
        %v1027 = vunpack.c.l.b16 %v931
        %v1028 = vunpack.c.l.b16 %v932
        %v1029 = vunpack.c.l.b16 %v933
        %v1030 = vunpack.c.l.b16 %v934
        %v1031 = vunpack.c.l.b16 %v935
        %v1032 = vunpack.c.l.b16 %v936
        %v1033 = vunpack.c.l.b16 %v937
        %v1034 = vunpack.c.l.b16 %v938
        %v1035 = vunpack.c.l.b16 %v939
        %v1036 = vunpack.c.l.b16 %v940
        %v1037 = vunpack.c.l.b16 %v941
        %v1038 = vunpack.c.l.b16 %v942
        %v1039 = vunpack.c.l.b16 %v943
        %v1040 = vunpack.c.l.b16 %v944
        %v1041 = vunpack.c.l.b16 %v945
        %v1042 = vunpack.c.l.b16 %v946
        %v1043 = vunpack.c.l.b16 %v947
        %v1044 = vunpack.c.l.b16 %v948
        %v1045 = vunpack.c.l.b16 %v949
        %v1046 = vunpack.c.l.b16 %v950
        %v1047 = vunpack.c.l.b16 %v951
        %v1048 = vunpack.c.l.b16 %v952
        %v1049 = vunpack.c.l.b16 %v953
        %v1050 = vunpack.c.l.b16 %v954
        %v1051 = vunpack.c.l.b16 %v955
        %v1052 = vunpack.c.l.b16 %v956
        %v1053 = vunpack.c.l.b16 %v957
        %v1054 = vpack.c.b16 %v1007, %v1006
        %v1055 = vpack.c.b16 %v1009, %v1008
        %v1056 = vpack.c.b16 %v1011, %v1010
        %v1057 = vpack.c.b16 %v1013, %v1012
        %v1058 = vpack.c.b16 %v1015, %v1014
        %v1059 = vpack.c.b16 %v1017, %v1016
        %v1060 = vpack.c.b16 %v1019, %v1018
        %v1061 = vpack.c.b16 %v1021, %v1020
        %v1062 = vpack.c.b16 %v1023, %v1022
        %v1063 = vpack.c.b16 %v1025, %v1024
        %v1064 = vpack.c.b16 %v1027, %v1026
        %v1065 = vpack.c.b16 %v1029, %v1028
        %v1066 = vpack.c.b16 %v1031, %v1030
        %v1067 = vpack.c.b16 %v1033, %v1032
        %v1068 = vpack.c.b16 %v1035, %v1034
        %v1069 = vpack.c.b16 %v1037, %v1036
        %v1070 = vpack.c.b16 %v1039, %v1038
        %v1071 = vpack.c.b16 %v1041, %v1040
        %v1072 = vpack.c.b16 %v1043, %v1042
        %v1073 = vpack.c.b16 %v1045, %v1044
        %v1074 = vpack.c.b16 %v1047, %v1046
        %v1075 = vpack.c.b16 %v1049, %v1048
        %v1076 = vpack.c.b16 %v1051, %v1050
        %v1077 = vpack.c.b16 %v1053, %v1052
        %1102 = vmatprep.subr.bf16.mxu0 0
        %1103 = vmatpush1.bf16.msra.mxu0 %v1054
        %1104 = vmatprep.subr.bf16.mxu0 0
        %1105 = vmatpush1.bf16.msra.mxu0 %v1055
        %1106 = vmatprep.subr.bf16.mxu0 0
        %1107 = vmatpush1.bf16.msra.mxu0 %v1056
        %1108 = vmatprep.subr.bf16.mxu0 0
        %1109 = vmatpush1.bf16.msra.mxu0 %v1057
        %1110 = vmatprep.subr.bf16.mxu0 0
        %1111 = vmatpush1.bf16.msra.mxu0 %v1058
        %1112 = vmatprep.subr.bf16.mxu0 0
        %1113 = vmatpush1.bf16.msra.mxu0 %v1059
        %1114 = vmatprep.subr.bf16.mxu0 0
        %1115 = vmatpush1.bf16.msra.mxu0 %v1060
        %1116 = vmatprep.subr.bf16.mxu0 0
        %1117 = vmatpush1.bf16.msra.mxu0 %v1061
        %1118 = vmatprep.subr.bf16.mxu0 0
        %1119 = vmatpush1.bf16.msra.mxu0 %v1062
        %1120 = vmatprep.subr.bf16.mxu0 0
        %1121 = vmatpush1.bf16.msra.mxu0 %v1063
        %1122 = vmatprep.subr.bf16.mxu0 0
        %1123 = vmatpush1.bf16.msra.mxu0 %v1064
        %1124 = vmatprep.subr.bf16.mxu0 0
        %1125 = vmatpush1.bf16.msra.mxu0 %v1065
        %1126 = vmatprep.subr.bf16.mxu0 0
        %1127 = vmatpush1.bf16.msra.mxu0 %v1066
        %1128 = vmatprep.subr.bf16.mxu0 0
        %1129 = vmatpush1.bf16.msra.mxu0 %v1067
        %1130 = vmatprep.subr.bf16.mxu0 0
        %1131 = vmatpush1.bf16.msra.mxu0 %v1068
        %1132 = vmatprep.subr.bf16.mxu0 0
        %1133 = vmatpush1.bf16.msra.mxu0 %v1069
        %1134 = vmatprep.mubr.bf16.mxu0 %v534
        %1135 = vmatmul.mubr.bf16.gmra.mrb[0].mxu0 %v759
        %v1136 = vpop.f32.mrb[0].mxu0
        %v1137 = vadd.f32 0.0, %v1136
        %v1138 = vpop.f32.mrb[0].mxu0
        %v1139 = vpop.f32.mrb[0].mxu0
        %v1140 = vadd.f32 0.0, %v1139
        %v1141 = vpop.f32.mrb[0].mxu0
        %1142 = vmatprep.mubr.bf16.mxu0 %v579
        %1143 = vmatmul.mubr.bf16.gmra.mrb[0].mxu0 %v760
        %v1144 = vpop.f32.mrb[0].mxu0
        %v1145 = vadd.f32 0.0, %v1144
        %v1146 = vpop.f32.mrb[0].mxu0
        %v1147 = vpop.f32.mrb[0].mxu0
        %v1148 = vadd.f32 0.0, %v1147
        %v1149 = vpop.f32.mrb[0].mxu0
        %1150 = vmatprep.mubr.bf16.mxu0 %v580
        %1151 = vmatmul.mubr.bf16.gmra.mrb[0].mxu0 %v761
        %v1152 = vpop.f32.mrb[0].mxu0
        %v1153 = vadd.f32 0.0, %v1152
        %v1154 = vpop.f32.mrb[0].mxu0
        %v1155 = vpop.f32.mrb[0].mxu0
        %v1156 = vadd.f32 0.0, %v1155
        %v1157 = vpop.f32.mrb[0].mxu0
        %1158 = vmatprep.mubr.bf16.mxu0 %v581
        %1159 = vmatmul.mubr.bf16.gmra.mrb[0].mxu0 %v762
        %v1160 = vpop.f32.mrb[0].mxu0
        %v1161 = vadd.f32 0.0, %v1160
        %v1162 = vpop.f32.mrb[0].mxu0
        %v1163 = vpop.f32.mrb[0].mxu0
        %v1164 = vadd.f32 0.0, %v1163
        %v1165 = vpop.f32.mrb[0].mxu0
        %1166 = vmatprep.mubr.bf16.mxu0 %v582
        %1167 = vmatmul.mubr.bf16.gmra.mrb[0].mxu0 %v763
        %v1168 = vpop.f32.mrb[0].mxu0
        %v1169 = vadd.f32 0.0, %v1168
        %v1170 = vpop.f32.mrb[0].mxu0
        %v1171 = vpop.f32.mrb[0].mxu0
        %v1172 = vadd.f32 0.0, %v1171
        %v1173 = vpop.f32.mrb[0].mxu0
        %1174 = vmatprep.mubr.bf16.mxu0 %v583
        %1175 = vmatmul.mubr.bf16.gmra.mrb[0].mxu0 %v764
        %v1176 = vpop.f32.mrb[0].mxu0
        %v1177 = vadd.f32 0.0, %v1176
        %v1178 = vpop.f32.mrb[0].mxu0
        %v1179 = vpop.f32.mrb[0].mxu0
        %v1180 = vadd.f32 0.0, %v1179
        %v1181 = vpop.f32.mrb[0].mxu0
        %1182 = vmatprep.mubr.bf16.mxu0 %v584
        %1183 = vmatmul.mubr.bf16.gmra.mrb[0].mxu0 %v765
        %v1184 = vpop.f32.mrb[0].mxu0
        %v1185 = vadd.f32 0.0, %v1184
        %v1186 = vpop.f32.mrb[0].mxu0
        %v1187 = vpop.f32.mrb[0].mxu0
        %v1188 = vadd.f32 0.0, %v1187
        %v1189 = vpop.f32.mrb[0].mxu0
        %1190 = vmatprep.mubr.bf16.mxu0 %v585
        %1191 = vmatmul.mubr.bf16.gmra.mrb[0].mxu0 %v766
        %v1192 = vpop.f32.mrb[0].mxu0
        %v1193 = vadd.f32 0.0, %v1192
        %v1194 = vpop.f32.mrb[0].mxu0
        %v1195 = vpop.f32.mrb[0].mxu0
        %v1196 = vadd.f32 0.0, %v1195
        %v1197 = vpop.f32.mrb[0].mxu0
        %1198 = vmatprep.mubr.bf16.mxu0 %v586
        %1199 = vmatmul.mubr.bf16.gmra.mrb[0].mxu0 %v767
        %v1200 = vpop.f32.mrb[0].mxu0
        %v1201 = vadd.f32 0.0, %v1200
        %v1202 = vpop.f32.mrb[0].mxu0
        %v1203 = vpop.f32.mrb[0].mxu0
        %v1204 = vadd.f32 0.0, %v1203
        %v1205 = vpop.f32.mrb[0].mxu0
        %1206 = vmatprep.mubr.bf16.mxu0 %v587
        %1207 = vmatmul.mubr.bf16.gmra.mrb[0].mxu0 %v768
        %v1208 = vpop.f32.mrb[0].mxu0
        %v1209 = vadd.f32 0.0, %v1208
        %v1210 = vpop.f32.mrb[0].mxu0
        %v1211 = vpop.f32.mrb[0].mxu0
        %v1212 = vadd.f32 0.0, %v1211
        %v1213 = vpop.f32.mrb[0].mxu0
        %1214 = vmatprep.mubr.bf16.mxu0 %v588
        %1215 = vmatmul.mubr.bf16.gmra.mrb[0].mxu0 %v769
        %v1216 = vpop.f32.mrb[0].mxu0
        %v1217 = vadd.f32 0.0, %v1216
        %v1218 = vpop.f32.mrb[0].mxu0
        %v1219 = vpop.f32.mrb[0].mxu0
        %v1220 = vadd.f32 0.0, %v1219
        %v1221 = vpop.f32.mrb[0].mxu0
        %1222 = vmatprep.mubr.bf16.mxu0 %v589
        %1223 = vmatmul.mubr.bf16.gmra.mrb[0].mxu0 %v770
        %v1224 = vpop.f32.mrb[0].mxu0
        %v1225 = vadd.f32 0.0, %v1224
        %v1226 = vpop.f32.mrb[0].mxu0
        %v1227 = vpop.f32.mrb[0].mxu0
        %v1228 = vadd.f32 0.0, %v1227
        %v1229 = vpop.f32.mrb[0].mxu0
        %1230 = vmatprep.mubr.bf16.mxu0 %v590
        %1231 = vmatmul.mubr.bf16.gmra.mrb[0].mxu0 %v771
        %v1232 = vpop.f32.mrb[0].mxu0
        %v1233 = vadd.f32 0.0, %v1232
        %v1234 = vpop.f32.mrb[0].mxu0
        %v1235 = vpop.f32.mrb[0].mxu0
        %v1236 = vadd.f32 0.0, %v1235
        %v1237 = vpop.f32.mrb[0].mxu0
        %1238 = vmatprep.mubr.bf16.mxu0 %v591
        %1239 = vmatmul.mubr.bf16.gmra.mrb[0].mxu0 %v772
        %v1240 = vpop.f32.mrb[0].mxu0
        %v1241 = vadd.f32 0.0, %v1240
        %v1242 = vpop.f32.mrb[0].mxu0
        %v1243 = vpop.f32.mrb[0].mxu0
        %v1244 = vadd.f32 0.0, %v1243
        %v1245 = vpop.f32.mrb[0].mxu0
        %1246 = vmatprep.mubr.bf16.mxu0 %v592
        %1247 = vmatmul.mubr.bf16.gmra.mrb[0].mxu0 %v773
        %v1248 = vpop.f32.mrb[0].mxu0
        %v1249 = vadd.f32 0.0, %v1248
        %v1250 = vpop.f32.mrb[0].mxu0
        %v1251 = vpop.f32.mrb[0].mxu0
        %v1252 = vadd.f32 0.0, %v1251
        %v1253 = vpop.f32.mrb[0].mxu0
        %1254 = vmatprep.mubr.bf16.mxu0 %v593
        %1255 = vmatmul.mubr.bf16.gmra.mrb[0].mxu0 %v774
        %v1256 = vpop.f32.mrb[0].mxu0
        %v1257 = vadd.f32 0.0, %v1256
        %v1258 = vpop.f32.mrb[0].mxu0
        %v1259 = vpop.f32.mrb[0].mxu0
        %v1260 = vadd.f32 0.0, %v1259
        %v1261 = vpop.f32.mrb[0].mxu0
        %1262 = vmatprep.mubr.bf16.mxu0 %v594
        %1263 = vmatmul.mubr.bf16.gmra.mrb[0].mxu0 %v775
        %v1264 = vpop.f32.mrb[0].mxu0
        %v1265 = vadd.f32 0.0, %v1264
        %v1266 = vpop.f32.mrb[0].mxu0
        %v1267 = vpop.f32.mrb[0].mxu0
        %v1268 = vadd.f32 0.0, %v1267
        %v1269 = vpop.f32.mrb[0].mxu0
        %1270 = vmatprep.mubr.bf16.mxu0 %v545
        %1271 = vmatmul.mubr.bf16.gmra.mrb[0].mxu0 %v776
        %v1272 = vpop.f32.mrb[0].mxu0
        %v1273 = vadd.f32 0.0, %v1272
        %v1274 = vpop.f32.mrb[0].mxu0
        %v1275 = vpop.f32.mrb[0].mxu0
        %v1276 = vadd.f32 0.0, %v1275
        %v1277 = vpop.f32.mrb[0].mxu0
        %1278 = vdwg.mxu0
        %1279 = vmatprep.subr.bf16.mxu0 0
        %1280 = vmatpush1.bf16.msra.mxu0 %v1070
        %1281 = vmatprep.subr.bf16.mxu0 0
        %1282 = vmatpush1.bf16.msra.mxu0 %v1071
        %1283 = vmatprep.subr.bf16.mxu0 0
        %1284 = vmatpush1.bf16.msra.mxu0 %v1072
        %1285 = vmatprep.subr.bf16.mxu0 0
        %1286 = vmatpush1.bf16.msra.mxu0 %v1073
        %1287 = vmatprep.subr.bf16.mxu0 0
        %1288 = vmatpush1.bf16.msra.mxu0 %v1074
        %1289 = vmatprep.subr.bf16.mxu0 0
        %1290 = vmatpush1.bf16.msra.mxu0 %v1075
        %1291 = vmatprep.subr.bf16.mxu0 0
        %1292 = vmatpush1.bf16.msra.mxu0 %v1076
        %1293 = vmatprep.subr.bf16.mxu0 0
        %1294 = vmatpush1.bf16.msra.mxu0 %v1077
        %1295 = vmatprep.subr.bf16.mxu0 0
        %1296 = vmatpush1.bf16.msra.mxu0 0
        %1297 = vmatprep.subr.bf16.mxu0 0
        %1298 = vmatpush1.bf16.msra.mxu0 0
        %1299 = vmatprep.subr.bf16.mxu0 0
        %1300 = vmatpush1.bf16.msra.mxu0 0
        %1301 = vmatprep.subr.bf16.mxu0 0
        %1302 = vmatpush1.bf16.msra.mxu0 0
        %1303 = vmatprep.subr.bf16.mxu0 0
        %1304 = vmatpush1.bf16.msra.mxu0 0
        %1305 = vmatprep.subr.bf16.mxu0 0
        %1306 = vmatpush1.bf16.msra.mxu0 0
        %1307 = vmatprep.subr.bf16.mxu0 0
        %1308 = vmatpush1.bf16.msra.mxu0 0
        %1309 = vmatprep.subr.bf16.mxu0 0
        %1310 = vmatpush1.bf16.msra.mxu0 0
        %1311 = vmatprep.mubr.bf16.mxu0 0
        %1312 = vmatmul.mubr.bf16.gmra.mrb[0].mxu0 %v842
        %v1313 = vpop.f32.mrb[0].mxu0
        %v1314 = vadd.f32 %v1137, %v1313
        %v1315 = vpop.f32.mrb[0].mxu0
        %v1316 = vpop.f32.mrb[0].mxu0
        %v1317 = vadd.f32 %v1140, %v1316
        %v1318 = vpop.f32.mrb[0].mxu0
        %1319 = vmatprep.mubr.bf16.mxu0 0
        %1320 = vmatmul.mubr.bf16.gmra.mrb[0].mxu0 %v843
        %v1321 = vpop.f32.mrb[0].mxu0
        %v1322 = vadd.f32 %v1145, %v1321
        %v1323 = vpop.f32.mrb[0].mxu0
        %v1324 = vpop.f32.mrb[0].mxu0
        %v1325 = vadd.f32 %v1148, %v1324
        %v1326 = vpop.f32.mrb[0].mxu0
        %1327 = vmatprep.mubr.bf16.mxu0 0
        %1328 = vmatmul.mubr.bf16.gmra.mrb[0].mxu0 %v844
        %v1329 = vpop.f32.mrb[0].mxu0
        %v1330 = vadd.f32 %v1153, %v1329
        %v1331 = vpop.f32.mrb[0].mxu0
        %v1332 = vpop.f32.mrb[0].mxu0
        %v1333 = vadd.f32 %v1156, %v1332
        %v1334 = vpop.f32.mrb[0].mxu0
        %1335 = vmatprep.mubr.bf16.mxu0 0
        %1336 = vmatmul.mubr.bf16.gmra.mrb[0].mxu0 %v845
        %v1337 = vpop.f32.mrb[0].mxu0
        %v1338 = vadd.f32 %v1161, %v1337
        %v1339 = vpop.f32.mrb[0].mxu0
        %v1340 = vpop.f32.mrb[0].mxu0
        %v1341 = vadd.f32 %v1164, %v1340
        %v1342 = vpop.f32.mrb[0].mxu0
        %1343 = vmatprep.mubr.bf16.mxu0 0
        %1344 = vmatmul.mubr.bf16.gmra.mrb[0].mxu0 %v846
        %v1345 = vpop.f32.mrb[0].mxu0
        %v1346 = vadd.f32 %v1169, %v1345
        %v1347 = vpop.f32.mrb[0].mxu0
        %v1348 = vpop.f32.mrb[0].mxu0
        %v1349 = vadd.f32 %v1172, %v1348
        %v1350 = vpop.f32.mrb[0].mxu0
        %1351 = vmatprep.mubr.bf16.mxu0 0
        %1352 = vmatmul.mubr.bf16.gmra.mrb[0].mxu0 %v847
        %v1353 = vpop.f32.mrb[0].mxu0
        %v1354 = vadd.f32 %v1177, %v1353
        %v1355 = vpop.f32.mrb[0].mxu0
        %v1356 = vpop.f32.mrb[0].mxu0
        %v1357 = vadd.f32 %v1180, %v1356
        %v1358 = vpop.f32.mrb[0].mxu0
        %1359 = vmatprep.mubr.bf16.mxu0 0
        %1360 = vmatmul.mubr.bf16.gmra.mrb[0].mxu0 %v848
        %v1361 = vpop.f32.mrb[0].mxu0
        %v1362 = vadd.f32 %v1185, %v1361
        %v1363 = vpop.f32.mrb[0].mxu0
        %v1364 = vpop.f32.mrb[0].mxu0
        %v1365 = vadd.f32 %v1188, %v1364
        %v1366 = vpop.f32.mrb[0].mxu0
        %1367 = vmatprep.mubr.bf16.mxu0 0
        %1368 = vmatmul.mubr.bf16.gmra.mrb[0].mxu0 %v849
        %v1369 = vpop.f32.mrb[0].mxu0
        %v1370 = vadd.f32 %v1193, %v1369
        %v1371 = vpop.f32.mrb[0].mxu0
        %v1372 = vpop.f32.mrb[0].mxu0
        %v1373 = vadd.f32 %v1196, %v1372
        %v1374 = vpop.f32.mrb[0].mxu0
        %1375 = vmatprep.mubr.bf16.mxu0 0
        %1376 = vmatmul.mubr.bf16.gmra.mrb[0].mxu0 %v850
        %v1377 = vpop.f32.mrb[0].mxu0
        %v1378 = vadd.f32 %v1201, %v1377
        %v1379 = vpop.f32.mrb[0].mxu0
        %v1380 = vpop.f32.mrb[0].mxu0
        %v1381 = vadd.f32 %v1204, %v1380
        %v1382 = vpop.f32.mrb[0].mxu0
        %1383 = vmatprep.mubr.bf16.mxu0 0
        %1384 = vmatmul.mubr.bf16.gmra.mrb[0].mxu0 %v851
        %v1385 = vpop.f32.mrb[0].mxu0
        %v1386 = vadd.f32 %v1209, %v1385
        %v1387 = vpop.f32.mrb[0].mxu0
        %v1388 = vpop.f32.mrb[0].mxu0
        %v1389 = vadd.f32 %v1212, %v1388
        %v1390 = vpop.f32.mrb[0].mxu0
        %1391 = vmatprep.mubr.bf16.mxu0 0
        %1392 = vmatmul.mubr.bf16.gmra.mrb[0].mxu0 %v852
        %v1393 = vpop.f32.mrb[0].mxu0
        %v1394 = vadd.f32 %v1217, %v1393
        %v1395 = vpop.f32.mrb[0].mxu0
        %v1396 = vpop.f32.mrb[0].mxu0
        %v1397 = vadd.f32 %v1220, %v1396
        %v1398 = vpop.f32.mrb[0].mxu0
        %1399 = vmatprep.mubr.bf16.mxu0 0
        %1400 = vmatmul.mubr.bf16.gmra.mrb[0].mxu0 %v853
        %v1401 = vpop.f32.mrb[0].mxu0
        %v1402 = vadd.f32 %v1225, %v1401
        %v1403 = vpop.f32.mrb[0].mxu0
        %v1404 = vpop.f32.mrb[0].mxu0
        %v1405 = vadd.f32 %v1228, %v1404
        %v1406 = vpop.f32.mrb[0].mxu0
        %1407 = vmatprep.mubr.bf16.mxu0 0
        %1408 = vmatmul.mubr.bf16.gmra.mrb[0].mxu0 %v854
        %v1409 = vpop.f32.mrb[0].mxu0
        %v1410 = vadd.f32 %v1233, %v1409
        %v1411 = vpop.f32.mrb[0].mxu0
        %v1412 = vpop.f32.mrb[0].mxu0
        %v1413 = vadd.f32 %v1236, %v1412
        %v1414 = vpop.f32.mrb[0].mxu0
        %1415 = vmatprep.mubr.bf16.mxu0 0
        %1416 = vmatmul.mubr.bf16.gmra.mrb[0].mxu0 %v855
        %v1417 = vpop.f32.mrb[0].mxu0
        %v1418 = vadd.f32 %v1241, %v1417
        %v1419 = vpop.f32.mrb[0].mxu0
        %v1420 = vpop.f32.mrb[0].mxu0
        %v1421 = vadd.f32 %v1244, %v1420
        %v1422 = vpop.f32.mrb[0].mxu0
        %1423 = vmatprep.mubr.bf16.mxu0 0
        %1424 = vmatmul.mubr.bf16.gmra.mrb[0].mxu0 %v856
        %v1425 = vpop.f32.mrb[0].mxu0
        %v1426 = vadd.f32 %v1249, %v1425
        %v1427 = vpop.f32.mrb[0].mxu0
        %v1428 = vpop.f32.mrb[0].mxu0
        %v1429 = vadd.f32 %v1252, %v1428
        %v1430 = vpop.f32.mrb[0].mxu0
        %1431 = vmatprep.mubr.bf16.mxu0 0
        %1432 = vmatmul.mubr.bf16.gmra.mrb[0].mxu0 %v857
        %v1433 = vpop.f32.mrb[0].mxu0
        %v1434 = vadd.f32 %v1257, %v1433
        %v1435 = vpop.f32.mrb[0].mxu0
        %v1436 = vpop.f32.mrb[0].mxu0
        %v1437 = vadd.f32 %v1260, %v1436
        %v1438 = vpop.f32.mrb[0].mxu0
        %1439 = vmatprep.mubr.bf16.mxu0 0
        %1440 = vmatmul.mubr.bf16.gmra.mrb[0].mxu0 %v858
        %v1441 = vpop.f32.mrb[0].mxu0
        %v1442 = vadd.f32 %v1265, %v1441
        %v1443 = vpop.f32.mrb[0].mxu0
        %v1444 = vpop.f32.mrb[0].mxu0
        %v1445 = vadd.f32 %v1268, %v1444
        %v1446 = vpop.f32.mrb[0].mxu0
        %1447 = vmatprep.mubr.bf16.mxu0 0
        %1448 = vmatmul.mubr.bf16.gmra.mrb[0].mxu0 %v859
        %v1449 = vpop.f32.mrb[0].mxu0
        %v1450 = vadd.f32 %v1273, %v1449
        %v1451 = vpop.f32.mrb[0].mxu0
        %v1452 = vpop.f32.mrb[0].mxu0
        %v1453 = vadd.f32 %v1276, %v1452
        %v1454 = vpop.f32.mrb[0].mxu0
        %1455 = vdwg.mxu0
        %v1504 = vunpack.c.l.b16 %v861
        %v1505 = vunpack.c.l.b16 %v862
        %v1506 = vunpack.c.l.b16 %v863
        %v1507 = vunpack.c.l.b16 %v864
        %v1508 = vunpack.c.l.b16 %v865
        %v1509 = vunpack.c.l.b16 %v866
        %v1510 = vunpack.c.l.b16 %v867
        %v1511 = vunpack.c.l.b16 %v868
        %v1512 = vunpack.c.l.b16 %v869
        %v1513 = vunpack.c.l.b16 %v870
        %v1514 = vunpack.c.l.b16 %v871
        %v1515 = vunpack.c.l.b16 %v872
        %v1516 = vunpack.c.l.b16 %v873
        %v1517 = vunpack.c.l.b16 %v874
        %v1518 = vunpack.c.l.b16 %v875
        %v1519 = vunpack.c.l.b16 %v876
        %v1520 = vunpack.c.l.b16 %v877
        %v1521 = vunpack.c.l.b16 %v878
        %v1522 = vunpack.c.l.b16 %v879
        %v1523 = vunpack.c.l.b16 %v880
        %v1524 = vunpack.c.l.b16 %v881
        %v1525 = vunpack.c.l.b16 %v882
        %v1526 = vunpack.c.l.b16 %v883
        %v1527 = vunpack.c.l.b16 %v884
        %v1528 = vunpack.c.l.b16 %v885
        %v1529 = vunpack.c.l.b16 %v886
        %v1530 = vunpack.c.l.b16 %v887
        %v1531 = vunpack.c.l.b16 %v888
        %v1532 = vunpack.c.l.b16 %v889
        %v1533 = vunpack.c.l.b16 %v890
        %v1534 = vunpack.c.l.b16 %v891
        %v1535 = vunpack.c.l.b16 %v892
        %v1536 = vunpack.c.l.b16 %v893
        %v1537 = vunpack.c.l.b16 %v894
        %v1538 = vunpack.c.l.b16 %v895
        %v1539 = vunpack.c.l.b16 %v896
        %v1540 = vunpack.c.l.b16 %v897
        %v1541 = vunpack.c.l.b16 %v898
        %v1542 = vunpack.c.l.b16 %v899
        %v1543 = vunpack.c.l.b16 %v900
        %v1544 = vunpack.c.l.b16 %v901
        %v1545 = vunpack.c.l.b16 %v902
        %v1546 = vunpack.c.l.b16 %v903
        %v1547 = vunpack.c.l.b16 %v904
        %v1548 = vunpack.c.l.b16 %v905
        %v1549 = vunpack.c.l.b16 %v906
        %v1550 = vunpack.c.l.b16 %v907
        %v1551 = vunpack.c.l.b16 %v908
        %v1552 = vpack.c.b16 %v1505, %v1504
        %v1553 = vpack.c.b16 %v1507, %v1506
        %v1554 = vpack.c.b16 %v1509, %v1508
        %v1555 = vpack.c.b16 %v1511, %v1510
        %v1556 = vpack.c.b16 %v1513, %v1512
        %v1557 = vpack.c.b16 %v1515, %v1514
        %v1558 = vpack.c.b16 %v1517, %v1516
        %v1559 = vpack.c.b16 %v1519, %v1518
        %v1560 = vpack.c.b16 %v1521, %v1520
        %v1561 = vpack.c.b16 %v1523, %v1522
        %v1562 = vpack.c.b16 %v1525, %v1524
        %v1563 = vpack.c.b16 %v1527, %v1526
        %v1564 = vpack.c.b16 %v1529, %v1528
        %v1565 = vpack.c.b16 %v1531, %v1530
        %v1566 = vpack.c.b16 %v1533, %v1532
        %v1567 = vpack.c.b16 %v1535, %v1534
        %v1568 = vpack.c.b16 %v1537, %v1536
        %v1569 = vpack.c.b16 %v1539, %v1538
        %v1570 = vpack.c.b16 %v1541, %v1540
        %v1571 = vpack.c.b16 %v1543, %v1542
        %v1572 = vpack.c.b16 %v1545, %v1544
        %v1573 = vpack.c.b16 %v1547, %v1546
        %v1574 = vpack.c.b16 %v1549, %v1548
        %v1575 = vpack.c.b16 %v1551, %v1550
        %1600 = vmatprep.subr.bf16.mxu0 0
        %1601 = vmatpush1.bf16.msra.mxu0 %v1552
        %1602 = vmatprep.subr.bf16.mxu0 0
        %1603 = vmatpush1.bf16.msra.mxu0 %v1553
        %1604 = vmatprep.subr.bf16.mxu0 0
        %1605 = vmatpush1.bf16.msra.mxu0 %v1554
        %1606 = vmatprep.subr.bf16.mxu0 0
        %1607 = vmatpush1.bf16.msra.mxu0 %v1555
        %1608 = vmatprep.subr.bf16.mxu0 0
        %1609 = vmatpush1.bf16.msra.mxu0 %v1556
        %1610 = vmatprep.subr.bf16.mxu0 0
        %1611 = vmatpush1.bf16.msra.mxu0 %v1557
        %1612 = vmatprep.subr.bf16.mxu0 0
        %1613 = vmatpush1.bf16.msra.mxu0 %v1558
        %1614 = vmatprep.subr.bf16.mxu0 0
        %1615 = vmatpush1.bf16.msra.mxu0 %v1559
        %1616 = vmatprep.subr.bf16.mxu0 0
        %1617 = vmatpush1.bf16.msra.mxu0 %v1560
        %1618 = vmatprep.subr.bf16.mxu0 0
        %1619 = vmatpush1.bf16.msra.mxu0 %v1561
        %1620 = vmatprep.subr.bf16.mxu0 0
        %1621 = vmatpush1.bf16.msra.mxu0 %v1562
        %1622 = vmatprep.subr.bf16.mxu0 0
        %1623 = vmatpush1.bf16.msra.mxu0 %v1563
        %1624 = vmatprep.subr.bf16.mxu0 0
        %1625 = vmatpush1.bf16.msra.mxu0 %v1564
        %1626 = vmatprep.subr.bf16.mxu0 0
        %1627 = vmatpush1.bf16.msra.mxu0 %v1565
        %1628 = vmatprep.subr.bf16.mxu0 0
        %1629 = vmatpush1.bf16.msra.mxu0 %v1566
        %1630 = vmatprep.subr.bf16.mxu0 0
        %1631 = vmatpush1.bf16.msra.mxu0 %v1567
        %1632 = vmatprep.mubr.bf16.mxu0 %v533
        %1633 = vmatmul.mubr.bf16.gmra.mrb[0].mxu0 %v758
        %v1634 = vpop.f32.mrb[0].mxu0
        %v1635 = vadd.f32 %v1314, %v1634
        %v1636 = vpop.f32.mrb[0].mxu0
        %v1637 = vpop.f32.mrb[0].mxu0
        %v1638 = vadd.f32 %v1317, %v1637
        %v1639 = vpop.f32.mrb[0].mxu0
        %1640 = vmatprep.mubr.bf16.mxu0 %v534
        %1641 = vmatmul.mubr.bf16.gmra.mrb[0].mxu0 %v759
        %v1642 = vpop.f32.mrb[0].mxu0
        %v1643 = vadd.f32 %v1322, %v1642
        %v1644 = vpop.f32.mrb[0].mxu0
        %v1645 = vpop.f32.mrb[0].mxu0
        %v1646 = vadd.f32 %v1325, %v1645
        %v1647 = vpop.f32.mrb[0].mxu0
        %1648 = vmatprep.mubr.bf16.mxu0 %v579
        %1649 = vmatmul.mubr.bf16.gmra.mrb[0].mxu0 %v760
        %v1650 = vpop.f32.mrb[0].mxu0
        %v1651 = vadd.f32 %v1330, %v1650
        %v1652 = vpop.f32.mrb[0].mxu0
        %v1653 = vpop.f32.mrb[0].mxu0
        %v1654 = vadd.f32 %v1333, %v1653
        %v1655 = vpop.f32.mrb[0].mxu0
        %1656 = vmatprep.mubr.bf16.mxu0 %v580
        %1657 = vmatmul.mubr.bf16.gmra.mrb[0].mxu0 %v761
        %v1658 = vpop.f32.mrb[0].mxu0
        %v1659 = vadd.f32 %v1338, %v1658
        %v1660 = vpop.f32.mrb[0].mxu0
        %v1661 = vpop.f32.mrb[0].mxu0
        %v1662 = vadd.f32 %v1341, %v1661
        %v1663 = vpop.f32.mrb[0].mxu0
        %1664 = vmatprep.mubr.bf16.mxu0 %v581
        %1665 = vmatmul.mubr.bf16.gmra.mrb[0].mxu0 %v762
        %v1666 = vpop.f32.mrb[0].mxu0
        %v1667 = vadd.f32 %v1346, %v1666
        %v1668 = vpop.f32.mrb[0].mxu0
        %v1669 = vpop.f32.mrb[0].mxu0
        %v1670 = vadd.f32 %v1349, %v1669
        %v1671 = vpop.f32.mrb[0].mxu0
        %1672 = vmatprep.mubr.bf16.mxu0 %v582
        %1673 = vmatmul.mubr.bf16.gmra.mrb[0].mxu0 %v763
        %v1674 = vpop.f32.mrb[0].mxu0
        %v1675 = vadd.f32 %v1354, %v1674
        %v1676 = vpop.f32.mrb[0].mxu0
        %v1677 = vpop.f32.mrb[0].mxu0
        %v1678 = vadd.f32 %v1357, %v1677
        %v1679 = vpop.f32.mrb[0].mxu0
        %1680 = vmatprep.mubr.bf16.mxu0 %v583
        %1681 = vmatmul.mubr.bf16.gmra.mrb[0].mxu0 %v764
        %v1682 = vpop.f32.mrb[0].mxu0
        %v1683 = vadd.f32 %v1362, %v1682
        %v1684 = vpop.f32.mrb[0].mxu0
        %v1685 = vpop.f32.mrb[0].mxu0
        %v1686 = vadd.f32 %v1365, %v1685
        %v1687 = vpop.f32.mrb[0].mxu0
        %1688 = vmatprep.mubr.bf16.mxu0 %v584
        %1689 = vmatmul.mubr.bf16.gmra.mrb[0].mxu0 %v765
        %v1690 = vpop.f32.mrb[0].mxu0
        %v1691 = vadd.f32 %v1370, %v1690
        %v1692 = vpop.f32.mrb[0].mxu0
        %v1693 = vpop.f32.mrb[0].mxu0
        %v1694 = vadd.f32 %v1373, %v1693
        %v1695 = vpop.f32.mrb[0].mxu0
        %1696 = vmatprep.mubr.bf16.mxu0 %v585
        %1697 = vmatmul.mubr.bf16.gmra.mrb[0].mxu0 %v766
        %v1698 = vpop.f32.mrb[0].mxu0
        %v1699 = vadd.f32 %v1378, %v1698
        %v1700 = vpop.f32.mrb[0].mxu0
        %v1701 = vpop.f32.mrb[0].mxu0
        %v1702 = vadd.f32 %v1381, %v1701
        %v1703 = vpop.f32.mrb[0].mxu0
        %1704 = vmatprep.mubr.bf16.mxu0 %v586
        %1705 = vmatmul.mubr.bf16.gmra.mrb[0].mxu0 %v767
        %v1706 = vpop.f32.mrb[0].mxu0
        %v1707 = vadd.f32 %v1386, %v1706
        %v1708 = vpop.f32.mrb[0].mxu0
        %v1709 = vpop.f32.mrb[0].mxu0
        %v1710 = vadd.f32 %v1389, %v1709
        %v1711 = vpop.f32.mrb[0].mxu0
        %1712 = vmatprep.mubr.bf16.mxu0 %v587
        %1713 = vmatmul.mubr.bf16.gmra.mrb[0].mxu0 %v768
        %v1714 = vpop.f32.mrb[0].mxu0
        %v1715 = vadd.f32 %v1394, %v1714
        %v1716 = vpop.f32.mrb[0].mxu0
        %v1717 = vpop.f32.mrb[0].mxu0
        %v1718 = vadd.f32 %v1397, %v1717
        %v1719 = vpop.f32.mrb[0].mxu0
        %1720 = vmatprep.mubr.bf16.mxu0 %v588
        %1721 = vmatmul.mubr.bf16.gmra.mrb[0].mxu0 %v769
        %v1722 = vpop.f32.mrb[0].mxu0
        %v1723 = vadd.f32 %v1402, %v1722
        %v1724 = vpop.f32.mrb[0].mxu0
        %v1725 = vpop.f32.mrb[0].mxu0
        %v1726 = vadd.f32 %v1405, %v1725
        %v1727 = vpop.f32.mrb[0].mxu0
        %1728 = vmatprep.mubr.bf16.mxu0 %v589
        %1729 = vmatmul.mubr.bf16.gmra.mrb[0].mxu0 %v770
        %v1730 = vpop.f32.mrb[0].mxu0
        %v1731 = vadd.f32 %v1410, %v1730
        %v1732 = vpop.f32.mrb[0].mxu0
        %v1733 = vpop.f32.mrb[0].mxu0
        %v1734 = vadd.f32 %v1413, %v1733
        %v1735 = vpop.f32.mrb[0].mxu0
        %1736 = vmatprep.mubr.bf16.mxu0 %v590
        %1737 = vmatmul.mubr.bf16.gmra.mrb[0].mxu0 %v771
        %v1738 = vpop.f32.mrb[0].mxu0
        %v1739 = vadd.f32 %v1418, %v1738
        %v1740 = vpop.f32.mrb[0].mxu0
        %v1741 = vpop.f32.mrb[0].mxu0
        %v1742 = vadd.f32 %v1421, %v1741
        %v1743 = vpop.f32.mrb[0].mxu0
        %1744 = vmatprep.mubr.bf16.mxu0 %v591
        %1745 = vmatmul.mubr.bf16.gmra.mrb[0].mxu0 %v772
        %v1746 = vpop.f32.mrb[0].mxu0
        %v1747 = vadd.f32 %v1426, %v1746
        %v1748 = vpop.f32.mrb[0].mxu0
        %v1749 = vpop.f32.mrb[0].mxu0
        %v1750 = vadd.f32 %v1429, %v1749
        %v1751 = vpop.f32.mrb[0].mxu0
        %1752 = vmatprep.mubr.bf16.mxu0 %v592
        %1753 = vmatmul.mubr.bf16.gmra.mrb[0].mxu0 %v773
        %v1754 = vpop.f32.mrb[0].mxu0
        %v1755 = vadd.f32 %v1434, %v1754
        %v1756 = vpop.f32.mrb[0].mxu0
        %v1757 = vpop.f32.mrb[0].mxu0
        %v1758 = vadd.f32 %v1437, %v1757
        %v1759 = vpop.f32.mrb[0].mxu0
        %1760 = vmatprep.mubr.bf16.mxu0 %v593
        %1761 = vmatmul.mubr.bf16.gmra.mrb[0].mxu0 %v774
        %v1762 = vpop.f32.mrb[0].mxu0
        %v1763 = vadd.f32 %v1442, %v1762
        %v1764 = vpop.f32.mrb[0].mxu0
        %v1765 = vpop.f32.mrb[0].mxu0
        %v1766 = vadd.f32 %v1445, %v1765
        %v1767 = vpop.f32.mrb[0].mxu0
        %1768 = vmatprep.mubr.bf16.mxu0 %v594
        %1769 = vmatmul.mubr.bf16.gmra.mrb[0].mxu0 %v775
        %v1770 = vpop.f32.mrb[0].mxu0
        %v1771 = vadd.f32 %v1450, %v1770
        %v1772 = vpop.f32.mrb[0].mxu0
        %v1773 = vpop.f32.mrb[0].mxu0
        %v1774 = vadd.f32 %v1453, %v1773
        %v1775 = vpop.f32.mrb[0].mxu0
        %1776 = vdwg.mxu0
        %1777 = vmatprep.subr.bf16.mxu0 0
        %1778 = vmatpush1.bf16.msra.mxu0 %v1568
        %1779 = vmatprep.subr.bf16.mxu0 0
        %1780 = vmatpush1.bf16.msra.mxu0 %v1569
        %1781 = vmatprep.subr.bf16.mxu0 0
        %1782 = vmatpush1.bf16.msra.mxu0 %v1570
        %1783 = vmatprep.subr.bf16.mxu0 0
        %1784 = vmatpush1.bf16.msra.mxu0 %v1571
        %1785 = vmatprep.subr.bf16.mxu0 0
        %1786 = vmatpush1.bf16.msra.mxu0 %v1572
        %1787 = vmatprep.subr.bf16.mxu0 0
        %1788 = vmatpush1.bf16.msra.mxu0 %v1573
        %1789 = vmatprep.subr.bf16.mxu0 0
        %1790 = vmatpush1.bf16.msra.mxu0 %v1574
        %1791 = vmatprep.subr.bf16.mxu0 0
        %1792 = vmatpush1.bf16.msra.mxu0 %v1575
        %1793 = vmatprep.subr.bf16.mxu0 0
        %1794 = vmatpush1.bf16.msra.mxu0 0
        %1795 = vmatprep.subr.bf16.mxu0 0
        %1796 = vmatpush1.bf16.msra.mxu0 0
        %1797 = vmatprep.subr.bf16.mxu0 0
        %1798 = vmatpush1.bf16.msra.mxu0 0
        %1799 = vmatprep.subr.bf16.mxu0 0
        %1800 = vmatpush1.bf16.msra.mxu0 0
        %1801 = vmatprep.subr.bf16.mxu0 0
        %1802 = vmatpush1.bf16.msra.mxu0 0
        %1803 = vmatprep.subr.bf16.mxu0 0
        %1804 = vmatpush1.bf16.msra.mxu0 0
        %1805 = vmatprep.subr.bf16.mxu0 0
        %1806 = vmatpush1.bf16.msra.mxu0 0
        %1807 = vmatprep.subr.bf16.mxu0 0
        %1808 = vmatpush1.bf16.msra.mxu0 0
        %1809 = vmatprep.mubr.bf16.mxu0 0
        %1810 = vmatmul.mubr.bf16.gmra.mrb[0].mxu0 %v841
        %v1811 = vpop.f32.mrb[0].mxu0
        %v1812 = vadd.f32 %v1635, %v1811
        %v1813 = vpop.f32.mrb[0].mxu0
        %v1814 = vpop.f32.mrb[0].mxu0
        %v1815 = vadd.f32 %v1638, %v1814
        %v1816 = vpop.f32.mrb[0].mxu0
        %1817 = vmatprep.mubr.bf16.mxu0 0
        %1818 = vmatmul.mubr.bf16.gmra.mrb[0].mxu0 %v842
        %v1819 = vpop.f32.mrb[0].mxu0
        %v1820 = vadd.f32 %v1643, %v1819
        %v1821 = vpop.f32.mrb[0].mxu0
        %v1822 = vpop.f32.mrb[0].mxu0
        %v1823 = vadd.f32 %v1646, %v1822
        %v1824 = vpop.f32.mrb[0].mxu0
        %1825 = vmatprep.mubr.bf16.mxu0 0
        %1826 = vmatmul.mubr.bf16.gmra.mrb[0].mxu0 %v843
        %v1827 = vpop.f32.mrb[0].mxu0
        %v1828 = vadd.f32 %v1651, %v1827
        %v1829 = vpop.f32.mrb[0].mxu0
        %v1830 = vpop.f32.mrb[0].mxu0
        %v1831 = vadd.f32 %v1654, %v1830
        %v1832 = vpop.f32.mrb[0].mxu0
        %1833 = vmatprep.mubr.bf16.mxu0 0
        %1834 = vmatmul.mubr.bf16.gmra.mrb[0].mxu0 %v844
        %v1835 = vpop.f32.mrb[0].mxu0
        %v1836 = vadd.f32 %v1659, %v1835
        %v1837 = vpop.f32.mrb[0].mxu0
        %v1838 = vpop.f32.mrb[0].mxu0
        %v1839 = vadd.f32 %v1662, %v1838
        %v1840 = vpop.f32.mrb[0].mxu0
        %1841 = vmatprep.mubr.bf16.mxu0 0
        %1842 = vmatmul.mubr.bf16.gmra.mrb[0].mxu0 %v845
        %v1843 = vpop.f32.mrb[0].mxu0
        %v1844 = vadd.f32 %v1667, %v1843
        %v1845 = vpop.f32.mrb[0].mxu0
        %v1846 = vpop.f32.mrb[0].mxu0
        %v1847 = vadd.f32 %v1670, %v1846
        %v1848 = vpop.f32.mrb[0].mxu0
        %1849 = vmatprep.mubr.bf16.mxu0 0
        %1850 = vmatmul.mubr.bf16.gmra.mrb[0].mxu0 %v846
        %v1851 = vpop.f32.mrb[0].mxu0
        %v1852 = vadd.f32 %v1675, %v1851
        %v1853 = vpop.f32.mrb[0].mxu0
        %v1854 = vpop.f32.mrb[0].mxu0
        %v1855 = vadd.f32 %v1678, %v1854
        %v1856 = vpop.f32.mrb[0].mxu0
        %1857 = vmatprep.mubr.bf16.mxu0 0
        %1858 = vmatmul.mubr.bf16.gmra.mrb[0].mxu0 %v847
        %v1859 = vpop.f32.mrb[0].mxu0
        %v1860 = vadd.f32 %v1683, %v1859
        %v1861 = vpop.f32.mrb[0].mxu0
        %v1862 = vpop.f32.mrb[0].mxu0
        %v1863 = vadd.f32 %v1686, %v1862
        %v1864 = vpop.f32.mrb[0].mxu0
        %1865 = vmatprep.mubr.bf16.mxu0 0
        %1866 = vmatmul.mubr.bf16.gmra.mrb[0].mxu0 %v848
        %v1867 = vpop.f32.mrb[0].mxu0
        %v1868 = vadd.f32 %v1691, %v1867
        %v1869 = vpop.f32.mrb[0].mxu0
        %v1870 = vpop.f32.mrb[0].mxu0
        %v1871 = vadd.f32 %v1694, %v1870
        %v1872 = vpop.f32.mrb[0].mxu0
        %1873 = vmatprep.mubr.bf16.mxu0 0
        %1874 = vmatmul.mubr.bf16.gmra.mrb[0].mxu0 %v849
        %v1875 = vpop.f32.mrb[0].mxu0
        %v1876 = vadd.f32 %v1699, %v1875
        %v1877 = vpop.f32.mrb[0].mxu0
        %v1878 = vpop.f32.mrb[0].mxu0
        %v1879 = vadd.f32 %v1702, %v1878
        %v1880 = vpop.f32.mrb[0].mxu0
        %1881 = vmatprep.mubr.bf16.mxu0 0
        %1882 = vmatmul.mubr.bf16.gmra.mrb[0].mxu0 %v850
        %v1883 = vpop.f32.mrb[0].mxu0
        %v1884 = vadd.f32 %v1707, %v1883
        %v1885 = vpop.f32.mrb[0].mxu0
        %v1886 = vpop.f32.mrb[0].mxu0
        %v1887 = vadd.f32 %v1710, %v1886
        %v1888 = vpop.f32.mrb[0].mxu0
        %1889 = vmatprep.mubr.bf16.mxu0 0
        %1890 = vmatmul.mubr.bf16.gmra.mrb[0].mxu0 %v851
        %v1891 = vpop.f32.mrb[0].mxu0
        %v1892 = vadd.f32 %v1715, %v1891
        %v1893 = vpop.f32.mrb[0].mxu0
        %v1894 = vpop.f32.mrb[0].mxu0
        %v1895 = vadd.f32 %v1718, %v1894
        %v1896 = vpop.f32.mrb[0].mxu0
        %1897 = vmatprep.mubr.bf16.mxu0 0
        %1898 = vmatmul.mubr.bf16.gmra.mrb[0].mxu0 %v852
        %v1899 = vpop.f32.mrb[0].mxu0
        %v1900 = vadd.f32 %v1723, %v1899
        %v1901 = vpop.f32.mrb[0].mxu0
        %v1902 = vpop.f32.mrb[0].mxu0
        %v1903 = vadd.f32 %v1726, %v1902
        %v1904 = vpop.f32.mrb[0].mxu0
        %1905 = vmatprep.mubr.bf16.mxu0 0
        %1906 = vmatmul.mubr.bf16.gmra.mrb[0].mxu0 %v853
        %v1907 = vpop.f32.mrb[0].mxu0
        %v1908 = vadd.f32 %v1731, %v1907
        %v1909 = vpop.f32.mrb[0].mxu0
        %v1910 = vpop.f32.mrb[0].mxu0
        %v1911 = vadd.f32 %v1734, %v1910
        %v1912 = vpop.f32.mrb[0].mxu0
        %1913 = vmatprep.mubr.bf16.mxu0 0
        %1914 = vmatmul.mubr.bf16.gmra.mrb[0].mxu0 %v854
        %v1915 = vpop.f32.mrb[0].mxu0
        %v1916 = vadd.f32 %v1739, %v1915
        %v1917 = vpop.f32.mrb[0].mxu0
        %v1918 = vpop.f32.mrb[0].mxu0
        %v1919 = vadd.f32 %v1742, %v1918
        %v1920 = vpop.f32.mrb[0].mxu0
        %1921 = vmatprep.mubr.bf16.mxu0 0
        %1922 = vmatmul.mubr.bf16.gmra.mrb[0].mxu0 %v855
        %v1923 = vpop.f32.mrb[0].mxu0
        %v1924 = vadd.f32 %v1747, %v1923
        %v1925 = vpop.f32.mrb[0].mxu0
        %v1926 = vpop.f32.mrb[0].mxu0
        %v1927 = vadd.f32 %v1750, %v1926
        %v1928 = vpop.f32.mrb[0].mxu0
        %1929 = vmatprep.mubr.bf16.mxu0 0
        %1930 = vmatmul.mubr.bf16.gmra.mrb[0].mxu0 %v856
        %v1931 = vpop.f32.mrb[0].mxu0
        %v1932 = vadd.f32 %v1755, %v1931
        %v1933 = vpop.f32.mrb[0].mxu0
        %v1934 = vpop.f32.mrb[0].mxu0
        %v1935 = vadd.f32 %v1758, %v1934
        %v1936 = vpop.f32.mrb[0].mxu0
        %1937 = vmatprep.mubr.bf16.mxu0 0
        %1938 = vmatmul.mubr.bf16.gmra.mrb[0].mxu0 %v857
        %v1939 = vpop.f32.mrb[0].mxu0
        %v1940 = vadd.f32 %v1763, %v1939
        %v1941 = vpop.f32.mrb[0].mxu0
        %v1942 = vpop.f32.mrb[0].mxu0
        %v1943 = vadd.f32 %v1766, %v1942
        %v1944 = vpop.f32.mrb[0].mxu0
        %1945 = vmatprep.mubr.bf16.mxu0 0
        %1946 = vmatmul.mubr.bf16.gmra.mrb[0].mxu0 %v858
        %v1947 = vpop.f32.mrb[0].mxu0
        %v1948 = vadd.f32 %v1771, %v1947
        %v1949 = vpop.f32.mrb[0].mxu0
        %v1950 = vpop.f32.mrb[0].mxu0
        %v1951 = vadd.f32 %v1774, %v1950
        %v1952 = vpop.f32.mrb[0].mxu0
        %1953 = vdwg.mxu0
        %s1954 = scalar_lea.vmem [#allocation8], 384
        %v1955 = vld [vmem:[%s1954] sm:$0xf]
        %v1956 = vld [vmem:[%s1954 + $0x4] sm:$0xf]
        %v1957 = vld [vmem:[%s1954 + $0x8] sm:$0xf]
        %v1958 = vld [vmem:[%s1954 + $0xc] sm:$0xf]
        %v1959 = vld [vmem:[%s1954 + $0x10] sm:$0xf]
        %v1960 = vld [vmem:[%s1954 + $0x14] sm:$0xf]
        %v1961 = vld [vmem:[%s1954 + $0x18] sm:$0xf]
        %v1962 = vld [vmem:[%s1954 + $0x1c] sm:$0xf]
        %v1963 = vld [vmem:[%s1954 + $0x20] sm:$0xf]
        %v1964 = vld [vmem:[%s1954 + $0x24] sm:$0xf]
        %v1965 = vld [vmem:[%s1954 + $0x28] sm:$0xf]
        %v1966 = vld [vmem:[%s1954 + $0x2c] sm:$0xf]
        %v1967 = vld [vmem:[%s1954 + $0x30] sm:$0xf]
        %v1968 = vld [vmem:[%s1954 + $0x34] sm:$0xf]
        %v1969 = vld [vmem:[%s1954 + $0x38] sm:$0xf]
        %v1970 = vld [vmem:[%s1954 + $0x3c] sm:$0xf]
        %v1971 = vld [vmem:[%s1954 + $0x40] sm:$0xf]
        %v1972 = vld [vmem:[%s1954 + $0x44] sm:$0xf]
        %v1973 = vld [vmem:[%s1954 + $0x48] sm:$0xf]
        %v1974 = vld [vmem:[%s1954 + $0x4c] sm:$0xf]
        %v1975 = vld [vmem:[%s1954 + $0x50] sm:$0xf]
        %v1976 = vld [vmem:[%s1954 + $0x54] sm:$0xf]
        %v1977 = vld [vmem:[%s1954 + $0x58] sm:$0xf]
        %v1978 = vld [vmem:[%s1954 + $0x5c] sm:$0xf]
        %v1979 = vld [vmem:[%s1954 + $0x60] sm:$0xf]
        %v1980 = vld [vmem:[%s1954 + $0x64] sm:$0xf]
        %v1981 = vld [vmem:[%s1954 + $0x68] sm:$0xf]
        %v1982 = vld [vmem:[%s1954 + $0x6c] sm:$0xf]
        %v1983 = vld [vmem:[%s1954 + $0x70] sm:$0xf]
        %v1984 = vld [vmem:[%s1954 + $0x74] sm:$0xf]
        %v1985 = vld [vmem:[%s1954 + $0x78] sm:$0xf]
        %v1986 = vld [vmem:[%s1954 + $0x7c] sm:$0xf]
        %v1987 = vld [vmem:[%s1954 + $0x80] sm:$0xf]
        %v1988 = vld [vmem:[%s1954 + $0x84] sm:$0xf]
        %v1989 = vld [vmem:[%s1954 + $0x88] sm:$0xf]
        %v1990 = vld [vmem:[%s1954 + $0x8c] sm:$0xf]
        %v1991 = vld [vmem:[%s1954 + $0x90] sm:$0xf]
        %v1992 = vld [vmem:[%s1954 + $0x94] sm:$0xf]
        %v1993 = vld [vmem:[%s1954 + $0x98] sm:$0xf]
        %v1994 = vld [vmem:[%s1954 + $0x9c] sm:$0xf]
        %v1995 = vld [vmem:[%s1954 + $0xa0] sm:$0xf]
        %v1996 = vld [vmem:[%s1954 + $0xa4] sm:$0xf]
        %v1997 = vld [vmem:[%s1954 + $0xa8] sm:$0xf]
        %v1998 = vld [vmem:[%s1954 + $0xac] sm:$0xf]
        %v1999 = vld [vmem:[%s1954 + $0xb0] sm:$0xf]
        %v2000 = vld [vmem:[%s1954 + $0xb4] sm:$0xf]
        %v2001 = vld [vmem:[%s1954 + $0xb8] sm:$0xf]
        %v2002 = vld [vmem:[%s1954 + $0xbc] sm:$0xf]
        %v2051 = vunpack.c.l.b16 %v1955
        %v2052 = vunpack.c.l.b16 %v1956
        %v2053 = vunpack.c.l.b16 %v1957
        %v2054 = vunpack.c.l.b16 %v1958
        %v2055 = vunpack.c.l.b16 %v1959
        %v2056 = vunpack.c.l.b16 %v1960
        %v2057 = vunpack.c.l.b16 %v1961
        %v2058 = vunpack.c.l.b16 %v1962
        %v2059 = vunpack.c.l.b16 %v1963
        %v2060 = vunpack.c.l.b16 %v1964
        %v2061 = vunpack.c.l.b16 %v1965
        %v2062 = vunpack.c.l.b16 %v1966
        %v2063 = vunpack.c.l.b16 %v1967
        %v2064 = vunpack.c.l.b16 %v1968
        %v2065 = vunpack.c.l.b16 %v1969
        %v2066 = vunpack.c.l.b16 %v1970
        %v2067 = vunpack.c.l.b16 %v1971
        %v2068 = vunpack.c.l.b16 %v1972
        %v2069 = vunpack.c.l.b16 %v1973
        %v2070 = vunpack.c.l.b16 %v1974
        %v2071 = vunpack.c.l.b16 %v1975
        %v2072 = vunpack.c.l.b16 %v1976
        %v2073 = vunpack.c.l.b16 %v1977
        %v2074 = vunpack.c.l.b16 %v1978
        %v2075 = vunpack.c.l.b16 %v1979
        %v2076 = vunpack.c.l.b16 %v1980
        %v2077 = vunpack.c.l.b16 %v1981
        %v2078 = vunpack.c.l.b16 %v1982
        %v2079 = vunpack.c.l.b16 %v1983
        %v2080 = vunpack.c.l.b16 %v1984
        %v2081 = vunpack.c.l.b16 %v1985
        %v2082 = vunpack.c.l.b16 %v1986
        %v2083 = vunpack.c.l.b16 %v1987
        %v2084 = vunpack.c.l.b16 %v1988
        %v2085 = vunpack.c.l.b16 %v1989
        %v2086 = vunpack.c.l.b16 %v1990
        %v2087 = vunpack.c.l.b16 %v1991
        %v2088 = vunpack.c.l.b16 %v1992
        %v2089 = vunpack.c.l.b16 %v1993
        %v2090 = vunpack.c.l.b16 %v1994
        %v2091 = vunpack.c.l.b16 %v1995
        %v2092 = vunpack.c.l.b16 %v1996
        %v2093 = vunpack.c.l.b16 %v1997
        %v2094 = vunpack.c.l.b16 %v1998
        %v2095 = vunpack.c.l.b16 %v1999
        %v2096 = vunpack.c.l.b16 %v2000
        %v2097 = vunpack.c.l.b16 %v2001
        %v2098 = vunpack.c.l.b16 %v2002
        %v2099 = vpack.c.b16 %v2052, %v2051
        %v2100 = vpack.c.b16 %v2054, %v2053
        %v2101 = vpack.c.b16 %v2056, %v2055
        %v2102 = vpack.c.b16 %v2058, %v2057
        %v2103 = vpack.c.b16 %v2060, %v2059
        %v2104 = vpack.c.b16 %v2062, %v2061
        %v2105 = vpack.c.b16 %v2064, %v2063
        %v2106 = vpack.c.b16 %v2066, %v2065
        %v2107 = vpack.c.b16 %v2068, %v2067
        %v2108 = vpack.c.b16 %v2070, %v2069
        %v2109 = vpack.c.b16 %v2072, %v2071
        %v2110 = vpack.c.b16 %v2074, %v2073
        %v2111 = vpack.c.b16 %v2076, %v2075
        %v2112 = vpack.c.b16 %v2078, %v2077
        %v2113 = vpack.c.b16 %v2080, %v2079
        %v2114 = vpack.c.b16 %v2082, %v2081
        %v2115 = vpack.c.b16 %v2084, %v2083
        %v2116 = vpack.c.b16 %v2086, %v2085
        %v2117 = vpack.c.b16 %v2088, %v2087
        %v2118 = vpack.c.b16 %v2090, %v2089
        %v2119 = vpack.c.b16 %v2092, %v2091
        %v2120 = vpack.c.b16 %v2094, %v2093
        %v2121 = vpack.c.b16 %v2096, %v2095
        %v2122 = vpack.c.b16 %v2098, %v2097
        %2147 = vmatprep.subr.bf16.mxu0 0
        %2148 = vmatpush1.bf16.msra.mxu0 %v2099
        %2149 = vmatprep.subr.bf16.mxu0 0
        %2150 = vmatpush1.bf16.msra.mxu0 %v2100
        %2151 = vmatprep.subr.bf16.mxu0 0
        %2152 = vmatpush1.bf16.msra.mxu0 %v2101
        %2153 = vmatprep.subr.bf16.mxu0 0
        %2154 = vmatpush1.bf16.msra.mxu0 %v2102
        %2155 = vmatprep.subr.bf16.mxu0 0
        %2156 = vmatpush1.bf16.msra.mxu0 %v2103
        %2157 = vmatprep.subr.bf16.mxu0 0
        %2158 = vmatpush1.bf16.msra.mxu0 %v2104
        %2159 = vmatprep.subr.bf16.mxu0 0
        %2160 = vmatpush1.bf16.msra.mxu0 %v2105
        %2161 = vmatprep.subr.bf16.mxu0 0
        %2162 = vmatpush1.bf16.msra.mxu0 %v2106
        %2163 = vmatprep.subr.bf16.mxu0 0
        %2164 = vmatpush1.bf16.msra.mxu0 %v2107
        %2165 = vmatprep.subr.bf16.mxu0 0
        %2166 = vmatpush1.bf16.msra.mxu0 %v2108
        %2167 = vmatprep.subr.bf16.mxu0 0
        %2168 = vmatpush1.bf16.msra.mxu0 %v2109
        %2169 = vmatprep.subr.bf16.mxu0 0
        %2170 = vmatpush1.bf16.msra.mxu0 %v2110
        %2171 = vmatprep.subr.bf16.mxu0 0
        %2172 = vmatpush1.bf16.msra.mxu0 %v2111
        %2173 = vmatprep.subr.bf16.mxu0 0
        %2174 = vmatpush1.bf16.msra.mxu0 %v2112
        %2175 = vmatprep.subr.bf16.mxu0 0
        %2176 = vmatpush1.bf16.msra.mxu0 %v2113
        %2177 = vmatprep.subr.bf16.mxu0 0
        %2178 = vmatpush1.bf16.msra.mxu0 %v2114
        %2179 = vmatprep.mubr.bf16.mxu0 %v579
        %2180 = vmatmul.mubr.bf16.gmra.mrb[0].mxu0 %v760
        %v2181 = vpop.f32.mrb[0].mxu0
        %v2182 = vadd.f32 0.0, %v2181
        %v2183 = vpop.f32.mrb[0].mxu0
        %v2184 = vpop.f32.mrb[0].mxu0
        %v2185 = vadd.f32 0.0, %v2184
        %v2186 = vpop.f32.mrb[0].mxu0
        %2187 = vmatprep.mubr.bf16.mxu0 %v580
        %2188 = vmatmul.mubr.bf16.gmra.mrb[0].mxu0 %v761
        %v2189 = vpop.f32.mrb[0].mxu0
        %v2190 = vadd.f32 0.0, %v2189
        %v2191 = vpop.f32.mrb[0].mxu0
        %v2192 = vpop.f32.mrb[0].mxu0
        %v2193 = vadd.f32 0.0, %v2192
        %v2194 = vpop.f32.mrb[0].mxu0
        %2195 = vmatprep.mubr.bf16.mxu0 %v581
        %2196 = vmatmul.mubr.bf16.gmra.mrb[0].mxu0 %v762
        %v2197 = vpop.f32.mrb[0].mxu0
        %v2198 = vadd.f32 0.0, %v2197
        %v2199 = vpop.f32.mrb[0].mxu0
        %v2200 = vpop.f32.mrb[0].mxu0
        %v2201 = vadd.f32 0.0, %v2200
        %v2202 = vpop.f32.mrb[0].mxu0
        %2203 = vmatprep.mubr.bf16.mxu0 %v582
        %2204 = vmatmul.mubr.bf16.gmra.mrb[0].mxu0 %v763
        %v2205 = vpop.f32.mrb[0].mxu0
        %v2206 = vadd.f32 0.0, %v2205
        %v2207 = vpop.f32.mrb[0].mxu0
        %v2208 = vpop.f32.mrb[0].mxu0
        %v2209 = vadd.f32 0.0, %v2208
        %v2210 = vpop.f32.mrb[0].mxu0
        %2211 = vmatprep.mubr.bf16.mxu0 %v583
        %2212 = vmatmul.mubr.bf16.gmra.mrb[0].mxu0 %v764
        %v2213 = vpop.f32.mrb[0].mxu0
        %v2214 = vadd.f32 0.0, %v2213
        %v2215 = vpop.f32.mrb[0].mxu0
        %v2216 = vpop.f32.mrb[0].mxu0
        %v2217 = vadd.f32 0.0, %v2216
        %v2218 = vpop.f32.mrb[0].mxu0
        %2219 = vmatprep.mubr.bf16.mxu0 %v584
        %2220 = vmatmul.mubr.bf16.gmra.mrb[0].mxu0 %v765
        %v2221 = vpop.f32.mrb[0].mxu0
        %v2222 = vadd.f32 0.0, %v2221
        %v2223 = vpop.f32.mrb[0].mxu0
        %v2224 = vpop.f32.mrb[0].mxu0
        %v2225 = vadd.f32 0.0, %v2224
        %v2226 = vpop.f32.mrb[0].mxu0
        %2227 = vmatprep.mubr.bf16.mxu0 %v585
        %2228 = vmatmul.mubr.bf16.gmra.mrb[0].mxu0 %v766
        %v2229 = vpop.f32.mrb[0].mxu0
        %v2230 = vadd.f32 0.0, %v2229
        %v2231 = vpop.f32.mrb[0].mxu0
        %v2232 = vpop.f32.mrb[0].mxu0
        %v2233 = vadd.f32 0.0, %v2232
        %v2234 = vpop.f32.mrb[0].mxu0
        %2235 = vmatprep.mubr.bf16.mxu0 %v586
        %2236 = vmatmul.mubr.bf16.gmra.mrb[0].mxu0 %v767
        %v2237 = vpop.f32.mrb[0].mxu0
        %v2238 = vadd.f32 0.0, %v2237
        %v2239 = vpop.f32.mrb[0].mxu0
        %v2240 = vpop.f32.mrb[0].mxu0
        %v2241 = vadd.f32 0.0, %v2240
        %v2242 = vpop.f32.mrb[0].mxu0
        %2243 = vmatprep.mubr.bf16.mxu0 %v587
        %2244 = vmatmul.mubr.bf16.gmra.mrb[0].mxu0 %v768
        %v2245 = vpop.f32.mrb[0].mxu0
        %v2246 = vadd.f32 0.0, %v2245
        %v2247 = vpop.f32.mrb[0].mxu0
        %v2248 = vpop.f32.mrb[0].mxu0
        %v2249 = vadd.f32 0.0, %v2248
        %v2250 = vpop.f32.mrb[0].mxu0
        %2251 = vmatprep.mubr.bf16.mxu0 %v588
        %2252 = vmatmul.mubr.bf16.gmra.mrb[0].mxu0 %v769
        %v2253 = vpop.f32.mrb[0].mxu0
        %v2254 = vadd.f32 0.0, %v2253
        %v2255 = vpop.f32.mrb[0].mxu0
        %v2256 = vpop.f32.mrb[0].mxu0
        %v2257 = vadd.f32 0.0, %v2256
        %v2258 = vpop.f32.mrb[0].mxu0
        %2259 = vmatprep.mubr.bf16.mxu0 %v589
        %2260 = vmatmul.mubr.bf16.gmra.mrb[0].mxu0 %v770
        %v2261 = vpop.f32.mrb[0].mxu0
        %v2262 = vadd.f32 0.0, %v2261
        %v2263 = vpop.f32.mrb[0].mxu0
        %v2264 = vpop.f32.mrb[0].mxu0
        %v2265 = vadd.f32 0.0, %v2264
        %v2266 = vpop.f32.mrb[0].mxu0
        %2267 = vmatprep.mubr.bf16.mxu0 %v590
        %2268 = vmatmul.mubr.bf16.gmra.mrb[0].mxu0 %v771
        %v2269 = vpop.f32.mrb[0].mxu0
        %v2270 = vadd.f32 0.0, %v2269
        %v2271 = vpop.f32.mrb[0].mxu0
        %v2272 = vpop.f32.mrb[0].mxu0
        %v2273 = vadd.f32 0.0, %v2272
        %v2274 = vpop.f32.mrb[0].mxu0
        %2275 = vmatprep.mubr.bf16.mxu0 %v591
        %2276 = vmatmul.mubr.bf16.gmra.mrb[0].mxu0 %v772
        %v2277 = vpop.f32.mrb[0].mxu0
        %v2278 = vadd.f32 0.0, %v2277
        %v2279 = vpop.f32.mrb[0].mxu0
        %v2280 = vpop.f32.mrb[0].mxu0
        %v2281 = vadd.f32 0.0, %v2280
        %v2282 = vpop.f32.mrb[0].mxu0
        %2283 = vmatprep.mubr.bf16.mxu0 %v592
        %2284 = vmatmul.mubr.bf16.gmra.mrb[0].mxu0 %v773
        %v2285 = vpop.f32.mrb[0].mxu0
        %v2286 = vadd.f32 0.0, %v2285
        %v2287 = vpop.f32.mrb[0].mxu0
        %v2288 = vpop.f32.mrb[0].mxu0
        %v2289 = vadd.f32 0.0, %v2288
        %v2290 = vpop.f32.mrb[0].mxu0
        %2291 = vmatprep.mubr.bf16.mxu0 %v593
        %2292 = vmatmul.mubr.bf16.gmra.mrb[0].mxu0 %v774
        %v2293 = vpop.f32.mrb[0].mxu0
        %v2294 = vadd.f32 0.0, %v2293
        %v2295 = vpop.f32.mrb[0].mxu0
        %v2296 = vpop.f32.mrb[0].mxu0
        %v2297 = vadd.f32 0.0, %v2296
        %v2298 = vpop.f32.mrb[0].mxu0
        %2299 = vmatprep.mubr.bf16.mxu0 %v594
        %2300 = vmatmul.mubr.bf16.gmra.mrb[0].mxu0 %v775
        %v2301 = vpop.f32.mrb[0].mxu0
        %v2302 = vadd.f32 0.0, %v2301
        %v2303 = vpop.f32.mrb[0].mxu0
        %v2304 = vpop.f32.mrb[0].mxu0
        %v2305 = vadd.f32 0.0, %v2304
        %v2306 = vpop.f32.mrb[0].mxu0
        %2307 = vmatprep.mubr.bf16.mxu0 %v545
        %2308 = vmatmul.mubr.bf16.gmra.mrb[0].mxu0 %v776
        %v2309 = vpop.f32.mrb[0].mxu0
        %v2310 = vadd.f32 0.0, %v2309
        %v2311 = vpop.f32.mrb[0].mxu0
        %v2312 = vpop.f32.mrb[0].mxu0
        %v2313 = vadd.f32 0.0, %v2312
        %v2314 = vpop.f32.mrb[0].mxu0
        %2315 = vmatprep.mubr.bf16.mxu0 %v546
        %2316 = vmatmul.mubr.bf16.gmra.mrb[0].mxu0 %v777
        %v2317 = vpop.f32.mrb[0].mxu0
        %v2318 = vadd.f32 0.0, %v2317
        %v2319 = vpop.f32.mrb[0].mxu0
        %v2320 = vpop.f32.mrb[0].mxu0
        %v2321 = vadd.f32 0.0, %v2320
        %v2322 = vpop.f32.mrb[0].mxu0
        %2323 = vdwg.mxu0
        %2324 = vmatprep.subr.bf16.mxu0 0
        %2325 = vmatpush1.bf16.msra.mxu0 %v2115
        %2326 = vmatprep.subr.bf16.mxu0 0
        %2327 = vmatpush1.bf16.msra.mxu0 %v2116
        %2328 = vmatprep.subr.bf16.mxu0 0
        %2329 = vmatpush1.bf16.msra.mxu0 %v2117
        %2330 = vmatprep.subr.bf16.mxu0 0
        %2331 = vmatpush1.bf16.msra.mxu0 %v2118
        %2332 = vmatprep.subr.bf16.mxu0 0
        %2333 = vmatpush1.bf16.msra.mxu0 %v2119
        %2334 = vmatprep.subr.bf16.mxu0 0
        %2335 = vmatpush1.bf16.msra.mxu0 %v2120
        %2336 = vmatprep.subr.bf16.mxu0 0
        %2337 = vmatpush1.bf16.msra.mxu0 %v2121
        %2338 = vmatprep.subr.bf16.mxu0 0
        %2339 = vmatpush1.bf16.msra.mxu0 %v2122
        %2340 = vmatprep.subr.bf16.mxu0 0
        %2341 = vmatpush1.bf16.msra.mxu0 0
        %2342 = vmatprep.subr.bf16.mxu0 0
        %2343 = vmatpush1.bf16.msra.mxu0 0
        %2344 = vmatprep.subr.bf16.mxu0 0
        %2345 = vmatpush1.bf16.msra.mxu0 0
        %2346 = vmatprep.subr.bf16.mxu0 0
        %2347 = vmatpush1.bf16.msra.mxu0 0
        %2348 = vmatprep.subr.bf16.mxu0 0
        %2349 = vmatpush1.bf16.msra.mxu0 0
        %2350 = vmatprep.subr.bf16.mxu0 0
        %2351 = vmatpush1.bf16.msra.mxu0 0
        %2352 = vmatprep.subr.bf16.mxu0 0
        %2353 = vmatpush1.bf16.msra.mxu0 0
        %2354 = vmatprep.subr.bf16.mxu0 0
        %2355 = vmatpush1.bf16.msra.mxu0 0
        %2356 = vmatprep.mubr.bf16.mxu0 0
        %2357 = vmatmul.mubr.bf16.gmra.mrb[0].mxu0 %v843
        %v2358 = vpop.f32.mrb[0].mxu0
        %v2359 = vadd.f32 %v2182, %v2358
        %v2360 = vpop.f32.mrb[0].mxu0
        %v2361 = vpop.f32.mrb[0].mxu0
        %v2362 = vadd.f32 %v2185, %v2361
        %v2363 = vpop.f32.mrb[0].mxu0
        %2364 = vmatprep.mubr.bf16.mxu0 0
        %2365 = vmatmul.mubr.bf16.gmra.mrb[0].mxu0 %v844
        %v2366 = vpop.f32.mrb[0].mxu0
        %v2367 = vadd.f32 %v2190, %v2366
        %v2368 = vpop.f32.mrb[0].mxu0
        %v2369 = vpop.f32.mrb[0].mxu0
        %v2370 = vadd.f32 %v2193, %v2369
        %v2371 = vpop.f32.mrb[0].mxu0
        %2372 = vmatprep.mubr.bf16.mxu0 0
        %2373 = vmatmul.mubr.bf16.gmra.mrb[0].mxu0 %v845
        %v2374 = vpop.f32.mrb[0].mxu0
        %v2375 = vadd.f32 %v2198, %v2374
        %v2376 = vpop.f32.mrb[0].mxu0
        %v2377 = vpop.f32.mrb[0].mxu0
        %v2378 = vadd.f32 %v2201, %v2377
        %v2379 = vpop.f32.mrb[0].mxu0
        %2380 = vmatprep.mubr.bf16.mxu0 0
        %2381 = vmatmul.mubr.bf16.gmra.mrb[0].mxu0 %v846
        %v2382 = vpop.f32.mrb[0].mxu0
        %v2383 = vadd.f32 %v2206, %v2382
        %v2384 = vpop.f32.mrb[0].mxu0
        %v2385 = vpop.f32.mrb[0].mxu0
        %v2386 = vadd.f32 %v2209, %v2385
        %v2387 = vpop.f32.mrb[0].mxu0
        %2388 = vmatprep.mubr.bf16.mxu0 0
        %2389 = vmatmul.mubr.bf16.gmra.mrb[0].mxu0 %v847
        %v2390 = vpop.f32.mrb[0].mxu0
        %v2391 = vadd.f32 %v2214, %v2390
        %v2392 = vpop.f32.mrb[0].mxu0
        %v2393 = vpop.f32.mrb[0].mxu0
        %v2394 = vadd.f32 %v2217, %v2393
        %v2395 = vpop.f32.mrb[0].mxu0
        %2396 = vmatprep.mubr.bf16.mxu0 0
        %2397 = vmatmul.mubr.bf16.gmra.mrb[0].mxu0 %v848
        %v2398 = vpop.f32.mrb[0].mxu0
        %v2399 = vadd.f32 %v2222, %v2398
        %v2400 = vpop.f32.mrb[0].mxu0
        %v2401 = vpop.f32.mrb[0].mxu0
        %v2402 = vadd.f32 %v2225, %v2401
        %v2403 = vpop.f32.mrb[0].mxu0
        %2404 = vmatprep.mubr.bf16.mxu0 0
        %2405 = vmatmul.mubr.bf16.gmra.mrb[0].mxu0 %v849
        %v2406 = vpop.f32.mrb[0].mxu0
        %v2407 = vadd.f32 %v2230, %v2406
        %v2408 = vpop.f32.mrb[0].mxu0
        %v2409 = vpop.f32.mrb[0].mxu0
        %v2410 = vadd.f32 %v2233, %v2409
        %v2411 = vpop.f32.mrb[0].mxu0
        %2412 = vmatprep.mubr.bf16.mxu0 0
        %2413 = vmatmul.mubr.bf16.gmra.mrb[0].mxu0 %v850
        %v2414 = vpop.f32.mrb[0].mxu0
        %v2415 = vadd.f32 %v2238, %v2414
        %v2416 = vpop.f32.mrb[0].mxu0
        %v2417 = vpop.f32.mrb[0].mxu0
        %v2418 = vadd.f32 %v2241, %v2417
        %v2419 = vpop.f32.mrb[0].mxu0
        %2420 = vmatprep.mubr.bf16.mxu0 0
        %2421 = vmatmul.mubr.bf16.gmra.mrb[0].mxu0 %v851
        %v2422 = vpop.f32.mrb[0].mxu0
        %v2423 = vadd.f32 %v2246, %v2422
        %v2424 = vpop.f32.mrb[0].mxu0
        %v2425 = vpop.f32.mrb[0].mxu0
        %v2426 = vadd.f32 %v2249, %v2425
        %v2427 = vpop.f32.mrb[0].mxu0
        %2428 = vmatprep.mubr.bf16.mxu0 0
        %2429 = vmatmul.mubr.bf16.gmra.mrb[0].mxu0 %v852
        %v2430 = vpop.f32.mrb[0].mxu0
        %v2431 = vadd.f32 %v2254, %v2430
        %v2432 = vpop.f32.mrb[0].mxu0
        %v2433 = vpop.f32.mrb[0].mxu0
        %v2434 = vadd.f32 %v2257, %v2433
        %v2435 = vpop.f32.mrb[0].mxu0
        %2436 = vmatprep.mubr.bf16.mxu0 0
        %2437 = vmatmul.mubr.bf16.gmra.mrb[0].mxu0 %v853
        %v2438 = vpop.f32.mrb[0].mxu0
        %v2439 = vadd.f32 %v2262, %v2438
        %v2440 = vpop.f32.mrb[0].mxu0
        %v2441 = vpop.f32.mrb[0].mxu0
        %v2442 = vadd.f32 %v2265, %v2441
        %v2443 = vpop.f32.mrb[0].mxu0
        %2444 = vmatprep.mubr.bf16.mxu0 0
        %2445 = vmatmul.mubr.bf16.gmra.mrb[0].mxu0 %v854
        %v2446 = vpop.f32.mrb[0].mxu0
        %v2447 = vadd.f32 %v2270, %v2446
        %v2448 = vpop.f32.mrb[0].mxu0
        %v2449 = vpop.f32.mrb[0].mxu0
        %v2450 = vadd.f32 %v2273, %v2449
        %v2451 = vpop.f32.mrb[0].mxu0
        %2452 = vmatprep.mubr.bf16.mxu0 0
        %2453 = vmatmul.mubr.bf16.gmra.mrb[0].mxu0 %v855
        %v2454 = vpop.f32.mrb[0].mxu0
        %v2455 = vadd.f32 %v2278, %v2454
        %v2456 = vpop.f32.mrb[0].mxu0
        %v2457 = vpop.f32.mrb[0].mxu0
        %v2458 = vadd.f32 %v2281, %v2457
        %v2459 = vpop.f32.mrb[0].mxu0
        %2460 = vmatprep.mubr.bf16.mxu0 0
        %2461 = vmatmul.mubr.bf16.gmra.mrb[0].mxu0 %v856
        %v2462 = vpop.f32.mrb[0].mxu0
        %v2463 = vadd.f32 %v2286, %v2462
        %v2464 = vpop.f32.mrb[0].mxu0
        %v2465 = vpop.f32.mrb[0].mxu0
        %v2466 = vadd.f32 %v2289, %v2465
        %v2467 = vpop.f32.mrb[0].mxu0
        %2468 = vmatprep.mubr.bf16.mxu0 0
        %2469 = vmatmul.mubr.bf16.gmra.mrb[0].mxu0 %v857
        %v2470 = vpop.f32.mrb[0].mxu0
        %v2471 = vadd.f32 %v2294, %v2470
        %v2472 = vpop.f32.mrb[0].mxu0
        %v2473 = vpop.f32.mrb[0].mxu0
        %v2474 = vadd.f32 %v2297, %v2473
        %v2475 = vpop.f32.mrb[0].mxu0
        %2476 = vmatprep.mubr.bf16.mxu0 0
        %2477 = vmatmul.mubr.bf16.gmra.mrb[0].mxu0 %v858
        %v2478 = vpop.f32.mrb[0].mxu0
        %v2479 = vadd.f32 %v2302, %v2478
        %v2480 = vpop.f32.mrb[0].mxu0
        %v2481 = vpop.f32.mrb[0].mxu0
        %v2482 = vadd.f32 %v2305, %v2481
        %v2483 = vpop.f32.mrb[0].mxu0
        %2484 = vmatprep.mubr.bf16.mxu0 0
        %2485 = vmatmul.mubr.bf16.gmra.mrb[0].mxu0 %v859
        %v2486 = vpop.f32.mrb[0].mxu0
        %v2487 = vadd.f32 %v2310, %v2486
        %v2488 = vpop.f32.mrb[0].mxu0
        %v2489 = vpop.f32.mrb[0].mxu0
        %v2490 = vadd.f32 %v2313, %v2489
        %v2491 = vpop.f32.mrb[0].mxu0
        %2492 = vmatprep.mubr.bf16.mxu0 0
        %2493 = vmatmul.mubr.bf16.gmra.mrb[0].mxu0 %v860
        %v2494 = vpop.f32.mrb[0].mxu0
        %v2495 = vadd.f32 %v2318, %v2494
        %v2496 = vpop.f32.mrb[0].mxu0
        %v2497 = vpop.f32.mrb[0].mxu0
        %v2498 = vadd.f32 %v2321, %v2497
        %v2499 = vpop.f32.mrb[0].mxu0
        %2500 = vdwg.mxu0
        %v2501 = vadd.f32 %v1812, %v2359
        %v2502 = vadd.f32 %v1815, %v2362
        %v2503 = vadd.f32 %v1820, %v2367
        %v2504 = vadd.f32 %v1823, %v2370
        %v2505 = vadd.f32 %v1828, %v2375
        %v2506 = vadd.f32 %v1831, %v2378
        %v2507 = vadd.f32 %v1836, %v2383
        %v2508 = vadd.f32 %v1839, %v2386
        %v2509 = vadd.f32 %v1844, %v2391
        %v2510 = vadd.f32 %v1847, %v2394
        %v2511 = vadd.f32 %v1852, %v2399
        %v2512 = vadd.f32 %v1855, %v2402
        %v2513 = vadd.f32 %v1860, %v2407
        %v2514 = vadd.f32 %v1863, %v2410
        %v2515 = vadd.f32 %v1868, %v2415
        %v2516 = vadd.f32 %v1871, %v2418
        %v2517 = vadd.f32 %v1876, %v2423
        %v2518 = vadd.f32 %v1879, %v2426
        %v2519 = vadd.f32 %v1884, %v2431
        %v2520 = vadd.f32 %v1887, %v2434
        %v2521 = vadd.f32 %v1892, %v2439
        %v2522 = vadd.f32 %v1895, %v2442
        %v2523 = vadd.f32 %v1900, %v2447
        %v2524 = vadd.f32 %v1903, %v2450
        %v2525 = vadd.f32 %v1908, %v2455
        %v2526 = vadd.f32 %v1911, %v2458
        %v2527 = vadd.f32 %v1916, %v2463
        %v2528 = vadd.f32 %v1919, %v2466
        %v2529 = vadd.f32 %v1924, %v2471
        %v2530 = vadd.f32 %v1927, %v2474
        %v2531 = vadd.f32 %v1932, %v2479
        %v2532 = vadd.f32 %v1935, %v2482
        %v2533 = vadd.f32 %v1940, %v2487
        %v2534 = vadd.f32 %v1943, %v2490
        %v2535 = vadd.f32 %v1948, %v2495
        %v2536 = vadd.f32 %v1951, %v2498
        %v2537 = vld [vmem:[%s5] sm:$0x1]
        %v2539 = vlaneseq
        %v2540 = vshrl.u32 %v2539, 7
        %v2541 = vsub.s32 0, %v2540
        %v2542 = vrot.slane %v2537, %v2541
        %v2544 = vmul.f32 %v2501, %v2542
        %v2545 = vmul.f32 %v2502, %v2542
        %v2546 = vmul.f32 %v2503, %v2542
        %v2547 = vmul.f32 %v2504, %v2542
        %v2548 = vmul.f32 %v2505, %v2542
        %v2549 = vmul.f32 %v2506, %v2542
        %v2550 = vmul.f32 %v2507, %v2542
        %v2551 = vmul.f32 %v2508, %v2542
        %v2552 = vmul.f32 %v2509, %v2542
        %v2553 = vmul.f32 %v2510, %v2542
        %v2554 = vmul.f32 %v2511, %v2542
        %v2555 = vmul.f32 %v2512, %v2542
        %v2556 = vmul.f32 %v2513, %v2542
        %v2557 = vmul.f32 %v2514, %v2542
        %v2558 = vmul.f32 %v2515, %v2542
        %v2559 = vmul.f32 %v2516, %v2542
        %v2560 = vmul.f32 %v2517, %v2542
        %v2561 = vmul.f32 %v2518, %v2542
        %v2562 = vmul.f32 %v2519, %v2542
        %v2563 = vmul.f32 %v2520, %v2542
        %v2564 = vmul.f32 %v2521, %v2542
        %v2565 = vmul.f32 %v2522, %v2542
        %v2566 = vmul.f32 %v2523, %v2542
        %v2567 = vmul.f32 %v2524, %v2542
        %v2568 = vmul.f32 %v2525, %v2542
        %v2569 = vmul.f32 %v2526, %v2542
        %v2570 = vmul.f32 %v2527, %v2542
        %v2571 = vmul.f32 %v2528, %v2542
        %v2572 = vmul.f32 %v2529, %v2542
        %v2573 = vmul.f32 %v2530, %v2542
        %v2574 = vmul.f32 %v2531, %v2542
        %v2575 = vmul.f32 %v2532, %v2542
        %v2576 = vmul.f32 %v2533, %v2542
        %v2577 = vmul.f32 %v2534, %v2542
        %v2578 = vmul.f32 %v2535, %v2542
        %v2579 = vmul.f32 %v2536, %v2542
        %v2580 = vld [vmem:[%s6] sm:$0x1]
        %v2582 = vlaneseq
        %v2583 = vshrl.u32 %v2582, 7
        %v2584 = vsub.s32 0, %v2583
        %v2585 = vrot.slane %v2580, %v2584
        %v2587 = vadd.f32 %v2544, %v2585
        %v2588 = vadd.f32 %v2545, %v2585
        %v2589 = vadd.f32 %v2546, %v2585
        %v2590 = vadd.f32 %v2547, %v2585
        %v2591 = vadd.f32 %v2548, %v2585
        %v2592 = vadd.f32 %v2549, %v2585
        %v2593 = vadd.f32 %v2550, %v2585
        %v2594 = vadd.f32 %v2551, %v2585
        %v2595 = vadd.f32 %v2552, %v2585
        %v2596 = vadd.f32 %v2553, %v2585
        %v2597 = vadd.f32 %v2554, %v2585
        %v2598 = vadd.f32 %v2555, %v2585
        %v2599 = vadd.f32 %v2556, %v2585
        %v2600 = vadd.f32 %v2557, %v2585
        %v2601 = vadd.f32 %v2558, %v2585
        %v2602 = vadd.f32 %v2559, %v2585
        %v2603 = vadd.f32 %v2560, %v2585
        %v2604 = vadd.f32 %v2561, %v2585
        %v2605 = vadd.f32 %v2562, %v2585
        %v2606 = vadd.f32 %v2563, %v2585
        %v2607 = vadd.f32 %v2564, %v2585
        %v2608 = vadd.f32 %v2565, %v2585
        %v2609 = vadd.f32 %v2566, %v2585
        %v2610 = vadd.f32 %v2567, %v2585
        %v2611 = vadd.f32 %v2568, %v2585
        %v2612 = vadd.f32 %v2569, %v2585
        %v2613 = vadd.f32 %v2570, %v2585
        %v2614 = vadd.f32 %v2571, %v2585
        %v2615 = vadd.f32 %v2572, %v2585
        %v2616 = vadd.f32 %v2573, %v2585
        %v2617 = vadd.f32 %v2574, %v2585
        %v2618 = vadd.f32 %v2575, %v2585
        %v2619 = vadd.f32 %v2576, %v2585
        %v2620 = vadd.f32 %v2577, %v2585
        %v2621 = vadd.f32 %v2578, %v2585
        %v2622 = vadd.f32 %v2579, %v2585
        %v2623 = vmax.f32 %v2587, 0.0
        %v2624 = vmax.f32 %v2588, 0.0
        %v2625 = vmax.f32 %v2589, 0.0
        %v2626 = vmax.f32 %v2590, 0.0
        %v2627 = vmax.f32 %v2591, 0.0
        %v2628 = vmax.f32 %v2592, 0.0
        %v2629 = vmax.f32 %v2593, 0.0
        %v2630 = vmax.f32 %v2594, 0.0
        %v2631 = vmax.f32 %v2595, 0.0
        %v2632 = vmax.f32 %v2596, 0.0
        %v2633 = vmax.f32 %v2597, 0.0
        %v2634 = vmax.f32 %v2598, 0.0
        %v2635 = vmax.f32 %v2599, 0.0
        %v2636 = vmax.f32 %v2600, 0.0
        %v2637 = vmax.f32 %v2601, 0.0
        %v2638 = vmax.f32 %v2602, 0.0
        %v2639 = vmax.f32 %v2603, 0.0
        %v2640 = vmax.f32 %v2604, 0.0
        %v2641 = vmax.f32 %v2605, 0.0
        %v2642 = vmax.f32 %v2606, 0.0
        %v2643 = vmax.f32 %v2607, 0.0
        %v2644 = vmax.f32 %v2608, 0.0
        %v2645 = vmax.f32 %v2609, 0.0
        %v2646 = vmax.f32 %v2610, 0.0
        %v2647 = vmax.f32 %v2611, 0.0
        %v2648 = vmax.f32 %v2612, 0.0
        %v2649 = vmax.f32 %v2613, 0.0
        %v2650 = vmax.f32 %v2614, 0.0
        %v2651 = vmax.f32 %v2615, 0.0
        %v2652 = vmax.f32 %v2616, 0.0
        %v2653 = vmax.f32 %v2617, 0.0
        %v2654 = vmax.f32 %v2618, 0.0
        %v2655 = vmax.f32 %v2619, 0.0
        %v2656 = vmax.f32 %v2620, 0.0
        %v2657 = vmax.f32 %v2621, 0.0
        %v2658 = vmax.f32 %v2622, 0.0
        %s2659 = smul.u32 %s35, 16
        %s2660 = ssub.s32 %s2659, 1
        %v2661 = vstv %s2660
        %v2662 = vadd.s32 %v2661, 1
        %v2663 = vadd.s32 %v2661, 2
        %v2664 = vadd.s32 %v2661, 3
        %v2665 = vadd.s32 %v2661, 4
        %v2666 = vadd.s32 %v2661, 5
        %v2667 = vadd.s32 %v2661, 6
        %v2668 = vadd.s32 %v2661, 7
        %v2669 = vadd.s32 %v2661, 8
        %v2670 = vadd.s32 %v2661, 9
        %v2671 = vadd.s32 %v2661, 10
        %v2672 = vadd.s32 %v2661, 11
        %v2673 = vadd.s32 %v2661, 12
        %v2674 = vadd.s32 %v2661, 13
        %v2675 = vadd.s32 %v2661, 14
        %v2676 = vadd.s32 %v2661, 15
        %v2677 = vadd.s32 %v2661, 16
        %v2678 = vadd.s32 %v2661, 17
        %vm2679 = vcmp.ge.s32.totalorder %v2661, 0
        %vm2680 = vcmp.ge.s32.totalorder %v2662, 0
        %vm2681 = vcmp.ge.s32.totalorder %v2663, 0
        %vm2682 = vcmp.ge.s32.totalorder %v2664, 0
        %vm2683 = vcmp.ge.s32.totalorder %v2665, 0
        %vm2684 = vcmp.ge.s32.totalorder %v2666, 0
        %vm2685 = vcmp.ge.s32.totalorder %v2667, 0
        %vm2686 = vcmp.ge.s32.totalorder %v2668, 0
        %vm2687 = vcmp.ge.s32.totalorder %v2669, 0
        %vm2688 = vcmp.ge.s32.totalorder %v2670, 0
        %vm2689 = vcmp.ge.s32.totalorder %v2671, 0
        %vm2690 = vcmp.ge.s32.totalorder %v2672, 0
        %vm2691 = vcmp.ge.s32.totalorder %v2673, 0
        %vm2692 = vcmp.ge.s32.totalorder %v2674, 0
        %vm2693 = vcmp.ge.s32.totalorder %v2675, 0
        %vm2694 = vcmp.ge.s32.totalorder %v2676, 0
        %vm2695 = vcmp.ge.s32.totalorder %v2677, 0
        %vm2696 = vcmp.ge.s32.totalorder %v2678, 0
        %vm2697 = vcmp.lt.s32.totalorder %v2661, 16
        %vm2698 = vcmp.lt.s32.totalorder %v2662, 16
        %vm2699 = vcmp.lt.s32.totalorder %v2663, 16
        %vm2700 = vcmp.lt.s32.totalorder %v2664, 16
        %vm2701 = vcmp.lt.s32.totalorder %v2665, 16
        %vm2702 = vcmp.lt.s32.totalorder %v2666, 16
        %vm2703 = vcmp.lt.s32.totalorder %v2667, 16
        %vm2704 = vcmp.lt.s32.totalorder %v2668, 16
        %vm2705 = vcmp.lt.s32.totalorder %v2669, 16
        %vm2706 = vcmp.lt.s32.totalorder %v2670, 16
        %vm2707 = vcmp.lt.s32.totalorder %v2671, 16
        %vm2708 = vcmp.lt.s32.totalorder %v2672, 16
        %vm2709 = vcmp.lt.s32.totalorder %v2673, 16
        %vm2710 = vcmp.lt.s32.totalorder %v2674, 16
        %vm2711 = vcmp.lt.s32.totalorder %v2675, 16
        %vm2712 = vcmp.lt.s32.totalorder %v2676, 16
        %vm2713 = vcmp.lt.s32.totalorder %v2677, 16
        %vm2714 = vcmp.lt.s32.totalorder %v2678, 16
        %vm2715 = vmand %vm2679, %vm2697
        %vm2716 = vmand %vm2680, %vm2698
        %vm2717 = vmand %vm2681, %vm2699
        %vm2718 = vmand %vm2682, %vm2700
        %vm2719 = vmand %vm2683, %vm2701
        %vm2720 = vmand %vm2684, %vm2702
        %vm2721 = vmand %vm2685, %vm2703
        %vm2722 = vmand %vm2686, %vm2704
        %vm2723 = vmand %vm2687, %vm2705
        %vm2724 = vmand %vm2688, %vm2706
        %vm2725 = vmand %vm2689, %vm2707
        %vm2726 = vmand %vm2690, %vm2708
        %vm2727 = vmand %vm2691, %vm2709
        %vm2728 = vmand %vm2692, %vm2710
        %vm2729 = vmand %vm2693, %vm2711
        %vm2730 = vmand %vm2694, %vm2712
        %vm2731 = vmand %vm2695, %vm2713
        %vm2732 = vmand %vm2696, %vm2714
        %v2733 = vsel %vm2715, 1, 0
        %v2734 = vsel %vm2716, 1, 0
        %v2735 = vsel %vm2717, 1, 0
        %v2736 = vsel %vm2718, 1, 0
        %v2737 = vsel %vm2719, 1, 0
        %v2738 = vsel %vm2720, 1, 0
        %v2739 = vsel %vm2721, 1, 0
        %v2740 = vsel %vm2722, 1, 0
        %v2741 = vsel %vm2723, 1, 0
        %v2742 = vsel %vm2724, 1, 0
        %v2743 = vsel %vm2725, 1, 0
        %v2744 = vsel %vm2726, 1, 0
        %v2745 = vsel %vm2727, 1, 0
        %v2746 = vsel %vm2728, 1, 0
        %v2747 = vsel %vm2729, 1, 0
        %v2748 = vsel %vm2730, 1, 0
        %v2749 = vsel %vm2731, 1, 0
        %v2750 = vsel %vm2732, 1, 0
        %vm2751 = vcmp.eq.s32.totalorder %v2733, 1
        %vm2752 = vcmp.eq.s32.totalorder %v2734, 1
        %vm2753 = vcmp.eq.s32.totalorder %v2735, 1
        %vm2754 = vcmp.eq.s32.totalorder %v2736, 1
        %vm2755 = vcmp.eq.s32.totalorder %v2737, 1
        %vm2756 = vcmp.eq.s32.totalorder %v2738, 1
        %vm2757 = vcmp.eq.s32.totalorder %v2739, 1
        %vm2758 = vcmp.eq.s32.totalorder %v2740, 1
        %vm2759 = vcmp.eq.s32.totalorder %v2741, 1
        %vm2760 = vcmp.eq.s32.totalorder %v2742, 1
        %vm2761 = vcmp.eq.s32.totalorder %v2743, 1
        %vm2762 = vcmp.eq.s32.totalorder %v2744, 1
        %vm2763 = vcmp.eq.s32.totalorder %v2745, 1
        %vm2764 = vcmp.eq.s32.totalorder %v2746, 1
        %vm2765 = vcmp.eq.s32.totalorder %v2747, 1
        %vm2766 = vcmp.eq.s32.totalorder %v2748, 1
        %vm2767 = vcmp.eq.s32.totalorder %v2749, 1
        %vm2768 = vcmp.eq.s32.totalorder %v2750, 1
        %v2769 = vsel %vm2751, %v2623, 0.0
        %v2770 = vsel %vm2751, %v2624, 0.0
        %v2771 = vsel %vm2752, %v2625, 0.0
        %v2772 = vsel %vm2752, %v2626, 0.0
        %v2773 = vsel %vm2753, %v2627, 0.0
        %v2774 = vsel %vm2753, %v2628, 0.0
        %v2775 = vsel %vm2754, %v2629, 0.0
        %v2776 = vsel %vm2754, %v2630, 0.0
        %v2777 = vsel %vm2755, %v2631, 0.0
        %v2778 = vsel %vm2755, %v2632, 0.0
        %v2779 = vsel %vm2756, %v2633, 0.0
        %v2780 = vsel %vm2756, %v2634, 0.0
        %v2781 = vsel %vm2757, %v2635, 0.0
        %v2782 = vsel %vm2757, %v2636, 0.0
        %v2783 = vsel %vm2758, %v2637, 0.0
        %v2784 = vsel %vm2758, %v2638, 0.0
        %v2785 = vsel %vm2759, %v2639, 0.0
        %v2786 = vsel %vm2759, %v2640, 0.0
        %v2787 = vsel %vm2760, %v2641, 0.0
        %v2788 = vsel %vm2760, %v2642, 0.0
        %v2789 = vsel %vm2761, %v2643, 0.0
        %v2790 = vsel %vm2761, %v2644, 0.0
        %v2791 = vsel %vm2762, %v2645, 0.0
        %v2792 = vsel %vm2762, %v2646, 0.0
        %v2793 = vsel %vm2763, %v2647, 0.0
        %v2794 = vsel %vm2763, %v2648, 0.0
        %v2795 = vsel %vm2764, %v2649, 0.0
        %v2796 = vsel %vm2764, %v2650, 0.0
        %v2797 = vsel %vm2765, %v2651, 0.0
        %v2798 = vsel %vm2765, %v2652, 0.0
        %v2799 = vsel %vm2766, %v2653, 0.0
        %v2800 = vsel %vm2766, %v2654, 0.0
        %v2801 = vsel %vm2767, %v2655, 0.0
        %v2802 = vsel %vm2767, %v2656, 0.0
        %v2803 = vsel %vm2768, %v2657, 0.0
        %v2804 = vsel %vm2768, %v2658, 0.0
        %v2805 = vpack.c.bf16 %v2770, %v2769
        %v2806 = vpack.c.bf16 %v2772, %v2771
        %v2807 = vpack.c.bf16 %v2774, %v2773
        %v2808 = vpack.c.bf16 %v2776, %v2775
        %v2809 = vpack.c.bf16 %v2778, %v2777
        %v2810 = vpack.c.bf16 %v2780, %v2779
        %v2811 = vpack.c.bf16 %v2782, %v2781
        %v2812 = vpack.c.bf16 %v2784, %v2783
        %v2813 = vpack.c.bf16 %v2786, %v2785
        %v2814 = vpack.c.bf16 %v2788, %v2787
        %v2815 = vpack.c.bf16 %v2790, %v2789
        %v2816 = vpack.c.bf16 %v2792, %v2791
        %v2817 = vpack.c.bf16 %v2794, %v2793
        %v2818 = vpack.c.bf16 %v2796, %v2795
        %v2819 = vpack.c.bf16 %v2798, %v2797
        %v2820 = vpack.c.bf16 %v2800, %v2799
        %v2821 = vpack.c.bf16 %v2802, %v2801
        %v2822 = vpack.c.bf16 %v2804, %v2803
        %v2824 = vshrl.u32 %v2805, 16
        %v2826 = vrot.slane %v2824, 7
        %v2827 = vshll.u32 %v2805, 16
        %v2829 = vor.u32 %v2826, %v2827
        %v2831 = vshrl.u32 %v2806, 16
        %v2833 = vrot.slane %v2831, 7
        %v2834 = vshll.u32 %v2806, 16
        %v2836 = vor.u32 %v2833, %v2834
        %v2838 = vshrl.u32 %v2807, 16
        %v2840 = vrot.slane %v2838, 7
        %v2841 = vshll.u32 %v2807, 16
        %v2843 = vor.u32 %v2840, %v2841
        %v2845 = vshrl.u32 %v2808, 16
        %v2847 = vrot.slane %v2845, 7
        %v2848 = vshll.u32 %v2808, 16
        %v2850 = vor.u32 %v2847, %v2848
        %v2852 = vshrl.u32 %v2809, 16
        %v2854 = vrot.slane %v2852, 7
        %v2855 = vshll.u32 %v2809, 16
        %v2857 = vor.u32 %v2854, %v2855
        %v2859 = vshrl.u32 %v2810, 16
        %v2861 = vrot.slane %v2859, 7
        %v2862 = vshll.u32 %v2810, 16
        %v2864 = vor.u32 %v2861, %v2862
        %v2866 = vshrl.u32 %v2811, 16
        %v2868 = vrot.slane %v2866, 7
        %v2869 = vshll.u32 %v2811, 16
        %v2871 = vor.u32 %v2868, %v2869
        %v2873 = vshrl.u32 %v2812, 16
        %v2875 = vrot.slane %v2873, 7
        %v2876 = vshll.u32 %v2812, 16
        %v2878 = vor.u32 %v2875, %v2876
        %v2880 = vshrl.u32 %v2813, 16
        %v2882 = vrot.slane %v2880, 7
        %v2883 = vshll.u32 %v2813, 16
        %v2885 = vor.u32 %v2882, %v2883
        %v2887 = vshrl.u32 %v2814, 16
        %v2889 = vrot.slane %v2887, 7
        %v2890 = vshll.u32 %v2814, 16
        %v2892 = vor.u32 %v2889, %v2890
        %v2894 = vshrl.u32 %v2815, 16
        %v2896 = vrot.slane %v2894, 7
        %v2897 = vshll.u32 %v2815, 16
        %v2899 = vor.u32 %v2896, %v2897
        %v2901 = vshrl.u32 %v2816, 16
        %v2903 = vrot.slane %v2901, 7
        %v2904 = vshll.u32 %v2816, 16
        %v2906 = vor.u32 %v2903, %v2904
        %v2908 = vshrl.u32 %v2817, 16
        %v2910 = vrot.slane %v2908, 7
        %v2911 = vshll.u32 %v2817, 16
        %v2913 = vor.u32 %v2910, %v2911
        %v2915 = vshrl.u32 %v2818, 16
        %v2917 = vrot.slane %v2915, 7
        %v2918 = vshll.u32 %v2818, 16
        %v2920 = vor.u32 %v2917, %v2918
        %v2922 = vshrl.u32 %v2819, 16
        %v2924 = vrot.slane %v2922, 7
        %v2925 = vshll.u32 %v2819, 16
        %v2927 = vor.u32 %v2924, %v2925
        %v2929 = vshrl.u32 %v2820, 16
        %v2931 = vrot.slane %v2929, 7
        %v2932 = vshll.u32 %v2820, 16
        %v2934 = vor.u32 %v2931, %v2932
        %v2936 = vshrl.u32 %v2821, 16
        %v2938 = vrot.slane %v2936, 7
        %v2939 = vshll.u32 %v2821, 16
        %v2941 = vor.u32 %v2938, %v2939
        %v2943 = vshrl.u32 %v2822, 16
        %v2945 = vrot.slane %v2943, 7
        %v2946 = vshll.u32 %v2822, 16
        %v2948 = vor.u32 %v2945, %v2946
        %v2967 = vsel %vm757, 0, %v2829
        %v2968 = vsel %vm757, 0, %v2836
        %v2969 = vsel %vm757, 0, %v2843
        %v2970 = vsel %vm757, 0, %v2850
        %v2971 = vsel %vm757, 0, %v2857
        %v2972 = vsel %vm757, 0, %v2864
        %v2973 = vsel %vm757, 0, %v2871
        %v2974 = vsel %vm757, 0, %v2878
        %v2975 = vsel %vm757, 0, %v2885
        %v2976 = vsel %vm757, 0, %v2892
        %v2977 = vsel %vm757, 0, %v2899
        %v2978 = vsel %vm757, 0, %v2906
        %v2979 = vsel %vm757, 0, %v2913
        %v2980 = vsel %vm757, 0, %v2920
        %v2981 = vsel %vm757, 0, %v2927
        %v2982 = vsel %vm757, 0, %v2934
        %v2983 = vsel %vm757, 0, %v2941
        %v2984 = vsel %vm757, 0, %v2948
        %v2985 = vrot.slane %v2827, 1
        %v2986 = vor.u32 %v2824, %v2985
        %v2987 = vrot.slane %v2834, 1
        %v2988 = vor.u32 %v2831, %v2987
        %v2989 = vrot.slane %v2841, 1
        %v2990 = vor.u32 %v2838, %v2989
        %v2991 = vrot.slane %v2848, 1
        %v2992 = vor.u32 %v2845, %v2991
        %v2993 = vrot.slane %v2855, 1
        %v2994 = vor.u32 %v2852, %v2993
        %v2995 = vrot.slane %v2862, 1
        %v2996 = vor.u32 %v2859, %v2995
        %v2997 = vrot.slane %v2869, 1
        %v2998 = vor.u32 %v2866, %v2997
        %v2999 = vrot.slane %v2876, 1
        %v3000 = vor.u32 %v2873, %v2999
        %v3001 = vrot.slane %v2883, 1
        %v3002 = vor.u32 %v2880, %v3001
        %v3003 = vrot.slane %v2890, 1
        %v3004 = vor.u32 %v2887, %v3003
        %v3005 = vrot.slane %v2897, 1
        %v3006 = vor.u32 %v2894, %v3005
        %v3007 = vrot.slane %v2904, 1
        %v3008 = vor.u32 %v2901, %v3007
        %v3009 = vrot.slane %v2911, 1
        %v3010 = vor.u32 %v2908, %v3009
        %v3011 = vrot.slane %v2918, 1
        %v3012 = vor.u32 %v2915, %v3011
        %v3013 = vrot.slane %v2925, 1
        %v3014 = vor.u32 %v2922, %v3013
        %v3015 = vrot.slane %v2932, 1
        %v3016 = vor.u32 %v2929, %v3015
        %v3017 = vrot.slane %v2939, 1
        %v3018 = vor.u32 %v2936, %v3017
        %v3019 = vrot.slane %v2946, 1
        %v3020 = vor.u32 %v2943, %v3019
        %v3039 = vsel %vm840, %v2986, 0
        %v3040 = vsel %vm840, %v2988, 0
        %v3041 = vsel %vm840, %v2990, 0
        %v3042 = vsel %vm840, %v2992, 0
        %v3043 = vsel %vm840, %v2994, 0
        %v3044 = vsel %vm840, %v2996, 0
        %v3045 = vsel %vm840, %v2998, 0
        %v3046 = vsel %vm840, %v3000, 0
        %v3047 = vsel %vm840, %v3002, 0
        %v3048 = vsel %vm840, %v3004, 0
        %v3049 = vsel %vm840, %v3006, 0
        %v3050 = vsel %vm840, %v3008, 0
        %v3051 = vsel %vm840, %v3010, 0
        %v3052 = vsel %vm840, %v3012, 0
        %v3053 = vsel %vm840, %v3014, 0
        %v3054 = vsel %vm840, %v3016, 0
        %v3055 = vsel %vm840, %v3018, 0
        %v3056 = vsel %vm840, %v3020, 0
        %v3057 = vld [vmem:[#allocation10] sm:$0xf]
        %v3058 = vld [vmem:[#allocation10 + $0x4] sm:$0xf]
        %v3059 = vld [vmem:[#allocation10 + $0x8] sm:$0xf]
        %v3060 = vld [vmem:[#allocation10 + $0xc] sm:$0xf]
        %v3061 = vld [vmem:[#allocation10 + $0x10] sm:$0xf]
        %v3062 = vld [vmem:[#allocation10 + $0x14] sm:$0xf]
        %v3063 = vld [vmem:[#allocation10 + $0x18] sm:$0xf]
        %v3064 = vld [vmem:[#allocation10 + $0x1c] sm:$0xf]
        %v3065 = vld [vmem:[#allocation10 + $0x20] sm:$0xf]
        %v3066 = vld [vmem:[#allocation10 + $0x24] sm:$0xf]
        %v3067 = vld [vmem:[#allocation10 + $0x28] sm:$0xf]
        %v3068 = vld [vmem:[#allocation10 + $0x2c] sm:$0xf]
        %v3069 = vld [vmem:[#allocation10 + $0x30] sm:$0xf]
        %v3070 = vld [vmem:[#allocation10 + $0x34] sm:$0xf]
        %v3071 = vld [vmem:[#allocation10 + $0x38] sm:$0xf]
        %v3072 = vld [vmem:[#allocation10 + $0x3c] sm:$0xf]
        %v3073 = vld [vmem:[#allocation10 + $0x40] sm:$0xf]
        %v3074 = vld [vmem:[#allocation10 + $0x44] sm:$0xf]
        %v3075 = vld [vmem:[#allocation10 + $0x48] sm:$0xf]
        %v3076 = vld [vmem:[#allocation10 + $0x4c] sm:$0xf]
        %v3077 = vld [vmem:[#allocation10 + $0x50] sm:$0xf]
        %v3078 = vld [vmem:[#allocation10 + $0x54] sm:$0xf]
        %v3079 = vld [vmem:[#allocation10 + $0x58] sm:$0xf]
        %v3080 = vld [vmem:[#allocation10 + $0x5c] sm:$0xf]
        %v3081 = vld [vmem:[#allocation10 + $0x60] sm:$0xf]
        %v3082 = vld [vmem:[#allocation10 + $0x64] sm:$0xf]
        %v3083 = vld [vmem:[#allocation10 + $0x68] sm:$0xf]
        %v3084 = vld [vmem:[#allocation10 + $0x6c] sm:$0xf]
        %v3085 = vld [vmem:[#allocation10 + $0x70] sm:$0xf]
        %v3086 = vld [vmem:[#allocation10 + $0x74] sm:$0xf]
        %v3087 = vld [vmem:[#allocation10 + $0x78] sm:$0xf]
        %v3088 = vld [vmem:[#allocation10 + $0x7c] sm:$0xf]
        %v3089 = vld [vmem:[#allocation10 + $0x80] sm:$0xf]
        %v3090 = vld [vmem:[#allocation10 + $0x84] sm:$0xf]
        %v3091 = vld [vmem:[#allocation10 + $0x88] sm:$0xf]
        %v3092 = vld [vmem:[#allocation10 + $0x8c] sm:$0xf]
        %v3093 = vld [vmem:[#allocation10 + $0x90] sm:$0xf]
        %v3094 = vld [vmem:[#allocation10 + $0x94] sm:$0xf]
        %v3095 = vld [vmem:[#allocation10 + $0x98] sm:$0xf]
        %v3096 = vld [vmem:[#allocation10 + $0x9c] sm:$0xf]
        %v3097 = vld [vmem:[#allocation10 + $0xa0] sm:$0xf]
        %v3098 = vld [vmem:[#allocation10 + $0xa4] sm:$0xf]
        %v3099 = vld [vmem:[#allocation10 + $0xa8] sm:$0xf]
        %v3100 = vld [vmem:[#allocation10 + $0xac] sm:$0xf]
        %v3101 = vld [vmem:[#allocation10 + $0xb0] sm:$0xf]
        %v3102 = vld [vmem:[#allocation10 + $0xb4] sm:$0xf]
        %v3103 = vld [vmem:[#allocation10 + $0xb8] sm:$0xf]
        %v3104 = vld [vmem:[#allocation10 + $0xbc] sm:$0xf]
        %s3105 = scalar_lea.vmem [#allocation10], 192
        %v3106 = vld [vmem:[%s3105] sm:$0xf]
        %v3107 = vld [vmem:[%s3105 + $0x4] sm:$0xf]
        %v3108 = vld [vmem:[%s3105 + $0x8] sm:$0xf]
        %v3109 = vld [vmem:[%s3105 + $0xc] sm:$0xf]
        %v3110 = vld [vmem:[%s3105 + $0x10] sm:$0xf]
        %v3111 = vld [vmem:[%s3105 + $0x14] sm:$0xf]
        %v3112 = vld [vmem:[%s3105 + $0x18] sm:$0xf]
        %v3113 = vld [vmem:[%s3105 + $0x1c] sm:$0xf]
        %v3114 = vld [vmem:[%s3105 + $0x20] sm:$0xf]
        %v3115 = vld [vmem:[%s3105 + $0x24] sm:$0xf]
        %v3116 = vld [vmem:[%s3105 + $0x28] sm:$0xf]
        %v3117 = vld [vmem:[%s3105 + $0x2c] sm:$0xf]
        %v3118 = vld [vmem:[%s3105 + $0x30] sm:$0xf]
        %v3119 = vld [vmem:[%s3105 + $0x34] sm:$0xf]
        %v3120 = vld [vmem:[%s3105 + $0x38] sm:$0xf]
        %v3121 = vld [vmem:[%s3105 + $0x3c] sm:$0xf]
        %v3122 = vld [vmem:[%s3105 + $0x40] sm:$0xf]
        %v3123 = vld [vmem:[%s3105 + $0x44] sm:$0xf]
        %v3124 = vld [vmem:[%s3105 + $0x48] sm:$0xf]
        %v3125 = vld [vmem:[%s3105 + $0x4c] sm:$0xf]
        %v3126 = vld [vmem:[%s3105 + $0x50] sm:$0xf]
        %v3127 = vld [vmem:[%s3105 + $0x54] sm:$0xf]
        %v3128 = vld [vmem:[%s3105 + $0x58] sm:$0xf]
        %v3129 = vld [vmem:[%s3105 + $0x5c] sm:$0xf]
        %v3130 = vld [vmem:[%s3105 + $0x60] sm:$0xf]
        %v3131 = vld [vmem:[%s3105 + $0x64] sm:$0xf]
        %v3132 = vld [vmem:[%s3105 + $0x68] sm:$0xf]
        %v3133 = vld [vmem:[%s3105 + $0x6c] sm:$0xf]
        %v3134 = vld [vmem:[%s3105 + $0x70] sm:$0xf]
        %v3135 = vld [vmem:[%s3105 + $0x74] sm:$0xf]
        %v3136 = vld [vmem:[%s3105 + $0x78] sm:$0xf]
        %v3137 = vld [vmem:[%s3105 + $0x7c] sm:$0xf]
        %v3138 = vld [vmem:[%s3105 + $0x80] sm:$0xf]
        %v3139 = vld [vmem:[%s3105 + $0x84] sm:$0xf]
        %v3140 = vld [vmem:[%s3105 + $0x88] sm:$0xf]
        %v3141 = vld [vmem:[%s3105 + $0x8c] sm:$0xf]
        %v3142 = vld [vmem:[%s3105 + $0x90] sm:$0xf]
        %v3143 = vld [vmem:[%s3105 + $0x94] sm:$0xf]
        %v3144 = vld [vmem:[%s3105 + $0x98] sm:$0xf]
        %v3145 = vld [vmem:[%s3105 + $0x9c] sm:$0xf]
        %v3146 = vld [vmem:[%s3105 + $0xa0] sm:$0xf]
        %v3147 = vld [vmem:[%s3105 + $0xa4] sm:$0xf]
        %v3148 = vld [vmem:[%s3105 + $0xa8] sm:$0xf]
        %v3149 = vld [vmem:[%s3105 + $0xac] sm:$0xf]
        %v3150 = vld [vmem:[%s3105 + $0xb0] sm:$0xf]
        %v3151 = vld [vmem:[%s3105 + $0xb4] sm:$0xf]
        %v3152 = vld [vmem:[%s3105 + $0xb8] sm:$0xf]
        %v3153 = vld [vmem:[%s3105 + $0xbc] sm:$0xf]
        %v3202 = vunpack.c.l.b16 %v3106
        %v3203 = vunpack.c.l.b16 %v3107
        %v3204 = vunpack.c.l.b16 %v3108
        %v3205 = vunpack.c.l.b16 %v3109
        %v3206 = vunpack.c.l.b16 %v3110
        %v3207 = vunpack.c.l.b16 %v3111
        %v3208 = vunpack.c.l.b16 %v3112
        %v3209 = vunpack.c.l.b16 %v3113
        %v3210 = vunpack.c.l.b16 %v3114
        %v3211 = vunpack.c.l.b16 %v3115
        %v3212 = vunpack.c.l.b16 %v3116
        %v3213 = vunpack.c.l.b16 %v3117
        %v3214 = vunpack.c.l.b16 %v3118
        %v3215 = vunpack.c.l.b16 %v3119
        %v3216 = vunpack.c.l.b16 %v3120
        %v3217 = vunpack.c.l.b16 %v3121
        %v3218 = vunpack.c.l.b16 %v3122
        %v3219 = vunpack.c.l.b16 %v3123
        %v3220 = vunpack.c.l.b16 %v3124
        %v3221 = vunpack.c.l.b16 %v3125
        %v3222 = vunpack.c.l.b16 %v3126
        %v3223 = vunpack.c.l.b16 %v3127
        %v3224 = vunpack.c.l.b16 %v3128
        %v3225 = vunpack.c.l.b16 %v3129
        %v3226 = vunpack.c.l.b16 %v3130
        %v3227 = vunpack.c.l.b16 %v3131
        %v3228 = vunpack.c.l.b16 %v3132
        %v3229 = vunpack.c.l.b16 %v3133
        %v3230 = vunpack.c.l.b16 %v3134
        %v3231 = vunpack.c.l.b16 %v3135
        %v3232 = vunpack.c.l.b16 %v3136
        %v3233 = vunpack.c.l.b16 %v3137
        %v3234 = vunpack.c.l.b16 %v3138
        %v3235 = vunpack.c.l.b16 %v3139
        %v3236 = vunpack.c.l.b16 %v3140
        %v3237 = vunpack.c.l.b16 %v3141
        %v3238 = vunpack.c.l.b16 %v3142
        %v3239 = vunpack.c.l.b16 %v3143
        %v3240 = vunpack.c.l.b16 %v3144
        %v3241 = vunpack.c.l.b16 %v3145
        %v3242 = vunpack.c.l.b16 %v3146
        %v3243 = vunpack.c.l.b16 %v3147
        %v3244 = vunpack.c.l.b16 %v3148
        %v3245 = vunpack.c.l.b16 %v3149
        %v3246 = vunpack.c.l.b16 %v3150
        %v3247 = vunpack.c.l.b16 %v3151
        %v3248 = vunpack.c.l.b16 %v3152
        %v3249 = vunpack.c.l.b16 %v3153
        %v3250 = vpack.c.b16 %v3203, %v3202
        %v3251 = vpack.c.b16 %v3205, %v3204
        %v3252 = vpack.c.b16 %v3207, %v3206
        %v3253 = vpack.c.b16 %v3209, %v3208
        %v3254 = vpack.c.b16 %v3211, %v3210
        %v3255 = vpack.c.b16 %v3213, %v3212
        %v3256 = vpack.c.b16 %v3215, %v3214
        %v3257 = vpack.c.b16 %v3217, %v3216
        %v3258 = vpack.c.b16 %v3219, %v3218
        %v3259 = vpack.c.b16 %v3221, %v3220
        %v3260 = vpack.c.b16 %v3223, %v3222
        %v3261 = vpack.c.b16 %v3225, %v3224
        %v3262 = vpack.c.b16 %v3227, %v3226
        %v3263 = vpack.c.b16 %v3229, %v3228
        %v3264 = vpack.c.b16 %v3231, %v3230
        %v3265 = vpack.c.b16 %v3233, %v3232
        %v3266 = vpack.c.b16 %v3235, %v3234
        %v3267 = vpack.c.b16 %v3237, %v3236
        %v3268 = vpack.c.b16 %v3239, %v3238
        %v3269 = vpack.c.b16 %v3241, %v3240
        %v3270 = vpack.c.b16 %v3243, %v3242
        %v3271 = vpack.c.b16 %v3245, %v3244
        %v3272 = vpack.c.b16 %v3247, %v3246
        %v3273 = vpack.c.b16 %v3249, %v3248
        %3298 = vmatprep.subr.bf16.mxu0 0
        %3299 = vmatpush1.bf16.msra.mxu0 %v3250
        %3300 = vmatprep.subr.bf16.mxu0 0
        %3301 = vmatpush1.bf16.msra.mxu0 %v3251
        %3302 = vmatprep.subr.bf16.mxu0 0
        %3303 = vmatpush1.bf16.msra.mxu0 %v3252
        %3304 = vmatprep.subr.bf16.mxu0 0
        %3305 = vmatpush1.bf16.msra.mxu0 %v3253
        %3306 = vmatprep.subr.bf16.mxu0 0
        %3307 = vmatpush1.bf16.msra.mxu0 %v3254
        %3308 = vmatprep.subr.bf16.mxu0 0
        %3309 = vmatpush1.bf16.msra.mxu0 %v3255
        %3310 = vmatprep.subr.bf16.mxu0 0
        %3311 = vmatpush1.bf16.msra.mxu0 %v3256
        %3312 = vmatprep.subr.bf16.mxu0 0
        %3313 = vmatpush1.bf16.msra.mxu0 %v3257
        %3314 = vmatprep.subr.bf16.mxu0 0
        %3315 = vmatpush1.bf16.msra.mxu0 %v3258
        %3316 = vmatprep.subr.bf16.mxu0 0
        %3317 = vmatpush1.bf16.msra.mxu0 %v3259
        %3318 = vmatprep.subr.bf16.mxu0 0
        %3319 = vmatpush1.bf16.msra.mxu0 %v3260
        %3320 = vmatprep.subr.bf16.mxu0 0
        %3321 = vmatpush1.bf16.msra.mxu0 %v3261
        %3322 = vmatprep.subr.bf16.mxu0 0
        %3323 = vmatpush1.bf16.msra.mxu0 %v3262
        %3324 = vmatprep.subr.bf16.mxu0 0
        %3325 = vmatpush1.bf16.msra.mxu0 %v3263
        %3326 = vmatprep.subr.bf16.mxu0 0
        %3327 = vmatpush1.bf16.msra.mxu0 %v3264
        %3328 = vmatprep.subr.bf16.mxu0 0
        %3329 = vmatpush1.bf16.msra.mxu0 %v3265
        %3330 = vmatprep.mubr.bf16.mxu0 %v2806
        %3331 = vmatmul.mubr.bf16.gmra.mrb[0].mxu0 %v2968
        %v3332 = vpop.f32.mrb[0].mxu0
        %v3333 = vadd.f32 0.0, %v3332
        %v3334 = vpop.f32.mrb[0].mxu0
        %v3335 = vpop.f32.mrb[0].mxu0
        %v3336 = vadd.f32 0.0, %v3335
        %v3337 = vpop.f32.mrb[0].mxu0
        %3338 = vmatprep.mubr.bf16.mxu0 %v2807
        %3339 = vmatmul.mubr.bf16.gmra.mrb[0].mxu0 %v2969
        %v3340 = vpop.f32.mrb[0].mxu0
        %v3341 = vadd.f32 0.0, %v3340
        %v3342 = vpop.f32.mrb[0].mxu0
        %v3343 = vpop.f32.mrb[0].mxu0
        %v3344 = vadd.f32 0.0, %v3343
        %v3345 = vpop.f32.mrb[0].mxu0
        %3346 = vmatprep.mubr.bf16.mxu0 %v2808
        %3347 = vmatmul.mubr.bf16.gmra.mrb[0].mxu0 %v2970
        %v3348 = vpop.f32.mrb[0].mxu0
        %v3349 = vadd.f32 0.0, %v3348
        %v3350 = vpop.f32.mrb[0].mxu0
        %v3351 = vpop.f32.mrb[0].mxu0
        %v3352 = vadd.f32 0.0, %v3351
        %v3353 = vpop.f32.mrb[0].mxu0
        %3354 = vmatprep.mubr.bf16.mxu0 %v2809
        %3355 = vmatmul.mubr.bf16.gmra.mrb[0].mxu0 %v2971
        %v3356 = vpop.f32.mrb[0].mxu0
        %v3357 = vadd.f32 0.0, %v3356
        %v3358 = vpop.f32.mrb[0].mxu0
        %v3359 = vpop.f32.mrb[0].mxu0
        %v3360 = vadd.f32 0.0, %v3359
        %v3361 = vpop.f32.mrb[0].mxu0
        %3362 = vmatprep.mubr.bf16.mxu0 %v2810
        %3363 = vmatmul.mubr.bf16.gmra.mrb[0].mxu0 %v2972
        %v3364 = vpop.f32.mrb[0].mxu0
        %v3365 = vadd.f32 0.0, %v3364
        %v3366 = vpop.f32.mrb[0].mxu0
        %v3367 = vpop.f32.mrb[0].mxu0
        %v3368 = vadd.f32 0.0, %v3367
        %v3369 = vpop.f32.mrb[0].mxu0
        %3370 = vmatprep.mubr.bf16.mxu0 %v2811
        %3371 = vmatmul.mubr.bf16.gmra.mrb[0].mxu0 %v2973
        %v3372 = vpop.f32.mrb[0].mxu0
        %v3373 = vadd.f32 0.0, %v3372
        %v3374 = vpop.f32.mrb[0].mxu0
        %v3375 = vpop.f32.mrb[0].mxu0
        %v3376 = vadd.f32 0.0, %v3375
        %v3377 = vpop.f32.mrb[0].mxu0
        %3378 = vmatprep.mubr.bf16.mxu0 %v2812
        %3379 = vmatmul.mubr.bf16.gmra.mrb[0].mxu0 %v2974
        %v3380 = vpop.f32.mrb[0].mxu0
        %v3381 = vadd.f32 0.0, %v3380
        %v3382 = vpop.f32.mrb[0].mxu0
        %v3383 = vpop.f32.mrb[0].mxu0
        %v3384 = vadd.f32 0.0, %v3383
        %v3385 = vpop.f32.mrb[0].mxu0
        %3386 = vmatprep.mubr.bf16.mxu0 %v2813
        %3387 = vmatmul.mubr.bf16.gmra.mrb[0].mxu0 %v2975
        %v3388 = vpop.f32.mrb[0].mxu0
        %v3389 = vadd.f32 0.0, %v3388
        %v3390 = vpop.f32.mrb[0].mxu0
        %v3391 = vpop.f32.mrb[0].mxu0
        %v3392 = vadd.f32 0.0, %v3391
        %v3393 = vpop.f32.mrb[0].mxu0
        %3394 = vmatprep.mubr.bf16.mxu0 %v2814
        %3395 = vmatmul.mubr.bf16.gmra.mrb[0].mxu0 %v2976
        %v3396 = vpop.f32.mrb[0].mxu0
        %v3397 = vadd.f32 0.0, %v3396
        %v3398 = vpop.f32.mrb[0].mxu0
        %v3399 = vpop.f32.mrb[0].mxu0
        %v3400 = vadd.f32 0.0, %v3399
        %v3401 = vpop.f32.mrb[0].mxu0
        %3402 = vmatprep.mubr.bf16.mxu0 %v2815
        %3403 = vmatmul.mubr.bf16.gmra.mrb[0].mxu0 %v2977
        %v3404 = vpop.f32.mrb[0].mxu0
        %v3405 = vadd.f32 0.0, %v3404
        %v3406 = vpop.f32.mrb[0].mxu0
        %v3407 = vpop.f32.mrb[0].mxu0
        %v3408 = vadd.f32 0.0, %v3407
        %v3409 = vpop.f32.mrb[0].mxu0
        %3410 = vmatprep.mubr.bf16.mxu0 %v2816
        %3411 = vmatmul.mubr.bf16.gmra.mrb[0].mxu0 %v2978
        %v3412 = vpop.f32.mrb[0].mxu0
        %v3413 = vadd.f32 0.0, %v3412
        %v3414 = vpop.f32.mrb[0].mxu0
        %v3415 = vpop.f32.mrb[0].mxu0
        %v3416 = vadd.f32 0.0, %v3415
        %v3417 = vpop.f32.mrb[0].mxu0
        %3418 = vmatprep.mubr.bf16.mxu0 %v2817
        %3419 = vmatmul.mubr.bf16.gmra.mrb[0].mxu0 %v2979
        %v3420 = vpop.f32.mrb[0].mxu0
        %v3421 = vadd.f32 0.0, %v3420
        %v3422 = vpop.f32.mrb[0].mxu0
        %v3423 = vpop.f32.mrb[0].mxu0
        %v3424 = vadd.f32 0.0, %v3423
        %v3425 = vpop.f32.mrb[0].mxu0
        %3426 = vmatprep.mubr.bf16.mxu0 %v2818
        %3427 = vmatmul.mubr.bf16.gmra.mrb[0].mxu0 %v2980
        %v3428 = vpop.f32.mrb[0].mxu0
        %v3429 = vadd.f32 0.0, %v3428
        %v3430 = vpop.f32.mrb[0].mxu0
        %v3431 = vpop.f32.mrb[0].mxu0
        %v3432 = vadd.f32 0.0, %v3431
        %v3433 = vpop.f32.mrb[0].mxu0
        %3434 = vmatprep.mubr.bf16.mxu0 %v2819
        %3435 = vmatmul.mubr.bf16.gmra.mrb[0].mxu0 %v2981
        %v3436 = vpop.f32.mrb[0].mxu0
        %v3437 = vadd.f32 0.0, %v3436
        %v3438 = vpop.f32.mrb[0].mxu0
        %v3439 = vpop.f32.mrb[0].mxu0
        %v3440 = vadd.f32 0.0, %v3439
        %v3441 = vpop.f32.mrb[0].mxu0
        %3442 = vmatprep.mubr.bf16.mxu0 %v2820
        %3443 = vmatmul.mubr.bf16.gmra.mrb[0].mxu0 %v2982
        %v3444 = vpop.f32.mrb[0].mxu0
        %v3445 = vadd.f32 0.0, %v3444
        %v3446 = vpop.f32.mrb[0].mxu0
        %v3447 = vpop.f32.mrb[0].mxu0
        %v3448 = vadd.f32 0.0, %v3447
        %v3449 = vpop.f32.mrb[0].mxu0
        %3450 = vmatprep.mubr.bf16.mxu0 %v2821
        %3451 = vmatmul.mubr.bf16.gmra.mrb[0].mxu0 %v2983
        %v3452 = vpop.f32.mrb[0].mxu0
        %v3453 = vadd.f32 0.0, %v3452
        %v3454 = vpop.f32.mrb[0].mxu0
        %v3455 = vpop.f32.mrb[0].mxu0
        %v3456 = vadd.f32 0.0, %v3455
        %v3457 = vpop.f32.mrb[0].mxu0
        %3458 = vdwg.mxu0
        %3459 = vmatprep.subr.bf16.mxu0 0
        %3460 = vmatpush1.bf16.msra.mxu0 %v3266
        %3461 = vmatprep.subr.bf16.mxu0 0
        %3462 = vmatpush1.bf16.msra.mxu0 %v3267
        %3463 = vmatprep.subr.bf16.mxu0 0
        %3464 = vmatpush1.bf16.msra.mxu0 %v3268
        %3465 = vmatprep.subr.bf16.mxu0 0
        %3466 = vmatpush1.bf16.msra.mxu0 %v3269
        %3467 = vmatprep.subr.bf16.mxu0 0
        %3468 = vmatpush1.bf16.msra.mxu0 %v3270
        %3469 = vmatprep.subr.bf16.mxu0 0
        %3470 = vmatpush1.bf16.msra.mxu0 %v3271
        %3471 = vmatprep.subr.bf16.mxu0 0
        %3472 = vmatpush1.bf16.msra.mxu0 %v3272
        %3473 = vmatprep.subr.bf16.mxu0 0
        %3474 = vmatpush1.bf16.msra.mxu0 %v3273
        %3475 = vmatprep.subr.bf16.mxu0 0
        %3476 = vmatpush1.bf16.msra.mxu0 0
        %3477 = vmatprep.subr.bf16.mxu0 0
        %3478 = vmatpush1.bf16.msra.mxu0 0
        %3479 = vmatprep.subr.bf16.mxu0 0
        %3480 = vmatpush1.bf16.msra.mxu0 0
        %3481 = vmatprep.subr.bf16.mxu0 0
        %3482 = vmatpush1.bf16.msra.mxu0 0
        %3483 = vmatprep.subr.bf16.mxu0 0
        %3484 = vmatpush1.bf16.msra.mxu0 0
        %3485 = vmatprep.subr.bf16.mxu0 0
        %3486 = vmatpush1.bf16.msra.mxu0 0
        %3487 = vmatprep.subr.bf16.mxu0 0
        %3488 = vmatpush1.bf16.msra.mxu0 0
        %3489 = vmatprep.subr.bf16.mxu0 0
        %3490 = vmatpush1.bf16.msra.mxu0 0
        %3491 = vmatprep.mubr.bf16.mxu0 0
        %3492 = vmatmul.mubr.bf16.gmra.mrb[0].mxu0 %v3040
        %v3493 = vpop.f32.mrb[0].mxu0
        %v3494 = vadd.f32 %v3333, %v3493
        %v3495 = vpop.f32.mrb[0].mxu0
        %v3496 = vpop.f32.mrb[0].mxu0
        %v3497 = vadd.f32 %v3336, %v3496
        %v3498 = vpop.f32.mrb[0].mxu0
        %3499 = vmatprep.mubr.bf16.mxu0 0
        %3500 = vmatmul.mubr.bf16.gmra.mrb[0].mxu0 %v3041
        %v3501 = vpop.f32.mrb[0].mxu0
        %v3502 = vadd.f32 %v3341, %v3501
        %v3503 = vpop.f32.mrb[0].mxu0
        %v3504 = vpop.f32.mrb[0].mxu0
        %v3505 = vadd.f32 %v3344, %v3504
        %v3506 = vpop.f32.mrb[0].mxu0
        %3507 = vmatprep.mubr.bf16.mxu0 0
        %3508 = vmatmul.mubr.bf16.gmra.mrb[0].mxu0 %v3042
        %v3509 = vpop.f32.mrb[0].mxu0
        %v3510 = vadd.f32 %v3349, %v3509
        %v3511 = vpop.f32.mrb[0].mxu0
        %v3512 = vpop.f32.mrb[0].mxu0
        %v3513 = vadd.f32 %v3352, %v3512
        %v3514 = vpop.f32.mrb[0].mxu0
        %3515 = vmatprep.mubr.bf16.mxu0 0
        %3516 = vmatmul.mubr.bf16.gmra.mrb[0].mxu0 %v3043
        %v3517 = vpop.f32.mrb[0].mxu0
        %v3518 = vadd.f32 %v3357, %v3517
        %v3519 = vpop.f32.mrb[0].mxu0
        %v3520 = vpop.f32.mrb[0].mxu0
        %v3521 = vadd.f32 %v3360, %v3520
        %v3522 = vpop.f32.mrb[0].mxu0
        %3523 = vmatprep.mubr.bf16.mxu0 0
        %3524 = vmatmul.mubr.bf16.gmra.mrb[0].mxu0 %v3044
        %v3525 = vpop.f32.mrb[0].mxu0
        %v3526 = vadd.f32 %v3365, %v3525
        %v3527 = vpop.f32.mrb[0].mxu0
        %v3528 = vpop.f32.mrb[0].mxu0
        %v3529 = vadd.f32 %v3368, %v3528
        %v3530 = vpop.f32.mrb[0].mxu0
        %3531 = vmatprep.mubr.bf16.mxu0 0
        %3532 = vmatmul.mubr.bf16.gmra.mrb[0].mxu0 %v3045
        %v3533 = vpop.f32.mrb[0].mxu0
        %v3534 = vadd.f32 %v3373, %v3533
        %v3535 = vpop.f32.mrb[0].mxu0
        %v3536 = vpop.f32.mrb[0].mxu0
        %v3537 = vadd.f32 %v3376, %v3536
        %v3538 = vpop.f32.mrb[0].mxu0
        %3539 = vmatprep.mubr.bf16.mxu0 0
        %3540 = vmatmul.mubr.bf16.gmra.mrb[0].mxu0 %v3046
        %v3541 = vpop.f32.mrb[0].mxu0
        %v3542 = vadd.f32 %v3381, %v3541
        %v3543 = vpop.f32.mrb[0].mxu0
        %v3544 = vpop.f32.mrb[0].mxu0
        %v3545 = vadd.f32 %v3384, %v3544
        %v3546 = vpop.f32.mrb[0].mxu0
        %3547 = vmatprep.mubr.bf16.mxu0 0
        %3548 = vmatmul.mubr.bf16.gmra.mrb[0].mxu0 %v3047
        %v3549 = vpop.f32.mrb[0].mxu0
        %v3550 = vadd.f32 %v3389, %v3549
        %v3551 = vpop.f32.mrb[0].mxu0
        %v3552 = vpop.f32.mrb[0].mxu0
        %v3553 = vadd.f32 %v3392, %v3552
        %v3554 = vpop.f32.mrb[0].mxu0
        %3555 = vmatprep.mubr.bf16.mxu0 0
        %3556 = vmatmul.mubr.bf16.gmra.mrb[0].mxu0 %v3048
        %v3557 = vpop.f32.mrb[0].mxu0
        %v3558 = vadd.f32 %v3397, %v3557
        %v3559 = vpop.f32.mrb[0].mxu0
        %v3560 = vpop.f32.mrb[0].mxu0
        %v3561 = vadd.f32 %v3400, %v3560
        %v3562 = vpop.f32.mrb[0].mxu0
        %3563 = vmatprep.mubr.bf16.mxu0 0
        %3564 = vmatmul.mubr.bf16.gmra.mrb[0].mxu0 %v3049
        %v3565 = vpop.f32.mrb[0].mxu0
        %v3566 = vadd.f32 %v3405, %v3565
        %v3567 = vpop.f32.mrb[0].mxu0
        %v3568 = vpop.f32.mrb[0].mxu0
        %v3569 = vadd.f32 %v3408, %v3568
        %v3570 = vpop.f32.mrb[0].mxu0
        %3571 = vmatprep.mubr.bf16.mxu0 0
        %3572 = vmatmul.mubr.bf16.gmra.mrb[0].mxu0 %v3050
        %v3573 = vpop.f32.mrb[0].mxu0
        %v3574 = vadd.f32 %v3413, %v3573
        %v3575 = vpop.f32.mrb[0].mxu0
        %v3576 = vpop.f32.mrb[0].mxu0
        %v3577 = vadd.f32 %v3416, %v3576
        %v3578 = vpop.f32.mrb[0].mxu0
        %3579 = vmatprep.mubr.bf16.mxu0 0
        %3580 = vmatmul.mubr.bf16.gmra.mrb[0].mxu0 %v3051
        %v3581 = vpop.f32.mrb[0].mxu0
        %v3582 = vadd.f32 %v3421, %v3581
        %v3583 = vpop.f32.mrb[0].mxu0
        %v3584 = vpop.f32.mrb[0].mxu0
        %v3585 = vadd.f32 %v3424, %v3584
        %v3586 = vpop.f32.mrb[0].mxu0
        %3587 = vmatprep.mubr.bf16.mxu0 0
        %3588 = vmatmul.mubr.bf16.gmra.mrb[0].mxu0 %v3052
        %v3589 = vpop.f32.mrb[0].mxu0
        %v3590 = vadd.f32 %v3429, %v3589
        %v3591 = vpop.f32.mrb[0].mxu0
        %v3592 = vpop.f32.mrb[0].mxu0
        %v3593 = vadd.f32 %v3432, %v3592
        %v3594 = vpop.f32.mrb[0].mxu0
        %3595 = vmatprep.mubr.bf16.mxu0 0
        %3596 = vmatmul.mubr.bf16.gmra.mrb[0].mxu0 %v3053
        %v3597 = vpop.f32.mrb[0].mxu0
        %v3598 = vadd.f32 %v3437, %v3597
        %v3599 = vpop.f32.mrb[0].mxu0
        %v3600 = vpop.f32.mrb[0].mxu0
        %v3601 = vadd.f32 %v3440, %v3600
        %v3602 = vpop.f32.mrb[0].mxu0
        %3603 = vmatprep.mubr.bf16.mxu0 0
        %3604 = vmatmul.mubr.bf16.gmra.mrb[0].mxu0 %v3054
        %v3605 = vpop.f32.mrb[0].mxu0
        %v3606 = vadd.f32 %v3445, %v3605
        %v3607 = vpop.f32.mrb[0].mxu0
        %v3608 = vpop.f32.mrb[0].mxu0
        %v3609 = vadd.f32 %v3448, %v3608
        %v3610 = vpop.f32.mrb[0].mxu0
        %3611 = vmatprep.mubr.bf16.mxu0 0
        %3612 = vmatmul.mubr.bf16.gmra.mrb[0].mxu0 %v3055
        %v3613 = vpop.f32.mrb[0].mxu0
        %v3614 = vadd.f32 %v3453, %v3613
        %v3615 = vpop.f32.mrb[0].mxu0
        %v3616 = vpop.f32.mrb[0].mxu0
        %v3617 = vadd.f32 %v3456, %v3616
        %v3618 = vpop.f32.mrb[0].mxu0
        %3619 = vdwg.mxu0
        %v3668 = vunpack.c.l.b16 %v3057
        %v3669 = vunpack.c.l.b16 %v3058
        %v3670 = vunpack.c.l.b16 %v3059
        %v3671 = vunpack.c.l.b16 %v3060
        %v3672 = vunpack.c.l.b16 %v3061
        %v3673 = vunpack.c.l.b16 %v3062
        %v3674 = vunpack.c.l.b16 %v3063
        %v3675 = vunpack.c.l.b16 %v3064
        %v3676 = vunpack.c.l.b16 %v3065
        %v3677 = vunpack.c.l.b16 %v3066
        %v3678 = vunpack.c.l.b16 %v3067
        %v3679 = vunpack.c.l.b16 %v3068
        %v3680 = vunpack.c.l.b16 %v3069
        %v3681 = vunpack.c.l.b16 %v3070
        %v3682 = vunpack.c.l.b16 %v3071
        %v3683 = vunpack.c.l.b16 %v3072
        %v3684 = vunpack.c.l.b16 %v3073
        %v3685 = vunpack.c.l.b16 %v3074
        %v3686 = vunpack.c.l.b16 %v3075
        %v3687 = vunpack.c.l.b16 %v3076
        %v3688 = vunpack.c.l.b16 %v3077
        %v3689 = vunpack.c.l.b16 %v3078
        %v3690 = vunpack.c.l.b16 %v3079
        %v3691 = vunpack.c.l.b16 %v3080
        %v3692 = vunpack.c.l.b16 %v3081
        %v3693 = vunpack.c.l.b16 %v3082
        %v3694 = vunpack.c.l.b16 %v3083
        %v3695 = vunpack.c.l.b16 %v3084
        %v3696 = vunpack.c.l.b16 %v3085
        %v3697 = vunpack.c.l.b16 %v3086
        %v3698 = vunpack.c.l.b16 %v3087
        %v3699 = vunpack.c.l.b16 %v3088
        %v3700 = vunpack.c.l.b16 %v3089
        %v3701 = vunpack.c.l.b16 %v3090
        %v3702 = vunpack.c.l.b16 %v3091
        %v3703 = vunpack.c.l.b16 %v3092
        %v3704 = vunpack.c.l.b16 %v3093
        %v3705 = vunpack.c.l.b16 %v3094
        %v3706 = vunpack.c.l.b16 %v3095
        %v3707 = vunpack.c.l.b16 %v3096
        %v3708 = vunpack.c.l.b16 %v3097
        %v3709 = vunpack.c.l.b16 %v3098
        %v3710 = vunpack.c.l.b16 %v3099
        %v3711 = vunpack.c.l.b16 %v3100
        %v3712 = vunpack.c.l.b16 %v3101
        %v3713 = vunpack.c.l.b16 %v3102
        %v3714 = vunpack.c.l.b16 %v3103
        %v3715 = vunpack.c.l.b16 %v3104
        %v3716 = vpack.c.b16 %v3669, %v3668
        %v3717 = vpack.c.b16 %v3671, %v3670
        %v3718 = vpack.c.b16 %v3673, %v3672
        %v3719 = vpack.c.b16 %v3675, %v3674
        %v3720 = vpack.c.b16 %v3677, %v3676
        %v3721 = vpack.c.b16 %v3679, %v3678
        %v3722 = vpack.c.b16 %v3681, %v3680
        %v3723 = vpack.c.b16 %v3683, %v3682
        %v3724 = vpack.c.b16 %v3685, %v3684
        %v3725 = vpack.c.b16 %v3687, %v3686
        %v3726 = vpack.c.b16 %v3689, %v3688
        %v3727 = vpack.c.b16 %v3691, %v3690
        %v3728 = vpack.c.b16 %v3693, %v3692
        %v3729 = vpack.c.b16 %v3695, %v3694
        %v3730 = vpack.c.b16 %v3697, %v3696
        %v3731 = vpack.c.b16 %v3699, %v3698
        %v3732 = vpack.c.b16 %v3701, %v3700
        %v3733 = vpack.c.b16 %v3703, %v3702
        %v3734 = vpack.c.b16 %v3705, %v3704
        %v3735 = vpack.c.b16 %v3707, %v3706
        %v3736 = vpack.c.b16 %v3709, %v3708
        %v3737 = vpack.c.b16 %v3711, %v3710
        %v3738 = vpack.c.b16 %v3713, %v3712
        %v3739 = vpack.c.b16 %v3715, %v3714
        %3764 = vmatprep.subr.bf16.mxu0 0
        %3765 = vmatpush1.bf16.msra.mxu0 %v3716
        %3766 = vmatprep.subr.bf16.mxu0 0
        %3767 = vmatpush1.bf16.msra.mxu0 %v3717
        %3768 = vmatprep.subr.bf16.mxu0 0
        %3769 = vmatpush1.bf16.msra.mxu0 %v3718
        %3770 = vmatprep.subr.bf16.mxu0 0
        %3771 = vmatpush1.bf16.msra.mxu0 %v3719
        %3772 = vmatprep.subr.bf16.mxu0 0
        %3773 = vmatpush1.bf16.msra.mxu0 %v3720
        %3774 = vmatprep.subr.bf16.mxu0 0
        %3775 = vmatpush1.bf16.msra.mxu0 %v3721
        %3776 = vmatprep.subr.bf16.mxu0 0
        %3777 = vmatpush1.bf16.msra.mxu0 %v3722
        %3778 = vmatprep.subr.bf16.mxu0 0
        %3779 = vmatpush1.bf16.msra.mxu0 %v3723
        %3780 = vmatprep.subr.bf16.mxu0 0
        %3781 = vmatpush1.bf16.msra.mxu0 %v3724
        %3782 = vmatprep.subr.bf16.mxu0 0
        %3783 = vmatpush1.bf16.msra.mxu0 %v3725
        %3784 = vmatprep.subr.bf16.mxu0 0
        %3785 = vmatpush1.bf16.msra.mxu0 %v3726
        %3786 = vmatprep.subr.bf16.mxu0 0
        %3787 = vmatpush1.bf16.msra.mxu0 %v3727
        %3788 = vmatprep.subr.bf16.mxu0 0
        %3789 = vmatpush1.bf16.msra.mxu0 %v3728
        %3790 = vmatprep.subr.bf16.mxu0 0
        %3791 = vmatpush1.bf16.msra.mxu0 %v3729
        %3792 = vmatprep.subr.bf16.mxu0 0
        %3793 = vmatpush1.bf16.msra.mxu0 %v3730
        %3794 = vmatprep.subr.bf16.mxu0 0
        %3795 = vmatpush1.bf16.msra.mxu0 %v3731
        %3796 = vmatprep.mubr.bf16.mxu0 %v2805
        %3797 = vmatmul.mubr.bf16.gmra.mrb[0].mxu0 %v2967
        %v3798 = vpop.f32.mrb[0].mxu0
        %v3799 = vadd.f32 %v3494, %v3798
        %v3800 = vpop.f32.mrb[0].mxu0
        %v3801 = vpop.f32.mrb[0].mxu0
        %v3802 = vadd.f32 %v3497, %v3801
        %v3803 = vpop.f32.mrb[0].mxu0
        %3804 = vmatprep.mubr.bf16.mxu0 %v2806
        %3805 = vmatmul.mubr.bf16.gmra.mrb[0].mxu0 %v2968
        %v3806 = vpop.f32.mrb[0].mxu0
        %v3807 = vadd.f32 %v3502, %v3806
        %v3808 = vpop.f32.mrb[0].mxu0
        %v3809 = vpop.f32.mrb[0].mxu0
        %v3810 = vadd.f32 %v3505, %v3809
        %v3811 = vpop.f32.mrb[0].mxu0
        %3812 = vmatprep.mubr.bf16.mxu0 %v2807
        %3813 = vmatmul.mubr.bf16.gmra.mrb[0].mxu0 %v2969
        %v3814 = vpop.f32.mrb[0].mxu0
        %v3815 = vadd.f32 %v3510, %v3814
        %v3816 = vpop.f32.mrb[0].mxu0
        %v3817 = vpop.f32.mrb[0].mxu0
        %v3818 = vadd.f32 %v3513, %v3817
        %v3819 = vpop.f32.mrb[0].mxu0
        %3820 = vmatprep.mubr.bf16.mxu0 %v2808
        %3821 = vmatmul.mubr.bf16.gmra.mrb[0].mxu0 %v2970
        %v3822 = vpop.f32.mrb[0].mxu0
        %v3823 = vadd.f32 %v3518, %v3822
        %v3824 = vpop.f32.mrb[0].mxu0
        %v3825 = vpop.f32.mrb[0].mxu0
        %v3826 = vadd.f32 %v3521, %v3825
        %v3827 = vpop.f32.mrb[0].mxu0
        %3828 = vmatprep.mubr.bf16.mxu0 %v2809
        %3829 = vmatmul.mubr.bf16.gmra.mrb[0].mxu0 %v2971
        %v3830 = vpop.f32.mrb[0].mxu0
        %v3831 = vadd.f32 %v3526, %v3830
        %v3832 = vpop.f32.mrb[0].mxu0
        %v3833 = vpop.f32.mrb[0].mxu0
        %v3834 = vadd.f32 %v3529, %v3833
        %v3835 = vpop.f32.mrb[0].mxu0
        %3836 = vmatprep.mubr.bf16.mxu0 %v2810
        %3837 = vmatmul.mubr.bf16.gmra.mrb[0].mxu0 %v2972
        %v3838 = vpop.f32.mrb[0].mxu0
        %v3839 = vadd.f32 %v3534, %v3838
        %v3840 = vpop.f32.mrb[0].mxu0
        %v3841 = vpop.f32.mrb[0].mxu0
        %v3842 = vadd.f32 %v3537, %v3841
        %v3843 = vpop.f32.mrb[0].mxu0
        %3844 = vmatprep.mubr.bf16.mxu0 %v2811
        %3845 = vmatmul.mubr.bf16.gmra.mrb[0].mxu0 %v2973
        %v3846 = vpop.f32.mrb[0].mxu0
        %v3847 = vadd.f32 %v3542, %v3846
        %v3848 = vpop.f32.mrb[0].mxu0
        %v3849 = vpop.f32.mrb[0].mxu0
        %v3850 = vadd.f32 %v3545, %v3849
        %v3851 = vpop.f32.mrb[0].mxu0
        %3852 = vmatprep.mubr.bf16.mxu0 %v2812
        %3853 = vmatmul.mubr.bf16.gmra.mrb[0].mxu0 %v2974
        %v3854 = vpop.f32.mrb[0].mxu0
        %v3855 = vadd.f32 %v3550, %v3854
        %v3856 = vpop.f32.mrb[0].mxu0
        %v3857 = vpop.f32.mrb[0].mxu0
        %v3858 = vadd.f32 %v3553, %v3857
        %v3859 = vpop.f32.mrb[0].mxu0
        %3860 = vmatprep.mubr.bf16.mxu0 %v2813
        %3861 = vmatmul.mubr.bf16.gmra.mrb[0].mxu0 %v2975
        %v3862 = vpop.f32.mrb[0].mxu0
        %v3863 = vadd.f32 %v3558, %v3862
        %v3864 = vpop.f32.mrb[0].mxu0
        %v3865 = vpop.f32.mrb[0].mxu0
        %v3866 = vadd.f32 %v3561, %v3865
        %v3867 = vpop.f32.mrb[0].mxu0
        %3868 = vmatprep.mubr.bf16.mxu0 %v2814
        %3869 = vmatmul.mubr.bf16.gmra.mrb[0].mxu0 %v2976
        %v3870 = vpop.f32.mrb[0].mxu0
        %v3871 = vadd.f32 %v3566, %v3870
        %v3872 = vpop.f32.mrb[0].mxu0
        %v3873 = vpop.f32.mrb[0].mxu0
        %v3874 = vadd.f32 %v3569, %v3873
        %v3875 = vpop.f32.mrb[0].mxu0
        %3876 = vmatprep.mubr.bf16.mxu0 %v2815
        %3877 = vmatmul.mubr.bf16.gmra.mrb[0].mxu0 %v2977
        %v3878 = vpop.f32.mrb[0].mxu0
        %v3879 = vadd.f32 %v3574, %v3878
        %v3880 = vpop.f32.mrb[0].mxu0
        %v3881 = vpop.f32.mrb[0].mxu0
        %v3882 = vadd.f32 %v3577, %v3881
        %v3883 = vpop.f32.mrb[0].mxu0
        %3884 = vmatprep.mubr.bf16.mxu0 %v2816
        %3885 = vmatmul.mubr.bf16.gmra.mrb[0].mxu0 %v2978
        %v3886 = vpop.f32.mrb[0].mxu0
        %v3887 = vadd.f32 %v3582, %v3886
        %v3888 = vpop.f32.mrb[0].mxu0
        %v3889 = vpop.f32.mrb[0].mxu0
        %v3890 = vadd.f32 %v3585, %v3889
        %v3891 = vpop.f32.mrb[0].mxu0
        %3892 = vmatprep.mubr.bf16.mxu0 %v2817
        %3893 = vmatmul.mubr.bf16.gmra.mrb[0].mxu0 %v2979
        %v3894 = vpop.f32.mrb[0].mxu0
        %v3895 = vadd.f32 %v3590, %v3894
        %v3896 = vpop.f32.mrb[0].mxu0
        %v3897 = vpop.f32.mrb[0].mxu0
        %v3898 = vadd.f32 %v3593, %v3897
        %v3899 = vpop.f32.mrb[0].mxu0
        %3900 = vmatprep.mubr.bf16.mxu0 %v2818
        %3901 = vmatmul.mubr.bf16.gmra.mrb[0].mxu0 %v2980
        %v3902 = vpop.f32.mrb[0].mxu0
        %v3903 = vadd.f32 %v3598, %v3902
        %v3904 = vpop.f32.mrb[0].mxu0
        %v3905 = vpop.f32.mrb[0].mxu0
        %v3906 = vadd.f32 %v3601, %v3905
        %v3907 = vpop.f32.mrb[0].mxu0
        %3908 = vmatprep.mubr.bf16.mxu0 %v2819
        %3909 = vmatmul.mubr.bf16.gmra.mrb[0].mxu0 %v2981
        %v3910 = vpop.f32.mrb[0].mxu0
        %v3911 = vadd.f32 %v3606, %v3910
        %v3912 = vpop.f32.mrb[0].mxu0
        %v3913 = vpop.f32.mrb[0].mxu0
        %v3914 = vadd.f32 %v3609, %v3913
        %v3915 = vpop.f32.mrb[0].mxu0
        %3916 = vmatprep.mubr.bf16.mxu0 %v2820
        %3917 = vmatmul.mubr.bf16.gmra.mrb[0].mxu0 %v2982
        %v3918 = vpop.f32.mrb[0].mxu0
        %v3919 = vadd.f32 %v3614, %v3918
        %v3920 = vpop.f32.mrb[0].mxu0
        %v3921 = vpop.f32.mrb[0].mxu0
        %v3922 = vadd.f32 %v3617, %v3921
        %v3923 = vpop.f32.mrb[0].mxu0
        %3924 = vdwg.mxu0
        %3925 = vmatprep.subr.bf16.mxu0 0
        %3926 = vmatpush1.bf16.msra.mxu0 %v3732
        %3927 = vmatprep.subr.bf16.mxu0 0
        %3928 = vmatpush1.bf16.msra.mxu0 %v3733
        %3929 = vmatprep.subr.bf16.mxu0 0
        %3930 = vmatpush1.bf16.msra.mxu0 %v3734
        %3931 = vmatprep.subr.bf16.mxu0 0
        %3932 = vmatpush1.bf16.msra.mxu0 %v3735
        %3933 = vmatprep.subr.bf16.mxu0 0
        %3934 = vmatpush1.bf16.msra.mxu0 %v3736
        %3935 = vmatprep.subr.bf16.mxu0 0
        %3936 = vmatpush1.bf16.msra.mxu0 %v3737
        %3937 = vmatprep.subr.bf16.mxu0 0
        %3938 = vmatpush1.bf16.msra.mxu0 %v3738
        %3939 = vmatprep.subr.bf16.mxu0 0
        %3940 = vmatpush1.bf16.msra.mxu0 %v3739
        %3941 = vmatprep.subr.bf16.mxu0 0
        %3942 = vmatpush1.bf16.msra.mxu0 0
        %3943 = vmatprep.subr.bf16.mxu0 0
        %3944 = vmatpush1.bf16.msra.mxu0 0
        %3945 = vmatprep.subr.bf16.mxu0 0
        %3946 = vmatpush1.bf16.msra.mxu0 0
        %3947 = vmatprep.subr.bf16.mxu0 0
        %3948 = vmatpush1.bf16.msra.mxu0 0
        %3949 = vmatprep.subr.bf16.mxu0 0
        %3950 = vmatpush1.bf16.msra.mxu0 0
        %3951 = vmatprep.subr.bf16.mxu0 0
        %3952 = vmatpush1.bf16.msra.mxu0 0
        %3953 = vmatprep.subr.bf16.mxu0 0
        %3954 = vmatpush1.bf16.msra.mxu0 0
        %3955 = vmatprep.subr.bf16.mxu0 0
        %3956 = vmatpush1.bf16.msra.mxu0 0
        %3957 = vmatprep.mubr.bf16.mxu0 0
        %3958 = vmatmul.mubr.bf16.gmra.mrb[0].mxu0 %v3039
        %v3959 = vpop.f32.mrb[0].mxu0
        %v3960 = vadd.f32 %v3799, %v3959
        %v3961 = vpop.f32.mrb[0].mxu0
        %v3962 = vpop.f32.mrb[0].mxu0
        %v3963 = vadd.f32 %v3802, %v3962
        %v3964 = vpop.f32.mrb[0].mxu0
        %3965 = vmatprep.mubr.bf16.mxu0 0
        %3966 = vmatmul.mubr.bf16.gmra.mrb[0].mxu0 %v3040
        %v3967 = vpop.f32.mrb[0].mxu0
        %v3968 = vadd.f32 %v3807, %v3967
        %v3969 = vpop.f32.mrb[0].mxu0
        %v3970 = vpop.f32.mrb[0].mxu0
        %v3971 = vadd.f32 %v3810, %v3970
        %v3972 = vpop.f32.mrb[0].mxu0
        %3973 = vmatprep.mubr.bf16.mxu0 0
        %3974 = vmatmul.mubr.bf16.gmra.mrb[0].mxu0 %v3041
        %v3975 = vpop.f32.mrb[0].mxu0
        %v3976 = vadd.f32 %v3815, %v3975
        %v3977 = vpop.f32.mrb[0].mxu0
        %v3978 = vpop.f32.mrb[0].mxu0
        %v3979 = vadd.f32 %v3818, %v3978
        %v3980 = vpop.f32.mrb[0].mxu0
        %3981 = vmatprep.mubr.bf16.mxu0 0
        %3982 = vmatmul.mubr.bf16.gmra.mrb[0].mxu0 %v3042
        %v3983 = vpop.f32.mrb[0].mxu0
        %v3984 = vadd.f32 %v3823, %v3983
        %v3985 = vpop.f32.mrb[0].mxu0
        %v3986 = vpop.f32.mrb[0].mxu0
        %v3987 = vadd.f32 %v3826, %v3986
        %v3988 = vpop.f32.mrb[0].mxu0
        %3989 = vmatprep.mubr.bf16.mxu0 0
        %3990 = vmatmul.mubr.bf16.gmra.mrb[0].mxu0 %v3043
        %v3991 = vpop.f32.mrb[0].mxu0
        %v3992 = vadd.f32 %v3831, %v3991
        %v3993 = vpop.f32.mrb[0].mxu0
        %v3994 = vpop.f32.mrb[0].mxu0
        %v3995 = vadd.f32 %v3834, %v3994
        %v3996 = vpop.f32.mrb[0].mxu0
        %3997 = vmatprep.mubr.bf16.mxu0 0
        %3998 = vmatmul.mubr.bf16.gmra.mrb[0].mxu0 %v3044
        %v3999 = vpop.f32.mrb[0].mxu0
        %v4000 = vadd.f32 %v3839, %v3999
        %v4001 = vpop.f32.mrb[0].mxu0
        %v4002 = vpop.f32.mrb[0].mxu0
        %v4003 = vadd.f32 %v3842, %v4002
        %v4004 = vpop.f32.mrb[0].mxu0
        %4005 = vmatprep.mubr.bf16.mxu0 0
        %4006 = vmatmul.mubr.bf16.gmra.mrb[0].mxu0 %v3045
        %v4007 = vpop.f32.mrb[0].mxu0
        %v4008 = vadd.f32 %v3847, %v4007
        %v4009 = vpop.f32.mrb[0].mxu0
        %v4010 = vpop.f32.mrb[0].mxu0
        %v4011 = vadd.f32 %v3850, %v4010
        %v4012 = vpop.f32.mrb[0].mxu0
        %4013 = vmatprep.mubr.bf16.mxu0 0
        %4014 = vmatmul.mubr.bf16.gmra.mrb[0].mxu0 %v3046
        %v4015 = vpop.f32.mrb[0].mxu0
        %v4016 = vadd.f32 %v3855, %v4015
        %v4017 = vpop.f32.mrb[0].mxu0
        %v4018 = vpop.f32.mrb[0].mxu0
        %v4019 = vadd.f32 %v3858, %v4018
        %v4020 = vpop.f32.mrb[0].mxu0
        %4021 = vmatprep.mubr.bf16.mxu0 0
        %4022 = vmatmul.mubr.bf16.gmra.mrb[0].mxu0 %v3047
        %v4023 = vpop.f32.mrb[0].mxu0
        %v4024 = vadd.f32 %v3863, %v4023
        %v4025 = vpop.f32.mrb[0].mxu0
        %v4026 = vpop.f32.mrb[0].mxu0
        %v4027 = vadd.f32 %v3866, %v4026
        %v4028 = vpop.f32.mrb[0].mxu0
        %4029 = vmatprep.mubr.bf16.mxu0 0
        %4030 = vmatmul.mubr.bf16.gmra.mrb[0].mxu0 %v3048
        %v4031 = vpop.f32.mrb[0].mxu0
        %v4032 = vadd.f32 %v3871, %v4031
        %v4033 = vpop.f32.mrb[0].mxu0
        %v4034 = vpop.f32.mrb[0].mxu0
        %v4035 = vadd.f32 %v3874, %v4034
        %v4036 = vpop.f32.mrb[0].mxu0
        %4037 = vmatprep.mubr.bf16.mxu0 0
        %4038 = vmatmul.mubr.bf16.gmra.mrb[0].mxu0 %v3049
        %v4039 = vpop.f32.mrb[0].mxu0
        %v4040 = vadd.f32 %v3879, %v4039
        %v4041 = vpop.f32.mrb[0].mxu0
        %v4042 = vpop.f32.mrb[0].mxu0
        %v4043 = vadd.f32 %v3882, %v4042
        %v4044 = vpop.f32.mrb[0].mxu0
        %4045 = vmatprep.mubr.bf16.mxu0 0
        %4046 = vmatmul.mubr.bf16.gmra.mrb[0].mxu0 %v3050
        %v4047 = vpop.f32.mrb[0].mxu0
        %v4048 = vadd.f32 %v3887, %v4047
        %v4049 = vpop.f32.mrb[0].mxu0
        %v4050 = vpop.f32.mrb[0].mxu0
        %v4051 = vadd.f32 %v3890, %v4050
        %v4052 = vpop.f32.mrb[0].mxu0
        %4053 = vmatprep.mubr.bf16.mxu0 0
        %4054 = vmatmul.mubr.bf16.gmra.mrb[0].mxu0 %v3051
        %v4055 = vpop.f32.mrb[0].mxu0
        %v4056 = vadd.f32 %v3895, %v4055
        %v4057 = vpop.f32.mrb[0].mxu0
        %v4058 = vpop.f32.mrb[0].mxu0
        %v4059 = vadd.f32 %v3898, %v4058
        %v4060 = vpop.f32.mrb[0].mxu0
        %4061 = vmatprep.mubr.bf16.mxu0 0
        %4062 = vmatmul.mubr.bf16.gmra.mrb[0].mxu0 %v3052
        %v4063 = vpop.f32.mrb[0].mxu0
        %v4064 = vadd.f32 %v3903, %v4063
        %v4065 = vpop.f32.mrb[0].mxu0
        %v4066 = vpop.f32.mrb[0].mxu0
        %v4067 = vadd.f32 %v3906, %v4066
        %v4068 = vpop.f32.mrb[0].mxu0
        %4069 = vmatprep.mubr.bf16.mxu0 0
        %4070 = vmatmul.mubr.bf16.gmra.mrb[0].mxu0 %v3053
        %v4071 = vpop.f32.mrb[0].mxu0
        %v4072 = vadd.f32 %v3911, %v4071
        %v4073 = vpop.f32.mrb[0].mxu0
        %v4074 = vpop.f32.mrb[0].mxu0
        %v4075 = vadd.f32 %v3914, %v4074
        %v4076 = vpop.f32.mrb[0].mxu0
        %4077 = vmatprep.mubr.bf16.mxu0 0
        %4078 = vmatmul.mubr.bf16.gmra.mrb[0].mxu0 %v3054
        %v4079 = vpop.f32.mrb[0].mxu0
        %v4080 = vadd.f32 %v3919, %v4079
        %v4081 = vpop.f32.mrb[0].mxu0
        %v4082 = vpop.f32.mrb[0].mxu0
        %v4083 = vadd.f32 %v3922, %v4082
        %v4084 = vpop.f32.mrb[0].mxu0
        %4085 = vdwg.mxu0
        %s4086 = scalar_lea.vmem [#allocation10], 384
        %v4087 = vld [vmem:[%s4086] sm:$0xf]
        %v4088 = vld [vmem:[%s4086 + $0x4] sm:$0xf]
        %v4089 = vld [vmem:[%s4086 + $0x8] sm:$0xf]
        %v4090 = vld [vmem:[%s4086 + $0xc] sm:$0xf]
        %v4091 = vld [vmem:[%s4086 + $0x10] sm:$0xf]
        %v4092 = vld [vmem:[%s4086 + $0x14] sm:$0xf]
        %v4093 = vld [vmem:[%s4086 + $0x18] sm:$0xf]
        %v4094 = vld [vmem:[%s4086 + $0x1c] sm:$0xf]
        %v4095 = vld [vmem:[%s4086 + $0x20] sm:$0xf]
        %v4096 = vld [vmem:[%s4086 + $0x24] sm:$0xf]
        %v4097 = vld [vmem:[%s4086 + $0x28] sm:$0xf]
        %v4098 = vld [vmem:[%s4086 + $0x2c] sm:$0xf]
        %v4099 = vld [vmem:[%s4086 + $0x30] sm:$0xf]
        %v4100 = vld [vmem:[%s4086 + $0x34] sm:$0xf]
        %v4101 = vld [vmem:[%s4086 + $0x38] sm:$0xf]
        %v4102 = vld [vmem:[%s4086 + $0x3c] sm:$0xf]
        %v4103 = vld [vmem:[%s4086 + $0x40] sm:$0xf]
        %v4104 = vld [vmem:[%s4086 + $0x44] sm:$0xf]
        %v4105 = vld [vmem:[%s4086 + $0x48] sm:$0xf]
        %v4106 = vld [vmem:[%s4086 + $0x4c] sm:$0xf]
        %v4107 = vld [vmem:[%s4086 + $0x50] sm:$0xf]
        %v4108 = vld [vmem:[%s4086 + $0x54] sm:$0xf]
        %v4109 = vld [vmem:[%s4086 + $0x58] sm:$0xf]
        %v4110 = vld [vmem:[%s4086 + $0x5c] sm:$0xf]
        %v4111 = vld [vmem:[%s4086 + $0x60] sm:$0xf]
        %v4112 = vld [vmem:[%s4086 + $0x64] sm:$0xf]
        %v4113 = vld [vmem:[%s4086 + $0x68] sm:$0xf]
        %v4114 = vld [vmem:[%s4086 + $0x6c] sm:$0xf]
        %v4115 = vld [vmem:[%s4086 + $0x70] sm:$0xf]
        %v4116 = vld [vmem:[%s4086 + $0x74] sm:$0xf]
        %v4117 = vld [vmem:[%s4086 + $0x78] sm:$0xf]
        %v4118 = vld [vmem:[%s4086 + $0x7c] sm:$0xf]
        %v4119 = vld [vmem:[%s4086 + $0x80] sm:$0xf]
        %v4120 = vld [vmem:[%s4086 + $0x84] sm:$0xf]
        %v4121 = vld [vmem:[%s4086 + $0x88] sm:$0xf]
        %v4122 = vld [vmem:[%s4086 + $0x8c] sm:$0xf]
        %v4123 = vld [vmem:[%s4086 + $0x90] sm:$0xf]
        %v4124 = vld [vmem:[%s4086 + $0x94] sm:$0xf]
        %v4125 = vld [vmem:[%s4086 + $0x98] sm:$0xf]
        %v4126 = vld [vmem:[%s4086 + $0x9c] sm:$0xf]
        %v4127 = vld [vmem:[%s4086 + $0xa0] sm:$0xf]
        %v4128 = vld [vmem:[%s4086 + $0xa4] sm:$0xf]
        %v4129 = vld [vmem:[%s4086 + $0xa8] sm:$0xf]
        %v4130 = vld [vmem:[%s4086 + $0xac] sm:$0xf]
        %v4131 = vld [vmem:[%s4086 + $0xb0] sm:$0xf]
        %v4132 = vld [vmem:[%s4086 + $0xb4] sm:$0xf]
        %v4133 = vld [vmem:[%s4086 + $0xb8] sm:$0xf]
        %v4134 = vld [vmem:[%s4086 + $0xbc] sm:$0xf]
        %v4183 = vunpack.c.l.b16 %v4087
        %v4184 = vunpack.c.l.b16 %v4088
        %v4185 = vunpack.c.l.b16 %v4089
        %v4186 = vunpack.c.l.b16 %v4090
        %v4187 = vunpack.c.l.b16 %v4091
        %v4188 = vunpack.c.l.b16 %v4092
        %v4189 = vunpack.c.l.b16 %v4093
        %v4190 = vunpack.c.l.b16 %v4094
        %v4191 = vunpack.c.l.b16 %v4095
        %v4192 = vunpack.c.l.b16 %v4096
        %v4193 = vunpack.c.l.b16 %v4097
        %v4194 = vunpack.c.l.b16 %v4098
        %v4195 = vunpack.c.l.b16 %v4099
        %v4196 = vunpack.c.l.b16 %v4100
        %v4197 = vunpack.c.l.b16 %v4101
        %v4198 = vunpack.c.l.b16 %v4102
        %v4199 = vunpack.c.l.b16 %v4103
        %v4200 = vunpack.c.l.b16 %v4104
        %v4201 = vunpack.c.l.b16 %v4105
        %v4202 = vunpack.c.l.b16 %v4106
        %v4203 = vunpack.c.l.b16 %v4107
        %v4204 = vunpack.c.l.b16 %v4108
        %v4205 = vunpack.c.l.b16 %v4109
        %v4206 = vunpack.c.l.b16 %v4110
        %v4207 = vunpack.c.l.b16 %v4111
        %v4208 = vunpack.c.l.b16 %v4112
        %v4209 = vunpack.c.l.b16 %v4113
        %v4210 = vunpack.c.l.b16 %v4114
        %v4211 = vunpack.c.l.b16 %v4115
        %v4212 = vunpack.c.l.b16 %v4116
        %v4213 = vunpack.c.l.b16 %v4117
        %v4214 = vunpack.c.l.b16 %v4118
        %v4215 = vunpack.c.l.b16 %v4119
        %v4216 = vunpack.c.l.b16 %v4120
        %v4217 = vunpack.c.l.b16 %v4121
        %v4218 = vunpack.c.l.b16 %v4122
        %v4219 = vunpack.c.l.b16 %v4123
        %v4220 = vunpack.c.l.b16 %v4124
        %v4221 = vunpack.c.l.b16 %v4125
        %v4222 = vunpack.c.l.b16 %v4126
        %v4223 = vunpack.c.l.b16 %v4127
        %v4224 = vunpack.c.l.b16 %v4128
        %v4225 = vunpack.c.l.b16 %v4129
        %v4226 = vunpack.c.l.b16 %v4130
        %v4227 = vunpack.c.l.b16 %v4131
        %v4228 = vunpack.c.l.b16 %v4132
        %v4229 = vunpack.c.l.b16 %v4133
        %v4230 = vunpack.c.l.b16 %v4134
        %v4231 = vpack.c.b16 %v4184, %v4183
        %v4232 = vpack.c.b16 %v4186, %v4185
        %v4233 = vpack.c.b16 %v4188, %v4187
        %v4234 = vpack.c.b16 %v4190, %v4189
        %v4235 = vpack.c.b16 %v4192, %v4191
        %v4236 = vpack.c.b16 %v4194, %v4193
        %v4237 = vpack.c.b16 %v4196, %v4195
        %v4238 = vpack.c.b16 %v4198, %v4197
        %v4239 = vpack.c.b16 %v4200, %v4199
        %v4240 = vpack.c.b16 %v4202, %v4201
        %v4241 = vpack.c.b16 %v4204, %v4203
        %v4242 = vpack.c.b16 %v4206, %v4205
        %v4243 = vpack.c.b16 %v4208, %v4207
        %v4244 = vpack.c.b16 %v4210, %v4209
        %v4245 = vpack.c.b16 %v4212, %v4211
        %v4246 = vpack.c.b16 %v4214, %v4213
        %v4247 = vpack.c.b16 %v4216, %v4215
        %v4248 = vpack.c.b16 %v4218, %v4217
        %v4249 = vpack.c.b16 %v4220, %v4219
        %v4250 = vpack.c.b16 %v4222, %v4221
        %v4251 = vpack.c.b16 %v4224, %v4223
        %v4252 = vpack.c.b16 %v4226, %v4225
        %v4253 = vpack.c.b16 %v4228, %v4227
        %v4254 = vpack.c.b16 %v4230, %v4229
        %4279 = vmatprep.subr.bf16.mxu0 0
        %4280 = vmatpush1.bf16.msra.mxu0 %v4231
        %4281 = vmatprep.subr.bf16.mxu0 0
        %4282 = vmatpush1.bf16.msra.mxu0 %v4232
        %4283 = vmatprep.subr.bf16.mxu0 0
        %4284 = vmatpush1.bf16.msra.mxu0 %v4233
        %4285 = vmatprep.subr.bf16.mxu0 0
        %4286 = vmatpush1.bf16.msra.mxu0 %v4234
        %4287 = vmatprep.subr.bf16.mxu0 0
        %4288 = vmatpush1.bf16.msra.mxu0 %v4235
        %4289 = vmatprep.subr.bf16.mxu0 0
        %4290 = vmatpush1.bf16.msra.mxu0 %v4236
        %4291 = vmatprep.subr.bf16.mxu0 0
        %4292 = vmatpush1.bf16.msra.mxu0 %v4237
        %4293 = vmatprep.subr.bf16.mxu0 0
        %4294 = vmatpush1.bf16.msra.mxu0 %v4238
        %4295 = vmatprep.subr.bf16.mxu0 0
        %4296 = vmatpush1.bf16.msra.mxu0 %v4239
        %4297 = vmatprep.subr.bf16.mxu0 0
        %4298 = vmatpush1.bf16.msra.mxu0 %v4240
        %4299 = vmatprep.subr.bf16.mxu0 0
        %4300 = vmatpush1.bf16.msra.mxu0 %v4241
        %4301 = vmatprep.subr.bf16.mxu0 0
        %4302 = vmatpush1.bf16.msra.mxu0 %v4242
        %4303 = vmatprep.subr.bf16.mxu0 0
        %4304 = vmatpush1.bf16.msra.mxu0 %v4243
        %4305 = vmatprep.subr.bf16.mxu0 0
        %4306 = vmatpush1.bf16.msra.mxu0 %v4244
        %4307 = vmatprep.subr.bf16.mxu0 0
        %4308 = vmatpush1.bf16.msra.mxu0 %v4245
        %4309 = vmatprep.subr.bf16.mxu0 0
        %4310 = vmatpush1.bf16.msra.mxu0 %v4246
        %4311 = vmatprep.mubr.bf16.mxu0 %v2807
        %4312 = vmatmul.mubr.bf16.gmra.mrb[0].mxu0 %v2969
        %v4313 = vpop.f32.mrb[0].mxu0
        %v4314 = vadd.f32 0.0, %v4313
        %v4315 = vpop.f32.mrb[0].mxu0
        %v4316 = vpop.f32.mrb[0].mxu0
        %v4317 = vadd.f32 0.0, %v4316
        %v4318 = vpop.f32.mrb[0].mxu0
        %4319 = vmatprep.mubr.bf16.mxu0 %v2808
        %4320 = vmatmul.mubr.bf16.gmra.mrb[0].mxu0 %v2970
        %v4321 = vpop.f32.mrb[0].mxu0
        %v4322 = vadd.f32 0.0, %v4321
        %v4323 = vpop.f32.mrb[0].mxu0
        %v4324 = vpop.f32.mrb[0].mxu0
        %v4325 = vadd.f32 0.0, %v4324
        %v4326 = vpop.f32.mrb[0].mxu0
        %4327 = vmatprep.mubr.bf16.mxu0 %v2809
        %4328 = vmatmul.mubr.bf16.gmra.mrb[0].mxu0 %v2971
        %v4329 = vpop.f32.mrb[0].mxu0
        %v4330 = vadd.f32 0.0, %v4329
        %v4331 = vpop.f32.mrb[0].mxu0
        %v4332 = vpop.f32.mrb[0].mxu0
        %v4333 = vadd.f32 0.0, %v4332
        %v4334 = vpop.f32.mrb[0].mxu0
        %4335 = vmatprep.mubr.bf16.mxu0 %v2810
        %4336 = vmatmul.mubr.bf16.gmra.mrb[0].mxu0 %v2972
        %v4337 = vpop.f32.mrb[0].mxu0
        %v4338 = vadd.f32 0.0, %v4337
        %v4339 = vpop.f32.mrb[0].mxu0
        %v4340 = vpop.f32.mrb[0].mxu0
        %v4341 = vadd.f32 0.0, %v4340
        %v4342 = vpop.f32.mrb[0].mxu0
        %4343 = vmatprep.mubr.bf16.mxu0 %v2811
        %4344 = vmatmul.mubr.bf16.gmra.mrb[0].mxu0 %v2973
        %v4345 = vpop.f32.mrb[0].mxu0
        %v4346 = vadd.f32 0.0, %v4345
        %v4347 = vpop.f32.mrb[0].mxu0
        %v4348 = vpop.f32.mrb[0].mxu0
        %v4349 = vadd.f32 0.0, %v4348
        %v4350 = vpop.f32.mrb[0].mxu0
        %4351 = vmatprep.mubr.bf16.mxu0 %v2812
        %4352 = vmatmul.mubr.bf16.gmra.mrb[0].mxu0 %v2974
        %v4353 = vpop.f32.mrb[0].mxu0
        %v4354 = vadd.f32 0.0, %v4353
        %v4355 = vpop.f32.mrb[0].mxu0
        %v4356 = vpop.f32.mrb[0].mxu0
        %v4357 = vadd.f32 0.0, %v4356
        %v4358 = vpop.f32.mrb[0].mxu0
        %4359 = vmatprep.mubr.bf16.mxu0 %v2813
        %4360 = vmatmul.mubr.bf16.gmra.mrb[0].mxu0 %v2975
        %v4361 = vpop.f32.mrb[0].mxu0
        %v4362 = vadd.f32 0.0, %v4361
        %v4363 = vpop.f32.mrb[0].mxu0
        %v4364 = vpop.f32.mrb[0].mxu0
        %v4365 = vadd.f32 0.0, %v4364
        %v4366 = vpop.f32.mrb[0].mxu0
        %4367 = vmatprep.mubr.bf16.mxu0 %v2814
        %4368 = vmatmul.mubr.bf16.gmra.mrb[0].mxu0 %v2976
        %v4369 = vpop.f32.mrb[0].mxu0
        %v4370 = vadd.f32 0.0, %v4369
        %v4371 = vpop.f32.mrb[0].mxu0
        %v4372 = vpop.f32.mrb[0].mxu0
        %v4373 = vadd.f32 0.0, %v4372
        %v4374 = vpop.f32.mrb[0].mxu0
        %4375 = vmatprep.mubr.bf16.mxu0 %v2815
        %4376 = vmatmul.mubr.bf16.gmra.mrb[0].mxu0 %v2977
        %v4377 = vpop.f32.mrb[0].mxu0
        %v4378 = vadd.f32 0.0, %v4377
        %v4379 = vpop.f32.mrb[0].mxu0
        %v4380 = vpop.f32.mrb[0].mxu0
        %v4381 = vadd.f32 0.0, %v4380
        %v4382 = vpop.f32.mrb[0].mxu0
        %4383 = vmatprep.mubr.bf16.mxu0 %v2816
        %4384 = vmatmul.mubr.bf16.gmra.mrb[0].mxu0 %v2978
        %v4385 = vpop.f32.mrb[0].mxu0
        %v4386 = vadd.f32 0.0, %v4385
        %v4387 = vpop.f32.mrb[0].mxu0
        %v4388 = vpop.f32.mrb[0].mxu0
        %v4389 = vadd.f32 0.0, %v4388
        %v4390 = vpop.f32.mrb[0].mxu0
        %4391 = vmatprep.mubr.bf16.mxu0 %v2817
        %4392 = vmatmul.mubr.bf16.gmra.mrb[0].mxu0 %v2979
        %v4393 = vpop.f32.mrb[0].mxu0
        %v4394 = vadd.f32 0.0, %v4393
        %v4395 = vpop.f32.mrb[0].mxu0
        %v4396 = vpop.f32.mrb[0].mxu0
        %v4397 = vadd.f32 0.0, %v4396
        %v4398 = vpop.f32.mrb[0].mxu0
        %4399 = vmatprep.mubr.bf16.mxu0 %v2818
        %4400 = vmatmul.mubr.bf16.gmra.mrb[0].mxu0 %v2980
        %v4401 = vpop.f32.mrb[0].mxu0
        %v4402 = vadd.f32 0.0, %v4401
        %v4403 = vpop.f32.mrb[0].mxu0
        %v4404 = vpop.f32.mrb[0].mxu0
        %v4405 = vadd.f32 0.0, %v4404
        %v4406 = vpop.f32.mrb[0].mxu0
        %4407 = vmatprep.mubr.bf16.mxu0 %v2819
        %4408 = vmatmul.mubr.bf16.gmra.mrb[0].mxu0 %v2981
        %v4409 = vpop.f32.mrb[0].mxu0
        %v4410 = vadd.f32 0.0, %v4409
        %v4411 = vpop.f32.mrb[0].mxu0
        %v4412 = vpop.f32.mrb[0].mxu0
        %v4413 = vadd.f32 0.0, %v4412
        %v4414 = vpop.f32.mrb[0].mxu0
        %4415 = vmatprep.mubr.bf16.mxu0 %v2820
        %4416 = vmatmul.mubr.bf16.gmra.mrb[0].mxu0 %v2982
        %v4417 = vpop.f32.mrb[0].mxu0
        %v4418 = vadd.f32 0.0, %v4417
        %v4419 = vpop.f32.mrb[0].mxu0
        %v4420 = vpop.f32.mrb[0].mxu0
        %v4421 = vadd.f32 0.0, %v4420
        %v4422 = vpop.f32.mrb[0].mxu0
        %4423 = vmatprep.mubr.bf16.mxu0 %v2821
        %4424 = vmatmul.mubr.bf16.gmra.mrb[0].mxu0 %v2983
        %v4425 = vpop.f32.mrb[0].mxu0
        %v4426 = vadd.f32 0.0, %v4425
        %v4427 = vpop.f32.mrb[0].mxu0
        %v4428 = vpop.f32.mrb[0].mxu0
        %v4429 = vadd.f32 0.0, %v4428
        %v4430 = vpop.f32.mrb[0].mxu0
        %4431 = vmatprep.mubr.bf16.mxu0 %v2822
        %4432 = vmatmul.mubr.bf16.gmra.mrb[0].mxu0 %v2984
        %v4433 = vpop.f32.mrb[0].mxu0
        %v4434 = vadd.f32 0.0, %v4433
        %v4435 = vpop.f32.mrb[0].mxu0
        %v4436 = vpop.f32.mrb[0].mxu0
        %v4437 = vadd.f32 0.0, %v4436
        %v4438 = vpop.f32.mrb[0].mxu0
        %4439 = vdwg.mxu0
        %4440 = vmatprep.subr.bf16.mxu0 0
        %4441 = vmatpush1.bf16.msra.mxu0 %v4247
        %4442 = vmatprep.subr.bf16.mxu0 0
        %4443 = vmatpush1.bf16.msra.mxu0 %v4248
        %4444 = vmatprep.subr.bf16.mxu0 0
        %4445 = vmatpush1.bf16.msra.mxu0 %v4249
        %4446 = vmatprep.subr.bf16.mxu0 0
        %4447 = vmatpush1.bf16.msra.mxu0 %v4250
        %4448 = vmatprep.subr.bf16.mxu0 0
        %4449 = vmatpush1.bf16.msra.mxu0 %v4251
        %4450 = vmatprep.subr.bf16.mxu0 0
        %4451 = vmatpush1.bf16.msra.mxu0 %v4252
        %4452 = vmatprep.subr.bf16.mxu0 0
        %4453 = vmatpush1.bf16.msra.mxu0 %v4253
        %4454 = vmatprep.subr.bf16.mxu0 0
        %4455 = vmatpush1.bf16.msra.mxu0 %v4254
        %4456 = vmatprep.subr.bf16.mxu0 0
        %4457 = vmatpush1.bf16.msra.mxu0 0
        %4458 = vmatprep.subr.bf16.mxu0 0
        %4459 = vmatpush1.bf16.msra.mxu0 0
        %4460 = vmatprep.subr.bf16.mxu0 0
        %4461 = vmatpush1.bf16.msra.mxu0 0
        %4462 = vmatprep.subr.bf16.mxu0 0
        %4463 = vmatpush1.bf16.msra.mxu0 0
        %4464 = vmatprep.subr.bf16.mxu0 0
        %4465 = vmatpush1.bf16.msra.mxu0 0
        %4466 = vmatprep.subr.bf16.mxu0 0
        %4467 = vmatpush1.bf16.msra.mxu0 0
        %4468 = vmatprep.subr.bf16.mxu0 0
        %4469 = vmatpush1.bf16.msra.mxu0 0
        %4470 = vmatprep.subr.bf16.mxu0 0
        %4471 = vmatpush1.bf16.msra.mxu0 0
        %4472 = vmatprep.mubr.bf16.mxu0 0
        %4473 = vmatmul.mubr.bf16.gmra.mrb[0].mxu0 %v3041
        %v4474 = vpop.f32.mrb[0].mxu0
        %v4475 = vadd.f32 %v4314, %v4474
        %v4476 = vpop.f32.mrb[0].mxu0
        %v4477 = vpop.f32.mrb[0].mxu0
        %v4478 = vadd.f32 %v4317, %v4477
        %v4479 = vpop.f32.mrb[0].mxu0
        %4480 = vmatprep.mubr.bf16.mxu0 0
        %4481 = vmatmul.mubr.bf16.gmra.mrb[0].mxu0 %v3042
        %v4482 = vpop.f32.mrb[0].mxu0
        %v4483 = vadd.f32 %v4322, %v4482
        %v4484 = vpop.f32.mrb[0].mxu0
        %v4485 = vpop.f32.mrb[0].mxu0
        %v4486 = vadd.f32 %v4325, %v4485
        %v4487 = vpop.f32.mrb[0].mxu0
        %4488 = vmatprep.mubr.bf16.mxu0 0
        %4489 = vmatmul.mubr.bf16.gmra.mrb[0].mxu0 %v3043
        %v4490 = vpop.f32.mrb[0].mxu0
        %v4491 = vadd.f32 %v4330, %v4490
        %v4492 = vpop.f32.mrb[0].mxu0
        %v4493 = vpop.f32.mrb[0].mxu0
        %v4494 = vadd.f32 %v4333, %v4493
        %v4495 = vpop.f32.mrb[0].mxu0
        %4496 = vmatprep.mubr.bf16.mxu0 0
        %4497 = vmatmul.mubr.bf16.gmra.mrb[0].mxu0 %v3044
        %v4498 = vpop.f32.mrb[0].mxu0
        %v4499 = vadd.f32 %v4338, %v4498
        %v4500 = vpop.f32.mrb[0].mxu0
        %v4501 = vpop.f32.mrb[0].mxu0
        %v4502 = vadd.f32 %v4341, %v4501
        %v4503 = vpop.f32.mrb[0].mxu0
        %4504 = vmatprep.mubr.bf16.mxu0 0
        %4505 = vmatmul.mubr.bf16.gmra.mrb[0].mxu0 %v3045
        %v4506 = vpop.f32.mrb[0].mxu0
        %v4507 = vadd.f32 %v4346, %v4506
        %v4508 = vpop.f32.mrb[0].mxu0
        %v4509 = vpop.f32.mrb[0].mxu0
        %v4510 = vadd.f32 %v4349, %v4509
        %v4511 = vpop.f32.mrb[0].mxu0
        %4512 = vmatprep.mubr.bf16.mxu0 0
        %4513 = vmatmul.mubr.bf16.gmra.mrb[0].mxu0 %v3046
        %v4514 = vpop.f32.mrb[0].mxu0
        %v4515 = vadd.f32 %v4354, %v4514
        %v4516 = vpop.f32.mrb[0].mxu0
        %v4517 = vpop.f32.mrb[0].mxu0
        %v4518 = vadd.f32 %v4357, %v4517
        %v4519 = vpop.f32.mrb[0].mxu0
        %4520 = vmatprep.mubr.bf16.mxu0 0
        %4521 = vmatmul.mubr.bf16.gmra.mrb[0].mxu0 %v3047
        %v4522 = vpop.f32.mrb[0].mxu0
        %v4523 = vadd.f32 %v4362, %v4522
        %v4524 = vpop.f32.mrb[0].mxu0
        %v4525 = vpop.f32.mrb[0].mxu0
        %v4526 = vadd.f32 %v4365, %v4525
        %v4527 = vpop.f32.mrb[0].mxu0
        %4528 = vmatprep.mubr.bf16.mxu0 0
        %4529 = vmatmul.mubr.bf16.gmra.mrb[0].mxu0 %v3048
        %v4530 = vpop.f32.mrb[0].mxu0
        %v4531 = vadd.f32 %v4370, %v4530
        %v4532 = vpop.f32.mrb[0].mxu0
        %v4533 = vpop.f32.mrb[0].mxu0
        %v4534 = vadd.f32 %v4373, %v4533
        %v4535 = vpop.f32.mrb[0].mxu0
        %4536 = vmatprep.mubr.bf16.mxu0 0
        %4537 = vmatmul.mubr.bf16.gmra.mrb[0].mxu0 %v3049
        %v4538 = vpop.f32.mrb[0].mxu0
        %v4539 = vadd.f32 %v4378, %v4538
        %v4540 = vpop.f32.mrb[0].mxu0
        %v4541 = vpop.f32.mrb[0].mxu0
        %v4542 = vadd.f32 %v4381, %v4541
        %v4543 = vpop.f32.mrb[0].mxu0
        %4544 = vmatprep.mubr.bf16.mxu0 0
        %4545 = vmatmul.mubr.bf16.gmra.mrb[0].mxu0 %v3050
        %v4546 = vpop.f32.mrb[0].mxu0
        %v4547 = vadd.f32 %v4386, %v4546
        %v4548 = vpop.f32.mrb[0].mxu0
        %v4549 = vpop.f32.mrb[0].mxu0
        %v4550 = vadd.f32 %v4389, %v4549
        %v4551 = vpop.f32.mrb[0].mxu0
        %4552 = vmatprep.mubr.bf16.mxu0 0
        %4553 = vmatmul.mubr.bf16.gmra.mrb[0].mxu0 %v3051
        %v4554 = vpop.f32.mrb[0].mxu0
        %v4555 = vadd.f32 %v4394, %v4554
        %v4556 = vpop.f32.mrb[0].mxu0
        %v4557 = vpop.f32.mrb[0].mxu0
        %v4558 = vadd.f32 %v4397, %v4557
        %v4559 = vpop.f32.mrb[0].mxu0
        %4560 = vmatprep.mubr.bf16.mxu0 0
        %4561 = vmatmul.mubr.bf16.gmra.mrb[0].mxu0 %v3052
        %v4562 = vpop.f32.mrb[0].mxu0
        %v4563 = vadd.f32 %v4402, %v4562
        %v4564 = vpop.f32.mrb[0].mxu0
        %v4565 = vpop.f32.mrb[0].mxu0
        %v4566 = vadd.f32 %v4405, %v4565
        %v4567 = vpop.f32.mrb[0].mxu0
        %4568 = vmatprep.mubr.bf16.mxu0 0
        %4569 = vmatmul.mubr.bf16.gmra.mrb[0].mxu0 %v3053
        %v4570 = vpop.f32.mrb[0].mxu0
        %v4571 = vadd.f32 %v4410, %v4570
        %v4572 = vpop.f32.mrb[0].mxu0
        %v4573 = vpop.f32.mrb[0].mxu0
        %v4574 = vadd.f32 %v4413, %v4573
        %v4575 = vpop.f32.mrb[0].mxu0
        %4576 = vmatprep.mubr.bf16.mxu0 0
        %4577 = vmatmul.mubr.bf16.gmra.mrb[0].mxu0 %v3054
        %v4578 = vpop.f32.mrb[0].mxu0
        %v4579 = vadd.f32 %v4418, %v4578
        %v4580 = vpop.f32.mrb[0].mxu0
        %v4581 = vpop.f32.mrb[0].mxu0
        %v4582 = vadd.f32 %v4421, %v4581
        %v4583 = vpop.f32.mrb[0].mxu0
        %4584 = vmatprep.mubr.bf16.mxu0 0
        %4585 = vmatmul.mubr.bf16.gmra.mrb[0].mxu0 %v3055
        %v4586 = vpop.f32.mrb[0].mxu0
        %v4587 = vadd.f32 %v4426, %v4586
        %v4588 = vpop.f32.mrb[0].mxu0
        %v4589 = vpop.f32.mrb[0].mxu0
        %v4590 = vadd.f32 %v4429, %v4589
        %v4591 = vpop.f32.mrb[0].mxu0
        %4592 = vmatprep.mubr.bf16.mxu0 0
        %4593 = vmatmul.mubr.bf16.gmra.mrb[0].mxu0 %v3056
        %v4594 = vpop.f32.mrb[0].mxu0
        %v4595 = vadd.f32 %v4434, %v4594
        %v4596 = vpop.f32.mrb[0].mxu0
        %v4597 = vpop.f32.mrb[0].mxu0
        %v4598 = vadd.f32 %v4437, %v4597
        %v4599 = vpop.f32.mrb[0].mxu0
        %4600 = vdwg.mxu0
        %v4601 = vadd.f32 %v3960, %v4475
        %v4602 = vadd.f32 %v3963, %v4478
        %v4603 = vadd.f32 %v3968, %v4483
        %v4604 = vadd.f32 %v3971, %v4486
        %v4605 = vadd.f32 %v3976, %v4491
        %v4606 = vadd.f32 %v3979, %v4494
        %v4607 = vadd.f32 %v3984, %v4499
        %v4608 = vadd.f32 %v3987, %v4502
        %v4609 = vadd.f32 %v3992, %v4507
        %v4610 = vadd.f32 %v3995, %v4510
        %v4611 = vadd.f32 %v4000, %v4515
        %v4612 = vadd.f32 %v4003, %v4518
        %v4613 = vadd.f32 %v4008, %v4523
        %v4614 = vadd.f32 %v4011, %v4526
        %v4615 = vadd.f32 %v4016, %v4531
        %v4616 = vadd.f32 %v4019, %v4534
        %v4617 = vadd.f32 %v4024, %v4539
        %v4618 = vadd.f32 %v4027, %v4542
        %v4619 = vadd.f32 %v4032, %v4547
        %v4620 = vadd.f32 %v4035, %v4550
        %v4621 = vadd.f32 %v4040, %v4555
        %v4622 = vadd.f32 %v4043, %v4558
        %v4623 = vadd.f32 %v4048, %v4563
        %v4624 = vadd.f32 %v4051, %v4566
        %v4625 = vadd.f32 %v4056, %v4571
        %v4626 = vadd.f32 %v4059, %v4574
        %v4627 = vadd.f32 %v4064, %v4579
        %v4628 = vadd.f32 %v4067, %v4582
        %v4629 = vadd.f32 %v4072, %v4587
        %v4630 = vadd.f32 %v4075, %v4590
        %v4631 = vadd.f32 %v4080, %v4595
        %v4632 = vadd.f32 %v4083, %v4598
        %v4633 = vld [vmem:[%s7] sm:$0x1]
        %v4635 = vlaneseq
        %v4636 = vshrl.u32 %v4635, 7
        %v4637 = vsub.s32 0, %v4636
        %v4638 = vrot.slane %v4633, %v4637
        %v4640 = vmul.f32 %v4601, %v4638
        %v4641 = vmul.f32 %v4602, %v4638
        %v4642 = vmul.f32 %v4603, %v4638
        %v4643 = vmul.f32 %v4604, %v4638
        %v4644 = vmul.f32 %v4605, %v4638
        %v4645 = vmul.f32 %v4606, %v4638
        %v4646 = vmul.f32 %v4607, %v4638
        %v4647 = vmul.f32 %v4608, %v4638
        %v4648 = vmul.f32 %v4609, %v4638
        %v4649 = vmul.f32 %v4610, %v4638
        %v4650 = vmul.f32 %v4611, %v4638
        %v4651 = vmul.f32 %v4612, %v4638
        %v4652 = vmul.f32 %v4613, %v4638
        %v4653 = vmul.f32 %v4614, %v4638
        %v4654 = vmul.f32 %v4615, %v4638
        %v4655 = vmul.f32 %v4616, %v4638
        %v4656 = vmul.f32 %v4617, %v4638
        %v4657 = vmul.f32 %v4618, %v4638
        %v4658 = vmul.f32 %v4619, %v4638
        %v4659 = vmul.f32 %v4620, %v4638
        %v4660 = vmul.f32 %v4621, %v4638
        %v4661 = vmul.f32 %v4622, %v4638
        %v4662 = vmul.f32 %v4623, %v4638
        %v4663 = vmul.f32 %v4624, %v4638
        %v4664 = vmul.f32 %v4625, %v4638
        %v4665 = vmul.f32 %v4626, %v4638
        %v4666 = vmul.f32 %v4627, %v4638
        %v4667 = vmul.f32 %v4628, %v4638
        %v4668 = vmul.f32 %v4629, %v4638
        %v4669 = vmul.f32 %v4630, %v4638
        %v4670 = vmul.f32 %v4631, %v4638
        %v4671 = vmul.f32 %v4632, %v4638
        %v4672 = vld [vmem:[%s8] sm:$0x1]
        %v4674 = vlaneseq
        %v4675 = vshrl.u32 %v4674, 7
        %v4676 = vsub.s32 0, %v4675
        %v4677 = vrot.slane %v4672, %v4676
        %v4679 = vadd.f32 %v4640, %v4677
        %v4680 = vadd.f32 %v4641, %v4677
        %v4681 = vadd.f32 %v4642, %v4677
        %v4682 = vadd.f32 %v4643, %v4677
        %v4683 = vadd.f32 %v4644, %v4677
        %v4684 = vadd.f32 %v4645, %v4677
        %v4685 = vadd.f32 %v4646, %v4677
        %v4686 = vadd.f32 %v4647, %v4677
        %v4687 = vadd.f32 %v4648, %v4677
        %v4688 = vadd.f32 %v4649, %v4677
        %v4689 = vadd.f32 %v4650, %v4677
        %v4690 = vadd.f32 %v4651, %v4677
        %v4691 = vadd.f32 %v4652, %v4677
        %v4692 = vadd.f32 %v4653, %v4677
        %v4693 = vadd.f32 %v4654, %v4677
        %v4694 = vadd.f32 %v4655, %v4677
        %v4695 = vadd.f32 %v4656, %v4677
        %v4696 = vadd.f32 %v4657, %v4677
        %v4697 = vadd.f32 %v4658, %v4677
        %v4698 = vadd.f32 %v4659, %v4677
        %v4699 = vadd.f32 %v4660, %v4677
        %v4700 = vadd.f32 %v4661, %v4677
        %v4701 = vadd.f32 %v4662, %v4677
        %v4702 = vadd.f32 %v4663, %v4677
        %v4703 = vadd.f32 %v4664, %v4677
        %v4704 = vadd.f32 %v4665, %v4677
        %v4705 = vadd.f32 %v4666, %v4677
        %v4706 = vadd.f32 %v4667, %v4677
        %v4707 = vadd.f32 %v4668, %v4677
        %v4708 = vadd.f32 %v4669, %v4677
        %v4709 = vadd.f32 %v4670, %v4677
        %v4710 = vadd.f32 %v4671, %v4677
        %v4711 = vadd.f32 %v4679, %v547
        %v4712 = vadd.f32 %v4680, %v548
        %v4713 = vadd.f32 %v4681, %v549
        %v4714 = vadd.f32 %v4682, %v550
        %v4715 = vadd.f32 %v4683, %v551
        %v4716 = vadd.f32 %v4684, %v552
        %v4717 = vadd.f32 %v4685, %v553
        %v4718 = vadd.f32 %v4686, %v554
        %v4719 = vadd.f32 %v4687, %v555
        %v4720 = vadd.f32 %v4688, %v556
        %v4721 = vadd.f32 %v4689, %v557
        %v4722 = vadd.f32 %v4690, %v558
        %v4723 = vadd.f32 %v4691, %v559
        %v4724 = vadd.f32 %v4692, %v560
        %v4725 = vadd.f32 %v4693, %v561
        %v4726 = vadd.f32 %v4694, %v562
        %v4727 = vadd.f32 %v4695, %v563
        %v4728 = vadd.f32 %v4696, %v564
        %v4729 = vadd.f32 %v4697, %v565
        %v4730 = vadd.f32 %v4698, %v566
        %v4731 = vadd.f32 %v4699, %v567
        %v4732 = vadd.f32 %v4700, %v568
        %v4733 = vadd.f32 %v4701, %v569
        %v4734 = vadd.f32 %v4702, %v570
        %v4735 = vadd.f32 %v4703, %v571
        %v4736 = vadd.f32 %v4704, %v572
        %v4737 = vadd.f32 %v4705, %v573
        %v4738 = vadd.f32 %v4706, %v574
        %v4739 = vadd.f32 %v4707, %v575
        %v4740 = vadd.f32 %v4708, %v576
        %v4741 = vadd.f32 %v4709, %v577
        %v4742 = vadd.f32 %v4710, %v578
        %v4743 = vmax.f32 %v4711, 0.0
        %v4744 = vmax.f32 %v4712, 0.0
        %v4745 = vmax.f32 %v4713, 0.0
        %v4746 = vmax.f32 %v4714, 0.0
        %v4747 = vmax.f32 %v4715, 0.0
        %v4748 = vmax.f32 %v4716, 0.0
        %v4749 = vmax.f32 %v4717, 0.0
        %v4750 = vmax.f32 %v4718, 0.0
        %v4751 = vmax.f32 %v4719, 0.0
        %v4752 = vmax.f32 %v4720, 0.0
        %v4753 = vmax.f32 %v4721, 0.0
        %v4754 = vmax.f32 %v4722, 0.0
        %v4755 = vmax.f32 %v4723, 0.0
        %v4756 = vmax.f32 %v4724, 0.0
        %v4757 = vmax.f32 %v4725, 0.0
        %v4758 = vmax.f32 %v4726, 0.0
        %v4759 = vmax.f32 %v4727, 0.0
        %v4760 = vmax.f32 %v4728, 0.0
        %v4761 = vmax.f32 %v4729, 0.0
        %v4762 = vmax.f32 %v4730, 0.0
        %v4763 = vmax.f32 %v4731, 0.0
        %v4764 = vmax.f32 %v4732, 0.0
        %v4765 = vmax.f32 %v4733, 0.0
        %v4766 = vmax.f32 %v4734, 0.0
        %v4767 = vmax.f32 %v4735, 0.0
        %v4768 = vmax.f32 %v4736, 0.0
        %v4769 = vmax.f32 %v4737, 0.0
        %v4770 = vmax.f32 %v4738, 0.0
        %v4771 = vmax.f32 %v4739, 0.0
        %v4772 = vmax.f32 %v4740, 0.0
        %v4773 = vmax.f32 %v4741, 0.0
        %v4774 = vmax.f32 %v4742, 0.0
        %4775 = vst [vmem:[%s509] sm:$0xff] %v4743
        %4776 = vst [vmem:[%s509 + $0x8] sm:$0xff] %v4744
        %4777 = vst [vmem:[%s509 + $0x10] sm:$0xff] %v4745
        %4778 = vst [vmem:[%s509 + $0x18] sm:$0xff] %v4746
        %4779 = vst [vmem:[%s509 + $0x20] sm:$0xff] %v4747
        %4780 = vst [vmem:[%s509 + $0x28] sm:$0xff] %v4748
        %4781 = vst [vmem:[%s509 + $0x30] sm:$0xff] %v4749
        %4782 = vst [vmem:[%s509 + $0x38] sm:$0xff] %v4750
        %4783 = vst [vmem:[%s509 + $0x40] sm:$0xff] %v4751
        %4784 = vst [vmem:[%s509 + $0x48] sm:$0xff] %v4752
        %4785 = vst [vmem:[%s509 + $0x50] sm:$0xff] %v4753
        %4786 = vst [vmem:[%s509 + $0x58] sm:$0xff] %v4754
        %4787 = vst [vmem:[%s509 + $0x60] sm:$0xff] %v4755
        %4788 = vst [vmem:[%s509 + $0x68] sm:$0xff] %v4756
        %4789 = vst [vmem:[%s509 + $0x70] sm:$0xff] %v4757
        %4790 = vst [vmem:[%s509 + $0x78] sm:$0xff] %v4758
        %4791 = vst [vmem:[%s509 + $0x80] sm:$0xff] %v4759
        %4792 = vst [vmem:[%s509 + $0x88] sm:$0xff] %v4760
        %4793 = vst [vmem:[%s509 + $0x90] sm:$0xff] %v4761
        %4794 = vst [vmem:[%s509 + $0x98] sm:$0xff] %v4762
        %4795 = vst [vmem:[%s509 + $0xa0] sm:$0xff] %v4763
        %4796 = vst [vmem:[%s509 + $0xa8] sm:$0xff] %v4764
        %4797 = vst [vmem:[%s509 + $0xb0] sm:$0xff] %v4765
        %4798 = vst [vmem:[%s509 + $0xb8] sm:$0xff] %v4766
        %4799 = vst [vmem:[%s509 + $0xc0] sm:$0xff] %v4767
        %4800 = vst [vmem:[%s509 + $0xc8] sm:$0xff] %v4768
        %4801 = vst [vmem:[%s509 + $0xd0] sm:$0xff] %v4769
        %4802 = vst [vmem:[%s509 + $0xd8] sm:$0xff] %v4770
        %4803 = vst [vmem:[%s509 + $0xe0] sm:$0xff] %v4771
        %4804 = vst [vmem:[%s509 + $0xe8] sm:$0xff] %v4772
        %4805 = vst [vmem:[%s509 + $0xf0] sm:$0xff] %v4773
        %4806 = vst [vmem:[%s509 + $0xf8] sm:$0xff] %v4774
        %s4807 = sand.u32 %s278, 1
        %s4808 = scalar_lea.sflag [#allocation4], %s4807
        %s4809 = sand.u32 %s278, 1
        %s4810 = smul.addr %s4809, 256
        %s4811 = scalar_lea.vmem [#allocation11], %s4810
        // Predicated region
        $region77: #{tpu_custom_call.1} parent=55 // pred_check
          %p4812 = pneg %p288
        $region78: #{tpu_custom_call.1} parent=55 // pred_check_branch
          %4814 = sbr.rel (%p4812) target = $region80
        $region79: #{tpu_custom_call.1} parent=55 // pred_region
          %s4815 = smul.u32 16, %s35
          %s4817 = ssub.s32 4096, 4096
          %4818 = vsyncadd %s4808, %s4817
          %s4819 = smul.addr %s4815, 2
          %s4820 = smul.addr %s34, 32
          %s4821 = sadd.s32 %s4819, %s4820
          %s4822 = smul.addr %s4821, 128
          %s4823 = scalar_lea.hbm %s9, %s4822
          %s4824 = sshll.u32 %s4811, 4
          %s4825 = int_to_ptr.vmem [resolvable:$true] %s4824
          %4830 = dma.vmem_to_hbm [thread:$0]  %s4825, 4096, %s4823, %s4808, 128, 128, 8
        $region80: #{tpu_custom_call.1} parent=55 // pred_fallthru
          _
      $region56: #{tpu_custom_call.1} parent=5 // pred_fallthru
        _
      %p4831 = scmp.le.s32.totalorder 2, %s25
      // Predicated region
      $region81: #{tpu_custom_call.1} parent=5 // pred_check
        %p4832 = pneg %p4831
      $region82: #{tpu_custom_call.1} parent=5 // pred_check_branch
        %4834 = sbr.rel (%p4832) target = $region84
      $region83: #{tpu_custom_call.1} parent=5 // pred_region
        %s4835 = ssub.s32 %s25, 2
        // Predicated region
        $region85: #{tpu_custom_call.1} parent=83 // pred_check
          %p4836 = pneg %p294
        $region86: #{tpu_custom_call.1} parent=83 // pred_check_branch
          %4838 = sbr.rel (%p4836) target = $region88
        $region87: #{tpu_custom_call.1} parent=83 // pred_region
          %s4839 = sand.u32 %s279, 1
          %s4840 = scalar_lea.sflag [#allocation4], %s4839
          %s4841 = sand.u32 %s279, 1
          %s4842 = smul.addr %s4841, 256
          %s4843 = scalar_lea.vmem [#allocation11], %s4842
          %4844 = dma.done %s4840, 4096
        $region88: #{tpu_custom_call.1} parent=83 // pred_fallthru
          _
      $region84: #{tpu_custom_call.1} parent=5 // pred_fallthru
        _
    $region6: #{tpu_custom_call.1} parent=1 // loop_footer
      %s29 = sadd.s32 1, %s25
    $region7: #{tpu_custom_call.1} parent=1 // loop_footer_branch
      %24 = sbr.rel target = $region3
    $region8: #{tpu_custom_call.1} parent=1 // loop_exit
      _
    %4845 = vsyncpa [#allocation3], 1
    %s4846 = scalar_lea.sflag [#allocation3], 1
    %4847 = vsyncpa %s4846, 1
    %4848 = vsyncpa [#allocation6], 1
    %s4849 = scalar_lea.sflag [#allocation6], 1
    %4850 = vsyncpa %s4849, 1
    %4851 = vsyncpa [#allocation9], 1
    %4852 = vsyncpa [#allocation4], 1
    %s4853 = scalar_lea.sflag [#allocation4], 1
    %4854 = vsyncpa %s4853, 1

</llo_original>
